<compile_context>
chip_gen: v7x
topology: tpu7x:2x2x1
jax: 0.10.0
libtpu: 0.0.40
codegen_flags: <defaults>
</compile_context>

<pallas_src>
import functools

import jax
import jax.numpy as jnp
import numpy as np
from jax.experimental import pallas as pl
from jax.experimental.pallas import tpu as pltpu


# ----------------------------------------------------------------------------
# Fused kernel: conv3x3 + bias + ReLU + conv1x1 + bias for TH output rows of
# one image per grid step.
# ----------------------------------------------------------------------------
def _aux_fused_kernel(x_ref, w1_ref, b1_ref, w2t_ref, b2_ref, o_ref, acc_ref):
    # x_ref   : (1, TH+2, W+2, C)  bf16  halo block of the padded NHWC input
    # w1_ref  : (9, C, Cmid)       bf16  3x3 weight, tap-major (kh*3+kw)
    # b1_ref  : (1, Cmid)          f32
    # w2t_ref : (NC, Cmid)         bf16  1x1 weight (transposed)
    # b2_ref  : (NC, 1)            f32
    # o_ref   : (1, 1, NC, TH*W)   f32   lane-dense output block
    # acc_ref : (TH*W, Cmid)       f32   VMEM accumulator scratch
    th = x_ref.shape[1] - 2
    w = x_ref.shape[2] - 2
    c_in = x_ref.shape[3]
    nc = w2t_ref.shape[0]
    thw = th * w

    x_blk = x_ref[0]                                   # (TH+2, W+2, C) bf16

    # ---- 3x3 conv: nine accumulating MXU matmuls with M = TH*W -------------
    for kh in range(3):
        for kw in range(3):
            win = x_blk[kh:kh + th, kw:kw + w, :].reshape(thw, c_in)
            part = jnp.dot(win, w1_ref[kh * 3 + kw],
                           preferred_element_type=jnp.float32)   # (THW, Cmid)
            if kh == 0 and kw == 0:
                acc_ref[...] = part          # re-init every grid step
            else:
                acc_ref[...] += part

    # ---- bias + ReLU in f32; bf16-round to match the MXU-operand reference -
    h = jnp.maximum(acc_ref[...] + b1_ref[...], 0.0)             # (THW, Cmid)
    h = h.astype(jnp.bfloat16).astype(jnp.float32)

    # ---- 1x1 conv, emitted directly in lane-dense (NC, THW) layout ----------
    h_t = jnp.transpose(h)                                       # (Cmid, THW)
    if nc <= 8:
        # Tiny NC: VPU broadcast-multiply + sublane reduce (XLU); avoids an
        # MXU push that would use only NC of the result rows.
        w2 = w2t_ref[...].astype(jnp.float32)                    # (NC, Cmid)
        rows = [jnp.sum(h_t * w2[c][:, None], axis=0, keepdims=True)
                for c in range(nc)]                              # NC x (1,THW)
        y_t = rows[0] if nc == 1 else jnp.concatenate(rows, axis=0)
    else:
        y_t = jnp.dot(w2t_ref[...], h_t.astype(jnp.bfloat16),
                      preferred_element_type=jnp.float32)        # (NC, THW)
    y_t = y_t + b2_ref[...]                                      # (NC,1) bias
    o_ref[...] = y_t.reshape(o_ref.shape).astype(o_ref.dtype)


def _pick_tile_rows(H, W, max_rows=128, max_block_m=2048):
    """Largest divisor TH of H with TH <= max_rows and TH*W <= max_block_m.

    Targets TH*W >= 256 (MXU M on v6e/v7x) whenever the image allows it while
    keeping the halo/acc blocks comfortably inside VMEM (v7x: 64 MiB).
    """
    best = 1
    for th in range(1, H + 1):
        if H % th == 0 and th <= max_rows and th * W <= max_block_m:
            best = th
    return best


# ----------------------------------------------------------------------------
# Wrapper: layout glue + pallas_call
# ----------------------------------------------------------------------------
def aux_module_forward(params, x, *, tile_rows=None):
    """Aux_Module forward. x: (N, C, H, W) f32 -> (N, num_classes, H, W) f32."""
    w1, b1, w2, b2 = params['w1'], params['b1'], params['w2'], params['b2']
    N, C, H, W = x.shape
    Cmid = w1.shape[0]
    NC = w2.shape[0]

    TH = tile_rows if tile_rows is not None else _pick_tile_rows(H, W)
    assert H % TH == 0, (H, TH)
    HB = H // TH
    THW = TH * W

    # Layout glue (single pass): NCHW -> NHWC, bf16 operands, 1-pixel halo pad.
    x_nhwc = jnp.transpose(x, (0, 2, 3, 1)).astype(jnp.bfloat16)
    x_pad = jnp.pad(x_nhwc, ((0, 0), (1, 1), (1, 1), (0, 0)))    # (N,H+2,W+2,C)

    # Weight prep (one-time, tiny): OIHW -> (tap, Cin, Cout) bf16; 1x1 weight
    # kept transposed (NC, Cmid) so the kernel emits (NC, THW) directly.
    w1_m = jnp.transpose(w1, (2, 3, 1, 0)).reshape(9, C, Cmid).astype(jnp.bfloat16)
    b1_m = b1.reshape(1, Cmid).astype(jnp.float32)
    w2t_m = w2.reshape(NC, Cmid).astype(jnp.bfloat16)
    b2_m = b2.reshape(NC, 1).astype(jnp.float32)

    if HB == 1:
        # One block spans all rows: plain blocked indexing.
        x_spec = pl.BlockSpec((1, H + 2, W + 2, C), lambda n, i: (n, 0, 0, 0))
    else:
        # Overlapping halo windows: element-offset indexing along H
        # (window TH+2, stride TH); last window ends exactly at H+2.
        x_spec = pl.BlockSpec((1, pl.Element(TH + 2), W + 2, C),
                              lambda n, i: (n, i * TH, 0, 0))

    out = pl.pallas_call(
        _aux_fused_kernel,
        out_shape=jax.ShapeDtypeStruct((N, HB, NC, THW), jnp.float32),
        grid_spec=pltpu.PrefetchScalarGridSpec(
            num_scalar_prefetch=0,
            grid=(N, HB),                       # fully parallel, no reduction
            in_specs=[
                x_spec,
                # Constant-index blocks: DMA'd once, stay VMEM-resident.
                pl.BlockSpec((9, C, Cmid), lambda n, i: (0, 0, 0)),
                pl.BlockSpec((1, Cmid), lambda n, i: (0, 0)),
                pl.BlockSpec((NC, Cmid), lambda n, i: (0, 0)),
                pl.BlockSpec((NC, 1), lambda n, i: (0, 0)),
            ],
            # Lane-dense output block: last dim THW (multiple of 128 for sane
            # TH) -> unmasked full-width stores even when NC == 1.
            out_specs=pl.BlockSpec((1, 1, NC, THW), lambda n, i: (n, i, 0, 0)),
            scratch_shapes=[pltpu.VMEM((THW, Cmid), jnp.float32)],
        ),
        compiler_params=pltpu.CompilerParams(
            dimension_semantics=("parallel", "parallel"),
            vmem_limit_bytes=48 * 1024 * 1024,   # within v7x's 64 MiB physical
        ),
    )(x_pad, w1_m, b1_m, w2t_m, b2_m)

    # (N, HB, NC, TH*W) -> (N, NC, H, W): cheap reshape/permute of the small
    # logits array only (no activation-sized exit transpose).
    out = out.reshape(N, HB, NC, TH, W)
    out = jnp.transpose(out, (0, 2, 1, 3, 4)).reshape(N, NC, H, W)
    return out


# ----------------------------------------------------------------------------
# Parameters (deterministic, PyTorch-like uniform init)
# ----------------------------------------------------------------------------
def init_aux_module_params(key, in_planes, num_classes=1):
    cmid = in_planes // 2
    k1, k2, k3, k4 = jax.random.split(key, 4)
    bound1 = 1.0 / float(np.sqrt(in_planes * 3 * 3))
    bound2 = 1.0 / float(np.sqrt(cmid * 1 * 1))
    return {
        'w1': jax.random.uniform(k1, (cmid, in_planes, 3, 3), jnp.float32,
                                 -bound1, bound1),
        'b1': jax.random.uniform(k2, (cmid,), jnp.float32, -bound1, bound1),
        'w2': jax.random.uniform(k3, (num_classes, cmid, 1, 1), jnp.float32,
                                 -bound2, bound2),
        'b2': jax.random.uniform(k4, (num_classes,), jnp.float32,
                                 -bound2, bound2),
    }


# ----------------------------------------------------------------------------
# Pure-XLA reference with the same bf16 operand rounding as the kernel
# ----------------------------------------------------------------------------
def aux_module_reference(params, x):
    f32, bf16 = jnp.float32, jnp.bfloat16
    xb = x.astype(bf16).astype(f32)
    w1b = params['w1'].astype(bf16).astype(f32)
    y = jax.lax.conv_general_dilated(
        xb, w1b, window_strides=(1, 1), padding=((1, 1), (1, 1)),
        dimension_numbers=('NCHW', 'OIHW', 'NCHW'),
        precision=jax.lax.Precision.HIGHEST)
    y = jnp.maximum(y + params['b1'][None, :, None, None], 0.0)
    yb = y.astype(bf16).astype(f32)
    w2b = params['w2'].astype(bf16).astype(f32)
    z = jax.lax.conv_general_dilated(
        yb, w2b, window_strides=(1, 1), padding=((0, 0), (0, 0)),
        dimension_numbers=('NCHW', 'OIHW', 'NCHW'),
        precision=jax.lax.Precision.HIGHEST)
    return z + params['b2'][None, :, None, None]


if __name__ == "__main__":
    key = jax.random.PRNGKey(0)
    kp, kx = jax.random.split(key)

    in_planes = 32          # small but consistent with the module contract
    num_classes = 1         # module default
    params = init_aux_module_params(kp, in_planes, num_classes)

    x = jax.random.normal(kx, (2, in_planes, 16, 16), jnp.float32)

    fwd = jax.jit(functools.partial(aux_module_forward))
    out = jax.block_until_ready(fwd(params, x))
    assert out.shape == (2, num_classes, 16, 16), out.shape

    ref = jax.block_until_ready(aux_module_reference(params, x))
    np.testing.assert_allclose(np.asarray(out), np.asarray(ref),
                               rtol=1e-2, atol=1e-2)

    print("KERNEL_OK")
</pallas_src>

<mosaic_0001>
module attributes {stable_mosaic.version = 11 : i64} {
  func.func @_aux_fused_kernel(%arg0: i32, %arg1: i32, %arg2: memref<1x18x18x32xbf16, #tpu.memory_space<vmem>>, %arg3: memref<9x32x16xbf16, #tpu.memory_space<vmem>>, %arg4: memref<1x16xf32, #tpu.memory_space<vmem>>, %arg5: memref<1x16xbf16, #tpu.memory_space<vmem>>, %arg6: memref<1x1xf32, #tpu.memory_space<vmem>>, %arg7: memref<1x1x1x256xf32, #tpu.memory_space<vmem>>, %arg8: memref<256x16xf32, #tpu.memory_space<vmem>>) attributes {dimension_semantics = [#tpu.dimension_semantics<parallel>, #tpu.dimension_semantics<parallel>], iteration_bounds = array<i64: 2, 1>, scalar_prefetch = 0 : i64, scratch_operands = 1 : i64, tpu.core_type = #tpu.core_type<tc>, window_params = [{transform_indices = @transform_0, window_bounds = array<i64: 1, 18, 18, 32>}, {pipeline_mode = #tpu.pipeline_mode<synchronous>, transform_indices = @transform_1, window_bounds = array<i64: 9, 32, 16>}, {pipeline_mode = #tpu.pipeline_mode<synchronous>, transform_indices = @transform_2, window_bounds = array<i64: 1, 16>}, {pipeline_mode = #tpu.pipeline_mode<synchronous>, transform_indices = @transform_3, window_bounds = array<i64: 1, 16>}, {pipeline_mode = #tpu.pipeline_mode<synchronous>, transform_indices = @transform_4, window_bounds = array<i64: 1, 1>}, {transform_indices = @transform_5, window_bounds = array<i64: 1, 1, 1, 256>}]} {
    %c0 = arith.constant 0 : index
    %c0_0 = arith.constant 0 : index
    %c0_1 = arith.constant 0 : index
    %c0_2 = arith.constant 0 : index
    %0 = vector.load %arg2[%c0, %c0_0, %c0_1, %c0_2] : memref<1x18x18x32xbf16, #tpu.memory_space<vmem>>, vector<1x18x18x32xbf16>
    %1 = vector.shape_cast %0 : vector<1x18x18x32xbf16> to vector<18x18x32xbf16>
    %2 = vector.extract_strided_slice %1 {offsets = [0, 0, 0], sizes = [16, 16, 32], strides = [1, 1, 1]} : vector<18x18x32xbf16> to vector<16x16x32xbf16>
    %3 = vector.shape_cast %2 : vector<16x16x32xbf16> to vector<256x32xbf16>
    %c0_3 = arith.constant 0 : index
    %c0_4 = arith.constant 0 : index
    %c0_5 = arith.constant 0 : index
    %4 = vector.load %arg3[%c0_3, %c0_4, %c0_5] : memref<9x32x16xbf16, #tpu.memory_space<vmem>>, vector<1x32x16xbf16>
    %5 = vector.shape_cast %4 : vector<1x32x16xbf16> to vector<32x16xbf16>
    %cst = arith.constant dense<0.000000e+00> : vector<256x16xf32>
    %6 = tpu.matmul %3, %5, %cst {dimension_numbers = #tpu.dot_dimension_numbers<[1], [0], [0], [1], [0, 0, 1, 1], [], []>} : vector<256x32xbf16>, vector<32x16xbf16>, vector<256x16xf32> -> vector<256x16xf32>
    %c0_6 = arith.constant 0 : index
    %c0_7 = arith.constant 0 : index
    %7 = vector.load %arg8[%c0_6, %c0_7] : memref<256x16xf32, #tpu.memory_space<vmem>>, vector<256x16xf32>
    tpu.vector_store %arg8[%c0_6, %c0_7], %6 {strides = array<i32>} : memref<256x16xf32, #tpu.memory_space<vmem>>, vector<256x16xf32>,
    %8 = vector.extract_strided_slice %1 {offsets = [0, 1, 0], sizes = [16, 16, 32], strides = [1, 1, 1]} : vector<18x18x32xbf16> to vector<16x16x32xbf16>
    %9 = vector.shape_cast %8 : vector<16x16x32xbf16> to vector<256x32xbf16>
    %c1 = arith.constant 1 : index
    %c0_8 = arith.constant 0 : index
    %c0_9 = arith.constant 0 : index
    %10 = vector.load %arg3[%c1, %c0_8, %c0_9] : memref<9x32x16xbf16, #tpu.memory_space<vmem>>, vector<1x32x16xbf16>
    %11 = vector.shape_cast %10 : vector<1x32x16xbf16> to vector<32x16xbf16>
    %cst_10 = arith.constant dense<0.000000e+00> : vector<256x16xf32>
    %12 = tpu.matmul %9, %11, %cst_10 {dimension_numbers = #tpu.dot_dimension_numbers<[1], [0], [0], [1], [0, 0, 1, 1], [], []>} : vector<256x32xbf16>, vector<32x16xbf16>, vector<256x16xf32> -> vector<256x16xf32>
    %c0_11 = arith.constant 0 : index
    %c0_12 = arith.constant 0 : index
    %13 = vector.load %arg8[%c0_11, %c0_12] : memref<256x16xf32, #tpu.memory_space<vmem>>, vector<256x16xf32>
    %14 = arith.addf %13, %12 : vector<256x16xf32>
    %c0_13 = arith.constant 0 : index
    %c0_14 = arith.constant 0 : index
    %15 = vector.load %arg8[%c0_13, %c0_14] : memref<256x16xf32, #tpu.memory_space<vmem>>, vector<256x16xf32>
    tpu.vector_store %arg8[%c0_13, %c0_14], %14 {strides = array<i32>} : memref<256x16xf32, #tpu.memory_space<vmem>>, vector<256x16xf32>,
    %16 = vector.extract_strided_slice %1 {offsets = [0, 2, 0], sizes = [16, 16, 32], strides = [1, 1, 1]} : vector<18x18x32xbf16> to vector<16x16x32xbf16>
    %17 = vector.shape_cast %16 : vector<16x16x32xbf16> to vector<256x32xbf16>
    %c2 = arith.constant 2 : index
    %c0_15 = arith.constant 0 : index
    %c0_16 = arith.constant 0 : index
    %18 = vector.load %arg3[%c2, %c0_15, %c0_16] : memref<9x32x16xbf16, #tpu.memory_space<vmem>>, vector<1x32x16xbf16>
    %19 = vector.shape_cast %18 : vector<1x32x16xbf16> to vector<32x16xbf16>
    %cst_17 = arith.constant dense<0.000000e+00> : vector<256x16xf32>
    %20 = tpu.matmul %17, %19, %cst_17 {dimension_numbers = #tpu.dot_dimension_numbers<[1], [0], [0], [1], [0, 0, 1, 1], [], []>} : vector<256x32xbf16>, vector<32x16xbf16>, vector<256x16xf32> -> vector<256x16xf32>
    %c0_18 = arith.constant 0 : index
    %c0_19 = arith.constant 0 : index
    %21 = vector.load %arg8[%c0_18, %c0_19] : memref<256x16xf32, #tpu.memory_space<vmem>>, vector<256x16xf32>
    %22 = arith.addf %21, %20 : vector<256x16xf32>
    %c0_20 = arith.constant 0 : index
    %c0_21 = arith.constant 0 : index
    %23 = vector.load %arg8[%c0_20, %c0_21] : memref<256x16xf32, #tpu.memory_space<vmem>>, vector<256x16xf32>
    tpu.vector_store %arg8[%c0_20, %c0_21], %22 {strides = array<i32>} : memref<256x16xf32, #tpu.memory_space<vmem>>, vector<256x16xf32>,
    %24 = vector.extract_strided_slice %1 {offsets = [1, 0, 0], sizes = [16, 16, 32], strides = [1, 1, 1]} : vector<18x18x32xbf16> to vector<16x16x32xbf16>
    %25 = vector.shape_cast %24 : vector<16x16x32xbf16> to vector<256x32xbf16>
    %c3 = arith.constant 3 : index
    %c0_22 = arith.constant 0 : index
    %c0_23 = arith.constant 0 : index
    %26 = vector.load %arg3[%c3, %c0_22, %c0_23] : memref<9x32x16xbf16, #tpu.memory_space<vmem>>, vector<1x32x16xbf16>
    %27 = vector.shape_cast %26 : vector<1x32x16xbf16> to vector<32x16xbf16>
    %cst_24 = arith.constant dense<0.000000e+00> : vector<256x16xf32>
    %28 = tpu.matmul %25, %27, %cst_24 {dimension_numbers = #tpu.dot_dimension_numbers<[1], [0], [0], [1], [0, 0, 1, 1], [], []>} : vector<256x32xbf16>, vector<32x16xbf16>, vector<256x16xf32> -> vector<256x16xf32>
    %c0_25 = arith.constant 0 : index
    %c0_26 = arith.constant 0 : index
    %29 = vector.load %arg8[%c0_25, %c0_26] : memref<256x16xf32, #tpu.memory_space<vmem>>, vector<256x16xf32>
    %30 = arith.addf %29, %28 : vector<256x16xf32>
    %c0_27 = arith.constant 0 : index
    %c0_28 = arith.constant 0 : index
    %31 = vector.load %arg8[%c0_27, %c0_28] : memref<256x16xf32, #tpu.memory_space<vmem>>, vector<256x16xf32>
    tpu.vector_store %arg8[%c0_27, %c0_28], %30 {strides = array<i32>} : memref<256x16xf32, #tpu.memory_space<vmem>>, vector<256x16xf32>,
    %32 = vector.extract_strided_slice %1 {offsets = [1, 1, 0], sizes = [16, 16, 32], strides = [1, 1, 1]} : vector<18x18x32xbf16> to vector<16x16x32xbf16>
    %33 = vector.shape_cast %32 : vector<16x16x32xbf16> to vector<256x32xbf16>
    %c4 = arith.constant 4 : index
    %c0_29 = arith.constant 0 : index
    %c0_30 = arith.constant 0 : index
    %34 = vector.load %arg3[%c4, %c0_29, %c0_30] : memref<9x32x16xbf16, #tpu.memory_space<vmem>>, vector<1x32x16xbf16>
    %35 = vector.shape_cast %34 : vector<1x32x16xbf16> to vector<32x16xbf16>
    %cst_31 = arith.constant dense<0.000000e+00> : vector<256x16xf32>
    %36 = tpu.matmul %33, %35, %cst_31 {dimension_numbers = #tpu.dot_dimension_numbers<[1], [0], [0], [1], [0, 0, 1, 1], [], []>} : vector<256x32xbf16>, vector<32x16xbf16>, vector<256x16xf32> -> vector<256x16xf32>
    %c0_32 = arith.constant 0 : index
    %c0_33 = arith.constant 0 : index
    %37 = vector.load %arg8[%c0_32, %c0_33] : memref<256x16xf32, #tpu.memory_space<vmem>>, vector<256x16xf32>
    %38 = arith.addf %37, %36 : vector<256x16xf32>
    %c0_34 = arith.constant 0 : index
    %c0_35 = arith.constant 0 : index
    %39 = vector.load %arg8[%c0_34, %c0_35] : memref<256x16xf32, #tpu.memory_space<vmem>>, vector<256x16xf32>
    tpu.vector_store %arg8[%c0_34, %c0_35], %38 {strides = array<i32>} : memref<256x16xf32, #tpu.memory_space<vmem>>, vector<256x16xf32>,
    %40 = vector.extract_strided_slice %1 {offsets = [1, 2, 0], sizes = [16, 16, 32], strides = [1, 1, 1]} : vector<18x18x32xbf16> to vector<16x16x32xbf16>
    %41 = vector.shape_cast %40 : vector<16x16x32xbf16> to vector<256x32xbf16>
    %c5 = arith.constant 5 : index
    %c0_36 = arith.constant 0 : index
    %c0_37 = arith.constant 0 : index
    %42 = vector.load %arg3[%c5, %c0_36, %c0_37] : memref<9x32x16xbf16, #tpu.memory_space<vmem>>, vector<1x32x16xbf16>
    %43 = vector.shape_cast %42 : vector<1x32x16xbf16> to vector<32x16xbf16>
    %cst_38 = arith.constant dense<0.000000e+00> : vector<256x16xf32>
    %44 = tpu.matmul %41, %43, %cst_38 {dimension_numbers = #tpu.dot_dimension_numbers<[1], [0], [0], [1], [0, 0, 1, 1], [], []>} : vector<256x32xbf16>, vector<32x16xbf16>, vector<256x16xf32> -> vector<256x16xf32>
    %c0_39 = arith.constant 0 : index
    %c0_40 = arith.constant 0 : index
    %45 = vector.load %arg8[%c0_39, %c0_40] : memref<256x16xf32, #tpu.memory_space<vmem>>, vector<256x16xf32>
    %46 = arith.addf %45, %44 : vector<256x16xf32>
    %c0_41 = arith.constant 0 : index
    %c0_42 = arith.constant 0 : index
    %47 = vector.load %arg8[%c0_41, %c0_42] : memref<256x16xf32, #tpu.memory_space<vmem>>, vector<256x16xf32>
    tpu.vector_store %arg8[%c0_41, %c0_42], %46 {strides = array<i32>} : memref<256x16xf32, #tpu.memory_space<vmem>>, vector<256x16xf32>,
    %48 = vector.extract_strided_slice %1 {offsets = [2, 0, 0], sizes = [16, 16, 32], strides = [1, 1, 1]} : vector<18x18x32xbf16> to vector<16x16x32xbf16>
    %49 = vector.shape_cast %48 : vector<16x16x32xbf16> to vector<256x32xbf16>
    %c6 = arith.constant 6 : index
    %c0_43 = arith.constant 0 : index
    %c0_44 = arith.constant 0 : index
    %50 = vector.load %arg3[%c6, %c0_43, %c0_44] : memref<9x32x16xbf16, #tpu.memory_space<vmem>>, vector<1x32x16xbf16>
    %51 = vector.shape_cast %50 : vector<1x32x16xbf16> to vector<32x16xbf16>
    %cst_45 = arith.constant dense<0.000000e+00> : vector<256x16xf32>
    %52 = tpu.matmul %49, %51, %cst_45 {dimension_numbers = #tpu.dot_dimension_numbers<[1], [0], [0], [1], [0, 0, 1, 1], [], []>} : vector<256x32xbf16>, vector<32x16xbf16>, vector<256x16xf32> -> vector<256x16xf32>
    %c0_46 = arith.constant 0 : index
    %c0_47 = arith.constant 0 : index
    %53 = vector.load %arg8[%c0_46, %c0_47] : memref<256x16xf32, #tpu.memory_space<vmem>>, vector<256x16xf32>
    %54 = arith.addf %53, %52 : vector<256x16xf32>
    %c0_48 = arith.constant 0 : index
    %c0_49 = arith.constant 0 : index
    %55 = vector.load %arg8[%c0_48, %c0_49] : memref<256x16xf32, #tpu.memory_space<vmem>>, vector<256x16xf32>
    tpu.vector_store %arg8[%c0_48, %c0_49], %54 {strides = array<i32>} : memref<256x16xf32, #tpu.memory_space<vmem>>, vector<256x16xf32>,
    %56 = vector.extract_strided_slice %1 {offsets = [2, 1, 0], sizes = [16, 16, 32], strides = [1, 1, 1]} : vector<18x18x32xbf16> to vector<16x16x32xbf16>
    %57 = vector.shape_cast %56 : vector<16x16x32xbf16> to vector<256x32xbf16>
    %c7 = arith.constant 7 : index
    %c0_50 = arith.constant 0 : index
    %c0_51 = arith.constant 0 : index
    %58 = vector.load %arg3[%c7, %c0_50, %c0_51] : memref<9x32x16xbf16, #tpu.memory_space<vmem>>, vector<1x32x16xbf16>
    %59 = vector.shape_cast %58 : vector<1x32x16xbf16> to vector<32x16xbf16>
    %cst_52 = arith.constant dense<0.000000e+00> : vector<256x16xf32>
    %60 = tpu.matmul %57, %59, %cst_52 {dimension_numbers = #tpu.dot_dimension_numbers<[1], [0], [0], [1], [0, 0, 1, 1], [], []>} : vector<256x32xbf16>, vector<32x16xbf16>, vector<256x16xf32> -> vector<256x16xf32>
    %c0_53 = arith.constant 0 : index
    %c0_54 = arith.constant 0 : index
    %61 = vector.load %arg8[%c0_53, %c0_54] : memref<256x16xf32, #tpu.memory_space<vmem>>, vector<256x16xf32>
    %62 = arith.addf %61, %60 : vector<256x16xf32>
    %c0_55 = arith.constant 0 : index
    %c0_56 = arith.constant 0 : index
    %63 = vector.load %arg8[%c0_55, %c0_56] : memref<256x16xf32, #tpu.memory_space<vmem>>, vector<256x16xf32>
    tpu.vector_store %arg8[%c0_55, %c0_56], %62 {strides = array<i32>} : memref<256x16xf32, #tpu.memory_space<vmem>>, vector<256x16xf32>,
    %64 = vector.extract_strided_slice %1 {offsets = [2, 2, 0], sizes = [16, 16, 32], strides = [1, 1, 1]} : vector<18x18x32xbf16> to vector<16x16x32xbf16>
    %65 = vector.shape_cast %64 : vector<16x16x32xbf16> to vector<256x32xbf16>
    %c8 = arith.constant 8 : index
    %c0_57 = arith.constant 0 : index
    %c0_58 = arith.constant 0 : index
    %66 = vector.load %arg3[%c8, %c0_57, %c0_58] : memref<9x32x16xbf16, #tpu.memory_space<vmem>>, vector<1x32x16xbf16>
    %67 = vector.shape_cast %66 : vector<1x32x16xbf16> to vector<32x16xbf16>
    %cst_59 = arith.constant dense<0.000000e+00> : vector<256x16xf32>
    %68 = tpu.matmul %65, %67, %cst_59 {dimension_numbers = #tpu.dot_dimension_numbers<[1], [0], [0], [1], [0, 0, 1, 1], [], []>} : vector<256x32xbf16>, vector<32x16xbf16>, vector<256x16xf32> -> vector<256x16xf32>
    %c0_60 = arith.constant 0 : index
    %c0_61 = arith.constant 0 : index
    %69 = vector.load %arg8[%c0_60, %c0_61] : memref<256x16xf32, #tpu.memory_space<vmem>>, vector<256x16xf32>
    %70 = arith.addf %69, %68 : vector<256x16xf32>
    %c0_62 = arith.constant 0 : index
    %c0_63 = arith.constant 0 : index
    %71 = vector.load %arg8[%c0_62, %c0_63] : memref<256x16xf32, #tpu.memory_space<vmem>>, vector<256x16xf32>
    tpu.vector_store %arg8[%c0_62, %c0_63], %70 {strides = array<i32>} : memref<256x16xf32, #tpu.memory_space<vmem>>, vector<256x16xf32>,
    %c0_64 = arith.constant 0 : index
    %c0_65 = arith.constant 0 : index
    %72 = vector.load %arg8[%c0_64, %c0_65] : memref<256x16xf32, #tpu.memory_space<vmem>>, vector<256x16xf32>
    %c0_66 = arith.constant 0 : index
    %c0_67 = arith.constant 0 : index
    %73 = vector.load %arg4[%c0_66, %c0_67] : memref<1x16xf32, #tpu.memory_space<vmem>>, vector<1x16xf32>
    %74 = vector.broadcast %73 : vector<1x16xf32> to vector<256x16xf32>
    %75 = arith.addf %72, %74 : vector<256x16xf32>
    %cst_68 = arith.constant 0.000000e+00 : f32
    %76 = vector.broadcast %cst_68 : f32 to vector<256x16xf32>
    %77 = arith.maximumf %75, %76 : vector<256x16xf32>
    %78 = arith.truncf %77 : vector<256x16xf32> to vector<256x16xbf16>
    %79 = arith.extf %78 : vector<256x16xbf16> to vector<256x16xf32>
    %80 = tpu.transpose %79, [1, 0] : vector<256x16xf32> -> vector<16x256xf32>
    %c0_69 = arith.constant 0 : index
    %c0_70 = arith.constant 0 : index
    %81 = vector.load %arg5[%c0_69, %c0_70] : memref<1x16xbf16, #tpu.memory_space<vmem>>, vector<1x16xbf16>
    %82 = arith.extf %81 : vector<1x16xbf16> to vector<1x16xf32>
    %83 = vector.shape_cast %82 : vector<1x16xf32> to vector<16xf32>
    %84 = vector.shape_cast %83 : vector<16xf32> to vector<16x1xf32>
    %85 = vector.broadcast %84 : vector<16x1xf32> to vector<16x256xf32>
    %86 = arith.mulf %80, %85 : vector<16x256xf32>
    %cst_71 = arith.constant dense<0.000000e+00> : vector<256xf32>
    %87 = vector.multi_reduction <add>, %86, %cst_71 [0] : vector<16x256xf32> to vector<256xf32>
    %88 = vector.shape_cast %87 : vector<256xf32> to vector<1x256xf32>
    %c0_72 = arith.constant 0 : index
    %c0_73 = arith.constant 0 : index
    %89 = vector.load %arg6[%c0_72, %c0_73] : memref<1x1xf32, #tpu.memory_space<vmem>>, vector<1x1xf32>
    %90 = vector.broadcast %89 : vector<1x1xf32> to vector<1x256xf32>
    %91 = arith.addf %88, %90 : vector<1x256xf32>
    %92 = vector.shape_cast %91 : vector<1x256xf32> to vector<1x1x1x256xf32>
    %c0_74 = arith.constant 0 : index
    %c0_75 = arith.constant 0 : index
    %c0_76 = arith.constant 0 : index
    %c0_77 = arith.constant 0 : index
    %93 = vector.load %arg7[%c0_74, %c0_75, %c0_76, %c0_77] : memref<1x1x1x256xf32, #tpu.memory_space<vmem>>, vector<1x1x1x256xf32>
    tpu.vector_store %arg7[%c0_74, %c0_75, %c0_76, %c0_77], %92 {strides = array<i32>} : memref<1x1x1x256xf32, #tpu.memory_space<vmem>>, vector<1x1x1x256xf32>,
    return
  }
  func.func @transform_0(%arg0: i32, %arg1: i32) -> (i32, i32, i32, i32) {
    %c0_i32 = arith.constant 0 : i32
    %c0_i32_0 = arith.constant 0 : i32
    %c0_i32_1 = arith.constant 0 : i32
    %c0_i32_2 = arith.constant 0 : i32
    return %arg0, %c0_i32, %c0_i32_0, %c0_i32_1 : i32, i32, i32, i32
  }
  func.func @transform_1(%arg0: i32, %arg1: i32) -> (i32, i32, i32) {
    %c0_i32 = arith.constant 0 : i32
    %c0_i32_0 = arith.constant 0 : i32
    %c0_i32_1 = arith.constant 0 : i32
    %c0_i32_2 = arith.constant 0 : i32
    return %c0_i32, %c0_i32_0, %c0_i32_1 : i32, i32, i32
  }
  func.func @transform_2(%arg0: i32, %arg1: i32) -> (i32, i32) {
    %c0_i32 = arith.constant 0 : i32
    %c0_i32_0 = arith.constant 0 : i32
    %c0_i32_1 = arith.constant 0 : i32
    return %c0_i32, %c0_i32_0 : i32, i32
  }
  func.func @transform_3(%arg0: i32, %arg1: i32) -> (i32, i32) {
    %c0_i32 = arith.constant 0 : i32
    %c0_i32_0 = arith.constant 0 : i32
    %c0_i32_1 = arith.constant 0 : i32
    return %c0_i32, %c0_i32_0 : i32, i32
  }
  func.func @transform_4(%arg0: i32, %arg1: i32) -> (i32, i32) {
    %c0_i32 = arith.constant 0 : i32
    %c0_i32_0 = arith.constant 0 : i32
    %c0_i32_1 = arith.constant 0 : i32
    return %c0_i32, %c0_i32_0 : i32, i32
  }
  func.func @transform_5(%arg0: i32, %arg1: i32) -> (i32, i32, i32, i32) {
    %c0_i32 = arith.constant 0 : i32
    %c0_i32_0 = arith.constant 0 : i32
    %c0_i32_1 = arith.constant 0 : i32
    return %arg0, %arg1, %c0_i32, %c0_i32_0 : i32, i32, i32, i32
  }
}

</mosaic_0001>

<llo_original>
// kernel: aux_module_forward.1
$region0: #{aux_module_forward.1}
  #allocation0 [shape = 'u32[]', space=smem, size = 0x4, offset = 0x4, fixed_abs, tag = 'smem constant byte address 0x4 - core index']
  #allocation1 [shape = 'u32[144,128]{1,0:T(1,128)}', space=vmem, size = 0x12000, scoped, tag = 'internal scratch']
  #allocation2 [shape = 'f32[256,16]{1,0:T(8,128)}', space=vmem, size = 0x20000, scoped, tag = 'scratch operand']
  #allocation3 [shape = 'f32[1,1]{1,0:T(1,128)S(1)}', space=vmem, size = 0x200, scoped, tag = 'scoped memory for aux_module_forward.1']
  %s0 = inlined_call_operand.vmem [shape: bf16[2,18,18,32], index: 0, kind: input, shape index: {}]
  %s1 = inlined_call_operand.vmem [shape: bf16[9,32,16], index: 1, kind: input, shape index: {}]
  %s2 = inlined_call_operand.vmem [shape: f32[1,16], index: 2, kind: input, shape index: {}]
  %s3 = inlined_call_operand.vmem [shape: bf16[1,16], index: 3, kind: input, shape index: {}]
  %s4 = inlined_call_operand.<no memory space> [shape: f32[1,1], index: 4, kind: input, shape index: {}]
  %s5 = inlined_call_operand.vmem [shape: f32[2,1,1,256], index: 5, kind: output, shape index: {}]
  %s6 = sld [smem:[#allocation0]]
  $region53: #{aux_module_forward.1} parent=0
    _
  %s8 = ssub.s32 1, %s6
  %s9 = scalar_select 0, %s8, %s6
  %v10 = vstv %s4
  %11 = vst [vmem:[#allocation3] sm:$0x1] %v10
  loop: start=0, step=1, limit=4
  $region2: #{aux_module_forward.1} parent=0 // loop_pre_header
    _
  $region3: #{aux_module_forward.1} parent=0 // loop_header
    %s13 = sphi 0, %s17
    %p14 = scmp.ge.s32.totalorder %s13, 4
    %s20 = sphi 0, %s32
    %s21 = sphi 0, %s28
    %s22 = sphi 0, %s20
    %s23 = sphi 0, %s21
    %s24 = sphi 0, %s22
    %s25 = sphi 0, %s23
    %s35 = sphi 0, %s37
    %s38 = sphi 0, %s35
    %s39 = sphi 0, %s38
    %s55 = sphi 0, %s39
    %s59 = sphi 0, %s59
    %s61 = sphi 0, %s59
    %s62 = sphi 0, %s61
    %s76 = sphi 0, %s62
    %s80 = sphi 0, %s80
    %s82 = sphi 0, %s80
    %s83 = sphi 0, %s82
    %s97 = sphi 0, %s83
    %s101 = sphi 0, %s101
    %s103 = sphi 0, %s101
    %s104 = sphi 0, %s103
    %s118 = sphi 0, %s104
    %s122 = sphi 0, %s122
    %s124 = sphi 0, %s122
    %s125 = sphi 0, %s124
    %s139 = sphi 0, %s125
    %s147 = sphi 0, %s149
    %s150 = sphi 0, %s147
    %s151 = sphi 0, %s150
    %s167 = sphi 0, %s151
  $region4: #{aux_module_forward.1} parent=0 // loop_header_branch
    %16 = sbr.rel (%p14) target = $region8
  $region5: #{aux_module_forward.1} parent=0 // loop_body
    %s18 = ssub.s32 %s13, 1
    %s19 = ssub.s32 %s13, 2
    %s26 = sadd.s32 1, %s21
    %p27 = scmp.ge.s32.totalorder %s26, 1
    %s28 = scalar_select %p27, 0, %s26
    %s29 = sadd.s32 1, %s20
    %s30 = scalar_select %p27, %s29, %s20
    %p31 = scmp.ge.s32.totalorder %s30, 2
    %s32 = scalar_select %p31, 0, %s30
    %s33 = ssub.s32 %s20, %s32
    %p34 = scmp.eq.s32.totalorder %s33, 0
    %s36 = sadd.s32 %s35, 1
    %s37 = scalar_select %p34, %s35, %s36
    %p40 = pneg %p34
    %p41 = scmp.eq.s32.totalorder %s13, 1
    %p42 = por %p40, %p41
    %p43 = scmp.ne.s32.totalorder %s35, %s38
    %p44 = scmp.eq.s32.totalorder %s13, 0
    %p45 = por %p43, %p44
    %p46 = scmp.ne.s32.totalorder %s35, %s38
    %p47 = scmp.eq.s32.totalorder %s18, 1
    %p48 = por %p46, %p47
    %p49 = scmp.ne.s32.totalorder %s38, %s39
    %p50 = scmp.eq.s32.totalorder %s18, 0
    %p51 = por %p49, %p50
    %p52 = scmp.ne.s32.totalorder %s38, %s39
    %p53 = scmp.eq.s32.totalorder %s19, 1
    %p54 = por %p52, %p53
    %p56 = scmp.ne.s32.totalorder %s39, %s55
    %p57 = scmp.eq.s32.totalorder %s19, 0
    %p58 = por %p56, %p57
    %s60 = sadd.s32 %s59, 1
    %p63 = scmp.eq.s32.totalorder %s13, 1
    %p64 = scmp.ne.s32.totalorder %s59, %s61
    %p65 = scmp.eq.s32.totalorder %s13, 0
    %p66 = por %p64, %p65
    %p67 = scmp.ne.s32.totalorder %s59, %s61
    %p68 = scmp.eq.s32.totalorder %s18, 1
    %p69 = por %p67, %p68
    %p70 = scmp.ne.s32.totalorder %s61, %s62
    %p71 = scmp.eq.s32.totalorder %s18, 0
    %p72 = por %p70, %p71
    %p73 = scmp.ne.s32.totalorder %s61, %s62
    %p74 = scmp.eq.s32.totalorder %s19, 1
    %p75 = por %p73, %p74
    %p77 = scmp.ne.s32.totalorder %s62, %s76
    %p78 = scmp.eq.s32.totalorder %s19, 0
    %p79 = por %p77, %p78
    %s81 = sadd.s32 %s80, 1
    %p84 = scmp.eq.s32.totalorder %s13, 1
    %p85 = scmp.ne.s32.totalorder %s80, %s82
    %p86 = scmp.eq.s32.totalorder %s13, 0
    %p87 = por %p85, %p86
    %p88 = scmp.ne.s32.totalorder %s80, %s82
    %p89 = scmp.eq.s32.totalorder %s18, 1
    %p90 = por %p88, %p89
    %p91 = scmp.ne.s32.totalorder %s82, %s83
    %p92 = scmp.eq.s32.totalorder %s18, 0
    %p93 = por %p91, %p92
    %p94 = scmp.ne.s32.totalorder %s82, %s83
    %p95 = scmp.eq.s32.totalorder %s19, 1
    %p96 = por %p94, %p95
    %p98 = scmp.ne.s32.totalorder %s83, %s97
    %p99 = scmp.eq.s32.totalorder %s19, 0
    %p100 = por %p98, %p99
    %s102 = sadd.s32 %s101, 1
    %p105 = scmp.eq.s32.totalorder %s13, 1
    %p106 = scmp.ne.s32.totalorder %s101, %s103
    %p107 = scmp.eq.s32.totalorder %s13, 0
    %p108 = por %p106, %p107
    %p109 = scmp.ne.s32.totalorder %s101, %s103
    %p110 = scmp.eq.s32.totalorder %s18, 1
    %p111 = por %p109, %p110
    %p112 = scmp.ne.s32.totalorder %s103, %s104
    %p113 = scmp.eq.s32.totalorder %s18, 0
    %p114 = por %p112, %p113
    %p115 = scmp.ne.s32.totalorder %s103, %s104
    %p116 = scmp.eq.s32.totalorder %s19, 1
    %p117 = por %p115, %p116
    %p119 = scmp.ne.s32.totalorder %s104, %s118
    %p120 = scmp.eq.s32.totalorder %s19, 0
    %p121 = por %p119, %p120
    %s123 = sadd.s32 %s122, 1
    %p126 = scmp.eq.s32.totalorder %s13, 1
    %p127 = scmp.ne.s32.totalorder %s122, %s124
    %p128 = scmp.eq.s32.totalorder %s13, 0
    %p129 = por %p127, %p128
    %p130 = scmp.ne.s32.totalorder %s122, %s124
    %p131 = scmp.eq.s32.totalorder %s18, 1
    %p132 = por %p130, %p131
    %p133 = scmp.ne.s32.totalorder %s124, %s125
    %p134 = scmp.eq.s32.totalorder %s18, 0
    %p135 = por %p133, %p134
    %p136 = scmp.ne.s32.totalorder %s124, %s125
    %p137 = scmp.eq.s32.totalorder %s19, 1
    %p138 = por %p136, %p137
    %p140 = scmp.ne.s32.totalorder %s125, %s139
    %p141 = scmp.eq.s32.totalorder %s19, 0
    %p142 = por %p140, %p141
    %s143 = ssub.s32 %s20, %s32
    %s144 = ssub.s32 %s21, %s28
    %s145 = sor.u32 %s143, %s144
    %p146 = scmp.eq.s32.totalorder %s145, 0
    %s148 = sadd.s32 %s147, 1
    %s149 = scalar_select %p146, %s147, %s148
    %p152 = pneg %p146
    %p153 = scmp.eq.s32.totalorder %s13, 1
    %p154 = por %p152, %p153
    %p155 = scmp.ne.s32.totalorder %s147, %s150
    %p156 = scmp.eq.s32.totalorder %s13, 0
    %p157 = por %p155, %p156
    %p158 = scmp.ne.s32.totalorder %s147, %s150
    %p159 = scmp.eq.s32.totalorder %s18, 1
    %p160 = por %p158, %p159
    %p161 = scmp.ne.s32.totalorder %s150, %s151
    %p162 = scmp.eq.s32.totalorder %s18, 0
    %p163 = por %p161, %p162
    %p164 = scmp.ne.s32.totalorder %s150, %s151
    %p165 = scmp.eq.s32.totalorder %s19, 1
    %p166 = por %p164, %p165
    %p168 = scmp.ne.s32.totalorder %s151, %s167
    %p169 = scmp.eq.s32.totalorder %s19, 0
    %p170 = por %p168, %p169
    %p171 = scmp.le.s32.totalorder 1, %s13
    %p172 = scmp.lt.s32.totalorder %s13, 3
    %p173 = pnand %p171, %p172
    %p174 = pneg %p173
    // Predicated region
    $region9: #{aux_module_forward.1} parent=5 // pred_check
      _
    $region10: #{aux_module_forward.1} parent=5 // pred_check_branch
      %176 = sbr.rel (%p173) target = $region12
    $region11: #{aux_module_forward.1} parent=5 // pred_region
      %s177 = ssub.s32 %s13, 1
      // Predicated region
      $region13: #{aux_module_forward.1} parent=11 // pred_check
        %p178 = pneg %p72
      $region14: #{aux_module_forward.1} parent=11 // pred_check_branch
        %180 = sbr.rel (%p178) target = $region16
      $region15: #{aux_module_forward.1} parent=11 // pred_region
        _
      $region16: #{aux_module_forward.1} parent=11 // pred_fallthru
        _
      // Predicated region
      $region17: #{aux_module_forward.1} parent=11 // pred_check
        %p181 = pneg %p93
      $region18: #{aux_module_forward.1} parent=11 // pred_check_branch
        %183 = sbr.rel (%p181) target = $region20
      $region19: #{aux_module_forward.1} parent=11 // pred_region
        _
      $region20: #{aux_module_forward.1} parent=11 // pred_fallthru
        _
      // Predicated region
      $region21: #{aux_module_forward.1} parent=11 // pred_check
        %p184 = pneg %p114
      $region22: #{aux_module_forward.1} parent=11 // pred_check_branch
        %186 = sbr.rel (%p184) target = $region24
      $region23: #{aux_module_forward.1} parent=11 // pred_region
        _
      $region24: #{aux_module_forward.1} parent=11 // pred_fallthru
        _
      // Predicated region
      $region25: #{aux_module_forward.1} parent=11 // pred_check
        %p187 = pneg %p135
      $region26: #{aux_module_forward.1} parent=11 // pred_check_branch
        %189 = sbr.rel (%p187) target = $region28
      $region27: #{aux_module_forward.1} parent=11 // pred_region
        _
      $region28: #{aux_module_forward.1} parent=11 // pred_fallthru
        _
    $region12: #{aux_module_forward.1} parent=5 // pred_fallthru
      _
    %p190 = scmp.lt.s32.totalorder %s13, 2
    // Predicated region
    $region29: #{aux_module_forward.1} parent=5 // pred_check
      %p191 = pneg %p190
    $region30: #{aux_module_forward.1} parent=5 // pred_check_branch
      %193 = sbr.rel (%p191) target = $region32
    $region31: #{aux_module_forward.1} parent=5 // pred_region
      // Predicated region
      $region33: #{aux_module_forward.1} parent=31 // pred_check
        %p194 = pneg %p45
      $region34: #{aux_module_forward.1} parent=31 // pred_check_branch
        %196 = sbr.rel (%p194) target = $region36
      $region35: #{aux_module_forward.1} parent=31 // pred_region
        %p197 = scmp.lt.s32.totalorder %s20, 1
        %s198 = scalar_select %p197, %s20, 1
        %s199 = smul.addr %s198, 54
        %s200 = smul.addr %s199, 4
        %s201 = scalar_lea.vmem %s0, %s200
      $region36: #{aux_module_forward.1} parent=31 // pred_fallthru
        _
    $region32: #{aux_module_forward.1} parent=5 // pred_fallthru
      _
    %p202 = scmp.le.s32.totalorder 1, %s13
    %p203 = scmp.lt.s32.totalorder %s13, 3
    %p204 = pnand %p202, %p203
    %p205 = pneg %p204
    // Predicated region
    $region37: #{aux_module_forward.1} parent=5 // pred_check
      _
    $region38: #{aux_module_forward.1} parent=5 // pred_check_branch
      %207 = sbr.rel (%p204) target = $region40
    $region39: #{aux_module_forward.1} parent=5 // pred_region
      %s208 = ssub.s32 %s13, 1
      %p209 = scmp.lt.s32.totalorder %s22, 1
      %s210 = scalar_select %p209, %s22, 1
      %s211 = smul.addr %s210, 54
      %s212 = smul.addr %s211, 4
      %s213 = scalar_lea.vmem %s0, %s212
      %p214 = pneg %p51
      %p215 = pneg %p48
      %p216 = pneg %p72
      %p217 = pneg %p69
      %p218 = pneg %p93
      %p219 = pneg %p90
      %p220 = pneg %p114
      %p221 = pneg %p111
      %p222 = pneg %p135
      %p223 = pneg %p132
      %p224 = pneg %p163
      %p225 = pneg %p160
      %p226 = scmp.lt.s32.totalorder %s22, 1
      %s227 = scalar_select %p226, %s22, 1
      %p228 = scmp.lt.s32.totalorder %s23, 0
      %s229 = scalar_select %p228, %s23, 0
      %s230 = smul.addr %s229, 2
      %s231 = smul.addr %s227, 2
      %s232 = sadd.s32 %s230, %s231
      %s233 = scalar_lea.vmem %s5, %s232
      %p234 = scmp.lt.s32.totalorder %s22, 1
      %s235 = scalar_select %p234, %s22, 1
      %s236 = smul.addr %s235, 54
      %s237 = smul.addr %s236, 4
      %s238 = scalar_lea.vmem %s0, %s237
      %p239 = scmp.lt.s32.totalorder %s22, 1
      %s240 = scalar_select %p239, %s22, 1
      %p241 = scmp.lt.s32.totalorder %s23, 0
      %s242 = scalar_select %p241, %s23, 0
      %s243 = smul.addr %s242, 2
      %s244 = smul.addr %s240, 2
      %s245 = sadd.s32 %s243, %s244
      %s246 = scalar_lea.vmem %s5, %s245
      %v248 = vld [vmem:[%s238] sm:$0xf]
      %v249 = vld [vmem:[%s238 + $0x4] sm:$0xf]
      %v250 = vld [vmem:[%s238 + $0x8] sm:$0x1]
      %v251 = vld [vmem:[%s238 + $0xc] sm:$0xf]
      %v252 = vld [vmem:[%s238 + $0x10] sm:$0xf]
      %v253 = vld [vmem:[%s238 + $0x14] sm:$0x1]
      %v254 = vld [vmem:[%s238 + $0x18] sm:$0xf]
      %v255 = vld [vmem:[%s238 + $0x1c] sm:$0xf]
      %v256 = vld [vmem:[%s238 + $0x20] sm:$0x1]
      %v257 = vld [vmem:[%s238 + $0x24] sm:$0xf]
      %v258 = vld [vmem:[%s238 + $0x28] sm:$0xf]
      %v259 = vld [vmem:[%s238 + $0x2c] sm:$0x1]
      %v260 = vld [vmem:[%s238 + $0x30] sm:$0xf]
      %v261 = vld [vmem:[%s238 + $0x34] sm:$0xf]
      %v262 = vld [vmem:[%s238 + $0x38] sm:$0x1]
      %v263 = vld [vmem:[%s238 + $0x3c] sm:$0xf]
      %v264 = vld [vmem:[%s238 + $0x40] sm:$0xf]
      %v265 = vld [vmem:[%s238 + $0x44] sm:$0x1]
      %v266 = vld [vmem:[%s238 + $0x48] sm:$0xf]
      %v267 = vld [vmem:[%s238 + $0x4c] sm:$0xf]
      %v268 = vld [vmem:[%s238 + $0x50] sm:$0x1]
      %v269 = vld [vmem:[%s238 + $0x54] sm:$0xf]
      %v270 = vld [vmem:[%s238 + $0x58] sm:$0xf]
      %v271 = vld [vmem:[%s238 + $0x5c] sm:$0x1]
      %v272 = vld [vmem:[%s238 + $0x60] sm:$0xf]
      %v273 = vld [vmem:[%s238 + $0x64] sm:$0xf]
      %v274 = vld [vmem:[%s238 + $0x68] sm:$0x1]
      %v275 = vld [vmem:[%s238 + $0x6c] sm:$0xf]
      %v276 = vld [vmem:[%s238 + $0x70] sm:$0xf]
      %v277 = vld [vmem:[%s238 + $0x74] sm:$0x1]
      %v278 = vld [vmem:[%s238 + $0x78] sm:$0xf]
      %v279 = vld [vmem:[%s238 + $0x7c] sm:$0xf]
      %v280 = vld [vmem:[%s238 + $0x80] sm:$0x1]
      %v281 = vld [vmem:[%s238 + $0x84] sm:$0xf]
      %v282 = vld [vmem:[%s238 + $0x88] sm:$0xf]
      %v283 = vld [vmem:[%s238 + $0x8c] sm:$0x1]
      %v284 = vld [vmem:[%s238 + $0x90] sm:$0xf]
      %v285 = vld [vmem:[%s238 + $0x94] sm:$0xf]
      %v286 = vld [vmem:[%s238 + $0x98] sm:$0x1]
      %v287 = vld [vmem:[%s238 + $0x9c] sm:$0xf]
      %v288 = vld [vmem:[%s238 + $0xa0] sm:$0xf]
      %v289 = vld [vmem:[%s238 + $0xa4] sm:$0x1]
      %v290 = vld [vmem:[%s238 + $0xa8] sm:$0xf]
      %v291 = vld [vmem:[%s238 + $0xac] sm:$0xf]
      %v292 = vld [vmem:[%s238 + $0xb0] sm:$0x1]
      %v293 = vld [vmem:[%s238 + $0xb4] sm:$0xf]
      %v294 = vld [vmem:[%s238 + $0xb8] sm:$0xf]
      %v295 = vld [vmem:[%s238 + $0xbc] sm:$0x1]
      %v296 = vld [vmem:[%s238 + $0xc0] sm:$0xf]
      %v297 = vld [vmem:[%s238 + $0xc4] sm:$0xf]
      %v298 = vld [vmem:[%s238 + $0xc8] sm:$0x1]
      %v299 = vld [vmem:[%s238 + $0xcc] sm:$0xf]
      %v300 = vld [vmem:[%s238 + $0xd0] sm:$0xf]
      %v301 = vld [vmem:[%s238 + $0xd4] sm:$0x1]
      %v302 = vld [vmem:[%s1] sm:$0xf]
      %v303 = vld [vmem:[%s1 + $0x4] sm:$0xf]
      %v304 = vld [vmem:[%s1 + $0x8] sm:$0xf]
      %v305 = vld [vmem:[%s1 + $0xc] sm:$0xf]
      %v338 = vunpack.c.l.b16 %v248
      %v339 = vunpack.c.l.b16 %v249
      %v340 = vunpack.c.l.b16 %v251
      %v341 = vunpack.c.l.b16 %v252
      %v342 = vunpack.c.l.b16 %v254
      %v343 = vunpack.c.l.b16 %v255
      %v344 = vunpack.c.l.b16 %v257
      %v345 = vunpack.c.l.b16 %v258
      %v346 = vunpack.c.l.b16 %v260
      %v347 = vunpack.c.l.b16 %v261
      %v348 = vunpack.c.l.b16 %v263
      %v349 = vunpack.c.l.b16 %v264
      %v350 = vunpack.c.l.b16 %v266
      %v351 = vunpack.c.l.b16 %v267
      %v352 = vunpack.c.l.b16 %v269
      %v353 = vunpack.c.l.b16 %v270
      %v354 = vunpack.c.l.b16 %v272
      %v355 = vunpack.c.l.b16 %v273
      %v356 = vunpack.c.l.b16 %v275
      %v357 = vunpack.c.l.b16 %v276
      %v358 = vunpack.c.l.b16 %v278
      %v359 = vunpack.c.l.b16 %v279
      %v360 = vunpack.c.l.b16 %v281
      %v361 = vunpack.c.l.b16 %v282
      %v362 = vunpack.c.l.b16 %v284
      %v363 = vunpack.c.l.b16 %v285
      %v364 = vunpack.c.l.b16 %v287
      %v365 = vunpack.c.l.b16 %v288
      %v366 = vunpack.c.l.b16 %v290
      %v367 = vunpack.c.l.b16 %v291
      %v368 = vunpack.c.l.b16 %v293
      %v369 = vunpack.c.l.b16 %v294
      %v370 = vpack.c.b16 %v339, %v338
      %v371 = vpack.c.b16 %v341, %v340
      %v372 = vpack.c.b16 %v343, %v342
      %v373 = vpack.c.b16 %v345, %v344
      %v374 = vpack.c.b16 %v347, %v346
      %v375 = vpack.c.b16 %v349, %v348
      %v376 = vpack.c.b16 %v351, %v350
      %v377 = vpack.c.b16 %v353, %v352
      %v378 = vpack.c.b16 %v355, %v354
      %v379 = vpack.c.b16 %v357, %v356
      %v380 = vpack.c.b16 %v359, %v358
      %v381 = vpack.c.b16 %v361, %v360
      %v382 = vpack.c.b16 %v363, %v362
      %v383 = vpack.c.b16 %v365, %v364
      %v384 = vpack.c.b16 %v367, %v366
      %v385 = vpack.c.b16 %v369, %v368
      %v390 = vunpack.c.l.b16 %v302
      %v391 = vunpack.c.l.b16 %v303
      %v392 = vunpack.c.l.b16 %v304
      %v393 = vunpack.c.l.b16 %v305
      %v394 = vpack.c.b16 %v391, %v390
      %v395 = vpack.c.b16 %v393, %v392
      %vm398 = vcmask 261120
      %v400 = vsel %vm398, %v370, 0
      %v403 = vsel %vm398, %v371, 0
      %v406 = vsel %vm398, %v372, 0
      %v409 = vsel %vm398, %v373, 0
      %v412 = vsel %vm398, %v374, 0
      %v415 = vsel %vm398, %v375, 0
      %v418 = vsel %vm398, %v376, 0
      %v421 = vsel %vm398, %v377, 0
      %v424 = vsel %vm398, %v378, 0
      %v427 = vsel %vm398, %v379, 0
      %v430 = vsel %vm398, %v380, 0
      %v433 = vsel %vm398, %v381, 0
      %v436 = vsel %vm398, %v382, 0
      %v439 = vsel %vm398, %v383, 0
      %v442 = vsel %vm398, %v384, 0
      %v445 = vsel %vm398, %v385, 0
      %447 = vmatprep.subr.bf16.mxu0 0
      %448 = vmatpush1.bf16.msra.mxu0 %v394
      %449 = vmatprep.subr.bf16.mxu0 0
      %450 = vmatpush1.bf16.msra.mxu0 %v395
      %451 = vmatprep.subr.bf16.mxu0 0
      %452 = vmatpush1.bf16.msra.mxu0 0
      %453 = vmatprep.subr.bf16.mxu0 0
      %454 = vmatpush1.bf16.msra.mxu0 0
      %455 = vmatprep.subr.bf16.mxu0 0
      %456 = vmatpush1.bf16.msra.mxu0 0
      %457 = vmatprep.subr.bf16.mxu0 0
      %458 = vmatpush1.bf16.msra.mxu0 0
      %459 = vmatprep.subr.bf16.mxu0 0
      %460 = vmatpush1.bf16.msra.mxu0 0
      %461 = vmatprep.subr.bf16.mxu0 0
      %462 = vmatpush1.bf16.msra.mxu0 0
      %463 = vmatprep.subr.bf16.mxu0 0
      %464 = vmatpush1.bf16.msra.mxu0 0
      %465 = vmatprep.subr.bf16.mxu0 0
      %466 = vmatpush1.bf16.msra.mxu0 0
      %467 = vmatprep.subr.bf16.mxu0 0
      %468 = vmatpush1.bf16.msra.mxu0 0
      %469 = vmatprep.subr.bf16.mxu0 0
      %470 = vmatpush1.bf16.msra.mxu0 0
      %471 = vmatprep.subr.bf16.mxu0 0
      %472 = vmatpush1.bf16.msra.mxu0 0
      %473 = vmatprep.subr.bf16.mxu0 0
      %474 = vmatpush1.bf16.msra.mxu0 0
      %475 = vmatprep.subr.bf16.mxu0 0
      %476 = vmatpush1.bf16.msra.mxu0 0
      %477 = vmatprep.subr.bf16.mxu0 0
      %478 = vmatpush1.bf16.msra.mxu0 0
      %479 = vmatprep.mubr.bf16.mxu0 0
      %480 = vmatmul.mubr.bf16.gmra.mrb[0].mxu0 %v400
      %v481 = vpop.f32.mrb[0].mxu0
      %v482 = vadd.f32 0.0, %v481
      %v483 = vpop.f32.mrb[0].mxu0
      %v484 = vpop.f32.mrb[0].mxu0
      %v485 = vadd.f32 0.0, %v484
      %v486 = vpop.f32.mrb[0].mxu0
      %487 = vmatprep.mubr.bf16.mxu0 0
      %488 = vmatmul.mubr.bf16.gmra.mrb[0].mxu0 %v403
      %v489 = vpop.f32.mrb[0].mxu0
      %v490 = vadd.f32 0.0, %v489
      %v491 = vpop.f32.mrb[0].mxu0
      %v492 = vpop.f32.mrb[0].mxu0
      %v493 = vadd.f32 0.0, %v492
      %v494 = vpop.f32.mrb[0].mxu0
      %495 = vmatprep.mubr.bf16.mxu0 0
      %496 = vmatmul.mubr.bf16.gmra.mrb[0].mxu0 %v406
      %v497 = vpop.f32.mrb[0].mxu0
      %v498 = vadd.f32 0.0, %v497
      %v499 = vpop.f32.mrb[0].mxu0
      %v500 = vpop.f32.mrb[0].mxu0
      %v501 = vadd.f32 0.0, %v500
      %v502 = vpop.f32.mrb[0].mxu0
      %503 = vmatprep.mubr.bf16.mxu0 0
      %504 = vmatmul.mubr.bf16.gmra.mrb[0].mxu0 %v409
      %v505 = vpop.f32.mrb[0].mxu0
      %v506 = vadd.f32 0.0, %v505
      %v507 = vpop.f32.mrb[0].mxu0
      %v508 = vpop.f32.mrb[0].mxu0
      %v509 = vadd.f32 0.0, %v508
      %v510 = vpop.f32.mrb[0].mxu0
      %511 = vmatprep.mubr.bf16.mxu0 0
      %512 = vmatmul.mubr.bf16.gmra.mrb[0].mxu0 %v412
      %v513 = vpop.f32.mrb[0].mxu0
      %v514 = vadd.f32 0.0, %v513
      %v515 = vpop.f32.mrb[0].mxu0
      %v516 = vpop.f32.mrb[0].mxu0
      %v517 = vadd.f32 0.0, %v516
      %v518 = vpop.f32.mrb[0].mxu0
      %519 = vmatprep.mubr.bf16.mxu0 0
      %520 = vmatmul.mubr.bf16.gmra.mrb[0].mxu0 %v415
      %v521 = vpop.f32.mrb[0].mxu0
      %v522 = vadd.f32 0.0, %v521
      %v523 = vpop.f32.mrb[0].mxu0
      %v524 = vpop.f32.mrb[0].mxu0
      %v525 = vadd.f32 0.0, %v524
      %v526 = vpop.f32.mrb[0].mxu0
      %527 = vmatprep.mubr.bf16.mxu0 0
      %528 = vmatmul.mubr.bf16.gmra.mrb[0].mxu0 %v418
      %v529 = vpop.f32.mrb[0].mxu0
      %v530 = vadd.f32 0.0, %v529
      %v531 = vpop.f32.mrb[0].mxu0
      %v532 = vpop.f32.mrb[0].mxu0
      %v533 = vadd.f32 0.0, %v532
      %v534 = vpop.f32.mrb[0].mxu0
      %535 = vmatprep.mubr.bf16.mxu0 0
      %536 = vmatmul.mubr.bf16.gmra.mrb[0].mxu0 %v421
      %v537 = vpop.f32.mrb[0].mxu0
      %v538 = vadd.f32 0.0, %v537
      %v539 = vpop.f32.mrb[0].mxu0
      %v540 = vpop.f32.mrb[0].mxu0
      %v541 = vadd.f32 0.0, %v540
      %v542 = vpop.f32.mrb[0].mxu0
      %543 = vmatprep.mubr.bf16.mxu0 0
      %544 = vmatmul.mubr.bf16.gmra.mrb[0].mxu0 %v424
      %v545 = vpop.f32.mrb[0].mxu0
      %v546 = vadd.f32 0.0, %v545
      %v547 = vpop.f32.mrb[0].mxu0
      %v548 = vpop.f32.mrb[0].mxu0
      %v549 = vadd.f32 0.0, %v548
      %v550 = vpop.f32.mrb[0].mxu0
      %551 = vmatprep.mubr.bf16.mxu0 0
      %552 = vmatmul.mubr.bf16.gmra.mrb[0].mxu0 %v427
      %v553 = vpop.f32.mrb[0].mxu0
      %v554 = vadd.f32 0.0, %v553
      %v555 = vpop.f32.mrb[0].mxu0
      %v556 = vpop.f32.mrb[0].mxu0
      %v557 = vadd.f32 0.0, %v556
      %v558 = vpop.f32.mrb[0].mxu0
      %559 = vmatprep.mubr.bf16.mxu0 0
      %560 = vmatmul.mubr.bf16.gmra.mrb[0].mxu0 %v430
      %v561 = vpop.f32.mrb[0].mxu0
      %v562 = vadd.f32 0.0, %v561
      %v563 = vpop.f32.mrb[0].mxu0
      %v564 = vpop.f32.mrb[0].mxu0
      %v565 = vadd.f32 0.0, %v564
      %v566 = vpop.f32.mrb[0].mxu0
      %567 = vmatprep.mubr.bf16.mxu0 0
      %568 = vmatmul.mubr.bf16.gmra.mrb[0].mxu0 %v433
      %v569 = vpop.f32.mrb[0].mxu0
      %v570 = vadd.f32 0.0, %v569
      %v571 = vpop.f32.mrb[0].mxu0
      %v572 = vpop.f32.mrb[0].mxu0
      %v573 = vadd.f32 0.0, %v572
      %v574 = vpop.f32.mrb[0].mxu0
      %575 = vmatprep.mubr.bf16.mxu0 0
      %576 = vmatmul.mubr.bf16.gmra.mrb[0].mxu0 %v436
      %v577 = vpop.f32.mrb[0].mxu0
      %v578 = vadd.f32 0.0, %v577
      %v579 = vpop.f32.mrb[0].mxu0
      %v580 = vpop.f32.mrb[0].mxu0
      %v581 = vadd.f32 0.0, %v580
      %v582 = vpop.f32.mrb[0].mxu0
      %583 = vmatprep.mubr.bf16.mxu0 0
      %584 = vmatmul.mubr.bf16.gmra.mrb[0].mxu0 %v439
      %v585 = vpop.f32.mrb[0].mxu0
      %v586 = vadd.f32 0.0, %v585
      %v587 = vpop.f32.mrb[0].mxu0
      %v588 = vpop.f32.mrb[0].mxu0
      %v589 = vadd.f32 0.0, %v588
      %v590 = vpop.f32.mrb[0].mxu0
      %591 = vmatprep.mubr.bf16.mxu0 0
      %592 = vmatmul.mubr.bf16.gmra.mrb[0].mxu0 %v442
      %v593 = vpop.f32.mrb[0].mxu0
      %v594 = vadd.f32 0.0, %v593
      %v595 = vpop.f32.mrb[0].mxu0
      %v596 = vpop.f32.mrb[0].mxu0
      %v597 = vadd.f32 0.0, %v596
      %v598 = vpop.f32.mrb[0].mxu0
      %599 = vmatprep.mubr.bf16.mxu0 0
      %600 = vmatmul.mubr.bf16.gmra.mrb[0].mxu0 %v445
      %v601 = vpop.f32.mrb[0].mxu0
      %v602 = vadd.f32 0.0, %v601
      %v603 = vpop.f32.mrb[0].mxu0
      %v604 = vpop.f32.mrb[0].mxu0
      %v605 = vadd.f32 0.0, %v604
      %v606 = vpop.f32.mrb[0].mxu0
      %607 = vdwg.mxu0
      %vm608 = vcmask 130048
      %609 = vst.msk [vmem:[#allocation2] sm:$0xff] %vm608, %v482
      %610 = vst.msk [vmem:[#allocation2 + $0x8] sm:$0xff] %vm608, %v485
      %611 = vst.msk [vmem:[#allocation2 + $0x10] sm:$0xff] %vm608, %v490
      %612 = vst.msk [vmem:[#allocation2 + $0x18] sm:$0xff] %vm608, %v493
      %613 = vst.msk [vmem:[#allocation2 + $0x20] sm:$0xff] %vm608, %v498
      %614 = vst.msk [vmem:[#allocation2 + $0x28] sm:$0xff] %vm608, %v501
      %615 = vst.msk [vmem:[#allocation2 + $0x30] sm:$0xff] %vm608, %v506
      %616 = vst.msk [vmem:[#allocation2 + $0x38] sm:$0xff] %vm608, %v509
      %617 = vst.msk [vmem:[#allocation2 + $0x40] sm:$0xff] %vm608, %v514
      %618 = vst.msk [vmem:[#allocation2 + $0x48] sm:$0xff] %vm608, %v517
      %619 = vst.msk [vmem:[#allocation2 + $0x50] sm:$0xff] %vm608, %v522
      %620 = vst.msk [vmem:[#allocation2 + $0x58] sm:$0xff] %vm608, %v525
      %621 = vst.msk [vmem:[#allocation2 + $0x60] sm:$0xff] %vm608, %v530
      %622 = vst.msk [vmem:[#allocation2 + $0x68] sm:$0xff] %vm608, %v533
      %623 = vst.msk [vmem:[#allocation2 + $0x70] sm:$0xff] %vm608, %v538
      %624 = vst.msk [vmem:[#allocation2 + $0x78] sm:$0xff] %vm608, %v541
      %625 = vst.msk [vmem:[#allocation2 + $0x80] sm:$0xff] %vm608, %v546
      %626 = vst.msk [vmem:[#allocation2 + $0x88] sm:$0xff] %vm608, %v549
      %627 = vst.msk [vmem:[#allocation2 + $0x90] sm:$0xff] %vm608, %v554
      %628 = vst.msk [vmem:[#allocation2 + $0x98] sm:$0xff] %vm608, %v557
      %629 = vst.msk [vmem:[#allocation2 + $0xa0] sm:$0xff] %vm608, %v562
      %630 = vst.msk [vmem:[#allocation2 + $0xa8] sm:$0xff] %vm608, %v565
      %631 = vst.msk [vmem:[#allocation2 + $0xb0] sm:$0xff] %vm608, %v570
      %632 = vst.msk [vmem:[#allocation2 + $0xb8] sm:$0xff] %vm608, %v573
      %633 = vst.msk [vmem:[#allocation2 + $0xc0] sm:$0xff] %vm608, %v578
      %634 = vst.msk [vmem:[#allocation2 + $0xc8] sm:$0xff] %vm608, %v581
      %635 = vst.msk [vmem:[#allocation2 + $0xd0] sm:$0xff] %vm608, %v586
      %636 = vst.msk [vmem:[#allocation2 + $0xd8] sm:$0xff] %vm608, %v589
      %637 = vst.msk [vmem:[#allocation2 + $0xe0] sm:$0xff] %vm608, %v594
      %638 = vst.msk [vmem:[#allocation2 + $0xe8] sm:$0xff] %vm608, %v597
      %639 = vst.msk [vmem:[#allocation2 + $0xf0] sm:$0xff] %vm608, %v602
      %640 = vst.msk [vmem:[#allocation2 + $0xf8] sm:$0xff] %vm608, %v605
      %vm641 = vsmask.f32 3328
      %vm642 = vsmask.f32 7440
      %vm643 = vmor %vm641, %vm642
      %v645 = vshrl.u32 %v248, 16
      %v647 = vrot.slane %v645, 4
      %v648 = vshll.u32 %v248, 16
      %v650 = vrot.slane %v648, 5
      %v651 = vor.u32 %v647, %v650
      %v652 = vrot.slane %v651, 4
      %v654 = vshll.u32 %v249, 16
      %v656 = vrot.slane %v654, 5
      %v657 = vsel %vm643, %v652, %v656
      %v658 = vshrl.u32 %v249, 16
      %v660 = vrot.slane %v658, 4
      %v661 = vor.u32 %v660, %v656
      %v662 = vrot.slane %v661, 4
      %v664 = vshll.u32 %v250, 16
      %v666 = vrot.slane %v664, 5
      %v667 = vsel %vm643, %v662, %v666
      %v669 = vshrl.u32 %v251, 16
      %v671 = vrot.slane %v669, 4
      %v672 = vshll.u32 %v251, 16
      %v674 = vrot.slane %v672, 5
      %v675 = vor.u32 %v671, %v674
      %v676 = vrot.slane %v675, 4
      %v678 = vshll.u32 %v252, 16
      %v680 = vrot.slane %v678, 5
      %v681 = vsel %vm643, %v676, %v680
      %v682 = vshrl.u32 %v252, 16
      %v684 = vrot.slane %v682, 4
      %v685 = vor.u32 %v684, %v680
      %v686 = vrot.slane %v685, 4
      %v688 = vshll.u32 %v253, 16
      %v690 = vrot.slane %v688, 5
      %v691 = vsel %vm643, %v686, %v690
      %v693 = vshrl.u32 %v254, 16
      %v695 = vrot.slane %v693, 4
      %v696 = vshll.u32 %v254, 16
      %v698 = vrot.slane %v696, 5
      %v699 = vor.u32 %v695, %v698
      %v700 = vrot.slane %v699, 4
      %v702 = vshll.u32 %v255, 16
      %v704 = vrot.slane %v702, 5
      %v705 = vsel %vm643, %v700, %v704
      %v706 = vshrl.u32 %v255, 16
      %v708 = vrot.slane %v706, 4
      %v709 = vor.u32 %v708, %v704
      %v710 = vrot.slane %v709, 4
      %v712 = vshll.u32 %v256, 16
      %v714 = vrot.slane %v712, 5
      %v715 = vsel %vm643, %v710, %v714
      %v717 = vshrl.u32 %v257, 16
      %v719 = vrot.slane %v717, 4
      %v720 = vshll.u32 %v257, 16
      %v722 = vrot.slane %v720, 5
      %v723 = vor.u32 %v719, %v722
      %v724 = vrot.slane %v723, 4
      %v726 = vshll.u32 %v258, 16
      %v728 = vrot.slane %v726, 5
      %v729 = vsel %vm643, %v724, %v728
      %v730 = vshrl.u32 %v258, 16
      %v732 = vrot.slane %v730, 4
      %v733 = vor.u32 %v732, %v728
      %v734 = vrot.slane %v733, 4
      %v736 = vshll.u32 %v259, 16
      %v738 = vrot.slane %v736, 5
      %v739 = vsel %vm643, %v734, %v738
      %v741 = vshrl.u32 %v260, 16
      %v743 = vrot.slane %v741, 4
      %v744 = vshll.u32 %v260, 16
      %v746 = vrot.slane %v744, 5
      %v747 = vor.u32 %v743, %v746
      %v748 = vrot.slane %v747, 4
      %v750 = vshll.u32 %v261, 16
      %v752 = vrot.slane %v750, 5
      %v753 = vsel %vm643, %v748, %v752
      %v754 = vshrl.u32 %v261, 16
      %v756 = vrot.slane %v754, 4
      %v757 = vor.u32 %v756, %v752
      %v758 = vrot.slane %v757, 4
      %v760 = vshll.u32 %v262, 16
      %v762 = vrot.slane %v760, 5
      %v763 = vsel %vm643, %v758, %v762
      %v765 = vshrl.u32 %v263, 16
      %v767 = vrot.slane %v765, 4
      %v768 = vshll.u32 %v263, 16
      %v770 = vrot.slane %v768, 5
      %v771 = vor.u32 %v767, %v770
      %v772 = vrot.slane %v771, 4
      %v774 = vshll.u32 %v264, 16
      %v776 = vrot.slane %v774, 5
      %v777 = vsel %vm643, %v772, %v776
      %v778 = vshrl.u32 %v264, 16
      %v780 = vrot.slane %v778, 4
      %v781 = vor.u32 %v780, %v776
      %v782 = vrot.slane %v781, 4
      %v784 = vshll.u32 %v265, 16
      %v786 = vrot.slane %v784, 5
      %v787 = vsel %vm643, %v782, %v786
      %v789 = vshrl.u32 %v266, 16
      %v791 = vrot.slane %v789, 4
      %v792 = vshll.u32 %v266, 16
      %v794 = vrot.slane %v792, 5
      %v795 = vor.u32 %v791, %v794
      %v796 = vrot.slane %v795, 4
      %v798 = vshll.u32 %v267, 16
      %v800 = vrot.slane %v798, 5
      %v801 = vsel %vm643, %v796, %v800
      %v802 = vshrl.u32 %v267, 16
      %v804 = vrot.slane %v802, 4
      %v805 = vor.u32 %v804, %v800
      %v806 = vrot.slane %v805, 4
      %v808 = vshll.u32 %v268, 16
      %v810 = vrot.slane %v808, 5
      %v811 = vsel %vm643, %v806, %v810
      %v813 = vshrl.u32 %v269, 16
      %v815 = vrot.slane %v813, 4
      %v816 = vshll.u32 %v269, 16
      %v818 = vrot.slane %v816, 5
      %v819 = vor.u32 %v815, %v818
      %v820 = vrot.slane %v819, 4
      %v822 = vshll.u32 %v270, 16
      %v824 = vrot.slane %v822, 5
      %v825 = vsel %vm643, %v820, %v824
      %v826 = vshrl.u32 %v270, 16
      %v828 = vrot.slane %v826, 4
      %v829 = vor.u32 %v828, %v824
      %v830 = vrot.slane %v829, 4
      %v832 = vshll.u32 %v271, 16
      %v834 = vrot.slane %v832, 5
      %v835 = vsel %vm643, %v830, %v834
      %v837 = vshrl.u32 %v272, 16
      %v839 = vrot.slane %v837, 4
      %v840 = vshll.u32 %v272, 16
      %v842 = vrot.slane %v840, 5
      %v843 = vor.u32 %v839, %v842
      %v844 = vrot.slane %v843, 4
      %v846 = vshll.u32 %v273, 16
      %v848 = vrot.slane %v846, 5
      %v849 = vsel %vm643, %v844, %v848
      %v850 = vshrl.u32 %v273, 16
      %v852 = vrot.slane %v850, 4
      %v853 = vor.u32 %v852, %v848
      %v854 = vrot.slane %v853, 4
      %v856 = vshll.u32 %v274, 16
      %v858 = vrot.slane %v856, 5
      %v859 = vsel %vm643, %v854, %v858
      %v861 = vshrl.u32 %v275, 16
      %v863 = vrot.slane %v861, 4
      %v864 = vshll.u32 %v275, 16
      %v866 = vrot.slane %v864, 5
      %v867 = vor.u32 %v863, %v866
      %v868 = vrot.slane %v867, 4
      %v870 = vshll.u32 %v276, 16
      %v872 = vrot.slane %v870, 5
      %v873 = vsel %vm643, %v868, %v872
      %v874 = vshrl.u32 %v276, 16
      %v876 = vrot.slane %v874, 4
      %v877 = vor.u32 %v876, %v872
      %v878 = vrot.slane %v877, 4
      %v880 = vshll.u32 %v277, 16
      %v882 = vrot.slane %v880, 5
      %v883 = vsel %vm643, %v878, %v882
      %v885 = vshrl.u32 %v278, 16
      %v887 = vrot.slane %v885, 4
      %v888 = vshll.u32 %v278, 16
      %v890 = vrot.slane %v888, 5
      %v891 = vor.u32 %v887, %v890
      %v892 = vrot.slane %v891, 4
      %v894 = vshll.u32 %v279, 16
      %v896 = vrot.slane %v894, 5
      %v897 = vsel %vm643, %v892, %v896
      %v898 = vshrl.u32 %v279, 16
      %v900 = vrot.slane %v898, 4
      %v901 = vor.u32 %v900, %v896
      %v902 = vrot.slane %v901, 4
      %v904 = vshll.u32 %v280, 16
      %v906 = vrot.slane %v904, 5
      %v907 = vsel %vm643, %v902, %v906
      %v909 = vshrl.u32 %v281, 16
      %v911 = vrot.slane %v909, 4
      %v912 = vshll.u32 %v281, 16
      %v914 = vrot.slane %v912, 5
      %v915 = vor.u32 %v911, %v914
      %v916 = vrot.slane %v915, 4
      %v918 = vshll.u32 %v282, 16
      %v920 = vrot.slane %v918, 5
      %v921 = vsel %vm643, %v916, %v920
      %v922 = vshrl.u32 %v282, 16
      %v924 = vrot.slane %v922, 4
      %v925 = vor.u32 %v924, %v920
      %v926 = vrot.slane %v925, 4
      %v928 = vshll.u32 %v283, 16
      %v930 = vrot.slane %v928, 5
      %v931 = vsel %vm643, %v926, %v930
      %v933 = vshrl.u32 %v284, 16
      %v935 = vrot.slane %v933, 4
      %v936 = vshll.u32 %v284, 16
      %v938 = vrot.slane %v936, 5
      %v939 = vor.u32 %v935, %v938
      %v940 = vrot.slane %v939, 4
      %v942 = vshll.u32 %v285, 16
      %v944 = vrot.slane %v942, 5
      %v945 = vsel %vm643, %v940, %v944
      %v946 = vshrl.u32 %v285, 16
      %v948 = vrot.slane %v946, 4
      %v949 = vor.u32 %v948, %v944
      %v950 = vrot.slane %v949, 4
      %v952 = vshll.u32 %v286, 16
      %v954 = vrot.slane %v952, 5
      %v955 = vsel %vm643, %v950, %v954
      %v957 = vshrl.u32 %v287, 16
      %v959 = vrot.slane %v957, 4
      %v960 = vshll.u32 %v287, 16
      %v962 = vrot.slane %v960, 5
      %v963 = vor.u32 %v959, %v962
      %v964 = vrot.slane %v963, 4
      %v966 = vshll.u32 %v288, 16
      %v968 = vrot.slane %v966, 5
      %v969 = vsel %vm643, %v964, %v968
      %v970 = vshrl.u32 %v288, 16
      %v972 = vrot.slane %v970, 4
      %v973 = vor.u32 %v972, %v968
      %v974 = vrot.slane %v973, 4
      %v976 = vshll.u32 %v289, 16
      %v978 = vrot.slane %v976, 5
      %v979 = vsel %vm643, %v974, %v978
      %v981 = vshrl.u32 %v290, 16
      %v983 = vrot.slane %v981, 4
      %v984 = vshll.u32 %v290, 16
      %v986 = vrot.slane %v984, 5
      %v987 = vor.u32 %v983, %v986
      %v988 = vrot.slane %v987, 4
      %v990 = vshll.u32 %v291, 16
      %v992 = vrot.slane %v990, 5
      %v993 = vsel %vm643, %v988, %v992
      %v994 = vshrl.u32 %v291, 16
      %v996 = vrot.slane %v994, 4
      %v997 = vor.u32 %v996, %v992
      %v998 = vrot.slane %v997, 4
      %v1000 = vshll.u32 %v292, 16
      %v1002 = vrot.slane %v1000, 5
      %v1003 = vsel %vm643, %v998, %v1002
      %v1005 = vshrl.u32 %v293, 16
      %v1007 = vrot.slane %v1005, 4
      %v1008 = vshll.u32 %v293, 16
      %v1010 = vrot.slane %v1008, 5
      %v1011 = vor.u32 %v1007, %v1010
      %v1012 = vrot.slane %v1011, 4
      %v1014 = vshll.u32 %v294, 16
      %v1016 = vrot.slane %v1014, 5
      %v1017 = vsel %vm643, %v1012, %v1016
      %v1018 = vshrl.u32 %v294, 16
      %v1020 = vrot.slane %v1018, 4
      %v1021 = vor.u32 %v1020, %v1016
      %v1022 = vrot.slane %v1021, 4
      %v1024 = vshll.u32 %v295, 16
      %v1026 = vrot.slane %v1024, 5
      %v1027 = vsel %vm643, %v1022, %v1026
      %s1028 = scalar_lea.vmem %s1, 16
      %v1029 = vld [vmem:[%s1028] sm:$0xf]
      %v1030 = vld [vmem:[%s1028 + $0x4] sm:$0xf]
      %v1031 = vld [vmem:[%s1028 + $0x8] sm:$0xf]
      %v1032 = vld [vmem:[%s1028 + $0xc] sm:$0xf]
      %v1033 = vunpack.c.l.b16 %v657
      %v1034 = vunpack.c.l.b16 %v667
      %v1035 = vunpack.c.l.b16 %v681
      %v1036 = vunpack.c.l.b16 %v691
      %v1037 = vunpack.c.l.b16 %v705
      %v1038 = vunpack.c.l.b16 %v715
      %v1039 = vunpack.c.l.b16 %v729
      %v1040 = vunpack.c.l.b16 %v739
      %v1041 = vunpack.c.l.b16 %v753
      %v1042 = vunpack.c.l.b16 %v763
      %v1043 = vunpack.c.l.b16 %v777
      %v1044 = vunpack.c.l.b16 %v787
      %v1045 = vunpack.c.l.b16 %v801
      %v1046 = vunpack.c.l.b16 %v811
      %v1047 = vunpack.c.l.b16 %v825
      %v1048 = vunpack.c.l.b16 %v835
      %v1049 = vunpack.c.l.b16 %v849
      %v1050 = vunpack.c.l.b16 %v859
      %v1051 = vunpack.c.l.b16 %v873
      %v1052 = vunpack.c.l.b16 %v883
      %v1053 = vunpack.c.l.b16 %v897
      %v1054 = vunpack.c.l.b16 %v907
      %v1055 = vunpack.c.l.b16 %v921
      %v1056 = vunpack.c.l.b16 %v931
      %v1057 = vunpack.c.l.b16 %v945
      %v1058 = vunpack.c.l.b16 %v955
      %v1059 = vunpack.c.l.b16 %v969
      %v1060 = vunpack.c.l.b16 %v979
      %v1061 = vunpack.c.l.b16 %v993
      %v1062 = vunpack.c.l.b16 %v1003
      %v1063 = vunpack.c.l.b16 %v1017
      %v1064 = vunpack.c.l.b16 %v1027
      %v1065 = vpack.c.b16 %v1034, %v1033
      %v1066 = vpack.c.b16 %v1036, %v1035
      %v1067 = vpack.c.b16 %v1038, %v1037
      %v1068 = vpack.c.b16 %v1040, %v1039
      %v1069 = vpack.c.b16 %v1042, %v1041
      %v1070 = vpack.c.b16 %v1044, %v1043
      %v1071 = vpack.c.b16 %v1046, %v1045
      %v1072 = vpack.c.b16 %v1048, %v1047
      %v1073 = vpack.c.b16 %v1050, %v1049
      %v1074 = vpack.c.b16 %v1052, %v1051
      %v1075 = vpack.c.b16 %v1054, %v1053
      %v1076 = vpack.c.b16 %v1056, %v1055
      %v1077 = vpack.c.b16 %v1058, %v1057
      %v1078 = vpack.c.b16 %v1060, %v1059
      %v1079 = vpack.c.b16 %v1062, %v1061
      %v1080 = vpack.c.b16 %v1064, %v1063
      %v1085 = vunpack.c.l.b16 %v1029
      %v1086 = vunpack.c.l.b16 %v1030
      %v1087 = vunpack.c.l.b16 %v1031
      %v1088 = vunpack.c.l.b16 %v1032
      %v1089 = vpack.c.b16 %v1086, %v1085
      %v1090 = vpack.c.b16 %v1088, %v1087
      %v1094 = vsel %vm398, %v1065, 0
      %v1097 = vsel %vm398, %v1066, 0
      %v1100 = vsel %vm398, %v1067, 0
      %v1103 = vsel %vm398, %v1068, 0
      %v1106 = vsel %vm398, %v1069, 0
      %v1109 = vsel %vm398, %v1070, 0
      %v1112 = vsel %vm398, %v1071, 0
      %v1115 = vsel %vm398, %v1072, 0
      %v1118 = vsel %vm398, %v1073, 0
      %v1121 = vsel %vm398, %v1074, 0
      %v1124 = vsel %vm398, %v1075, 0
      %v1127 = vsel %vm398, %v1076, 0
      %v1130 = vsel %vm398, %v1077, 0
      %v1133 = vsel %vm398, %v1078, 0
      %v1136 = vsel %vm398, %v1079, 0
      %v1139 = vsel %vm398, %v1080, 0
      %1141 = vmatprep.subr.bf16.mxu0 0
      %1142 = vmatpush1.bf16.msra.mxu0 %v1089
      %1143 = vmatprep.subr.bf16.mxu0 0
      %1144 = vmatpush1.bf16.msra.mxu0 %v1090
      %1145 = vmatprep.subr.bf16.mxu0 0
      %1146 = vmatpush1.bf16.msra.mxu0 0
      %1147 = vmatprep.subr.bf16.mxu0 0
      %1148 = vmatpush1.bf16.msra.mxu0 0
      %1149 = vmatprep.subr.bf16.mxu0 0
      %1150 = vmatpush1.bf16.msra.mxu0 0
      %1151 = vmatprep.subr.bf16.mxu0 0
      %1152 = vmatpush1.bf16.msra.mxu0 0
      %1153 = vmatprep.subr.bf16.mxu0 0
      %1154 = vmatpush1.bf16.msra.mxu0 0
      %1155 = vmatprep.subr.bf16.mxu0 0
      %1156 = vmatpush1.bf16.msra.mxu0 0
      %1157 = vmatprep.subr.bf16.mxu0 0
      %1158 = vmatpush1.bf16.msra.mxu0 0
      %1159 = vmatprep.subr.bf16.mxu0 0
      %1160 = vmatpush1.bf16.msra.mxu0 0
      %1161 = vmatprep.subr.bf16.mxu0 0
      %1162 = vmatpush1.bf16.msra.mxu0 0
      %1163 = vmatprep.subr.bf16.mxu0 0
      %1164 = vmatpush1.bf16.msra.mxu0 0
      %1165 = vmatprep.subr.bf16.mxu0 0
      %1166 = vmatpush1.bf16.msra.mxu0 0
      %1167 = vmatprep.subr.bf16.mxu0 0
      %1168 = vmatpush1.bf16.msra.mxu0 0
      %1169 = vmatprep.subr.bf16.mxu0 0
      %1170 = vmatpush1.bf16.msra.mxu0 0
      %1171 = vmatprep.subr.bf16.mxu0 0
      %1172 = vmatpush1.bf16.msra.mxu0 0
      %1173 = vmatprep.mubr.bf16.mxu0 0
      %1174 = vmatmul.mubr.bf16.gmra.mrb[0].mxu0 %v1094
      %v1175 = vpop.f32.mrb[0].mxu0
      %v1176 = vadd.f32 0.0, %v1175
      %v1177 = vpop.f32.mrb[0].mxu0
      %v1178 = vpop.f32.mrb[0].mxu0
      %v1179 = vadd.f32 0.0, %v1178
      %v1180 = vpop.f32.mrb[0].mxu0
      %1181 = vmatprep.mubr.bf16.mxu0 0
      %1182 = vmatmul.mubr.bf16.gmra.mrb[0].mxu0 %v1097
      %v1183 = vpop.f32.mrb[0].mxu0
      %v1184 = vadd.f32 0.0, %v1183
      %v1185 = vpop.f32.mrb[0].mxu0
      %v1186 = vpop.f32.mrb[0].mxu0
      %v1187 = vadd.f32 0.0, %v1186
      %v1188 = vpop.f32.mrb[0].mxu0
      %1189 = vmatprep.mubr.bf16.mxu0 0
      %1190 = vmatmul.mubr.bf16.gmra.mrb[0].mxu0 %v1100
      %v1191 = vpop.f32.mrb[0].mxu0
      %v1192 = vadd.f32 0.0, %v1191
      %v1193 = vpop.f32.mrb[0].mxu0
      %v1194 = vpop.f32.mrb[0].mxu0
      %v1195 = vadd.f32 0.0, %v1194
      %v1196 = vpop.f32.mrb[0].mxu0
      %1197 = vmatprep.mubr.bf16.mxu0 0
      %1198 = vmatmul.mubr.bf16.gmra.mrb[0].mxu0 %v1103
      %v1199 = vpop.f32.mrb[0].mxu0
      %v1200 = vadd.f32 0.0, %v1199
      %v1201 = vpop.f32.mrb[0].mxu0
      %v1202 = vpop.f32.mrb[0].mxu0
      %v1203 = vadd.f32 0.0, %v1202
      %v1204 = vpop.f32.mrb[0].mxu0
      %1205 = vmatprep.mubr.bf16.mxu0 0
      %1206 = vmatmul.mubr.bf16.gmra.mrb[0].mxu0 %v1106
      %v1207 = vpop.f32.mrb[0].mxu0
      %v1208 = vadd.f32 0.0, %v1207
      %v1209 = vpop.f32.mrb[0].mxu0
      %v1210 = vpop.f32.mrb[0].mxu0
      %v1211 = vadd.f32 0.0, %v1210
      %v1212 = vpop.f32.mrb[0].mxu0
      %1213 = vmatprep.mubr.bf16.mxu0 0
      %1214 = vmatmul.mubr.bf16.gmra.mrb[0].mxu0 %v1109
      %v1215 = vpop.f32.mrb[0].mxu0
      %v1216 = vadd.f32 0.0, %v1215
      %v1217 = vpop.f32.mrb[0].mxu0
      %v1218 = vpop.f32.mrb[0].mxu0
      %v1219 = vadd.f32 0.0, %v1218
      %v1220 = vpop.f32.mrb[0].mxu0
      %1221 = vmatprep.mubr.bf16.mxu0 0
      %1222 = vmatmul.mubr.bf16.gmra.mrb[0].mxu0 %v1112
      %v1223 = vpop.f32.mrb[0].mxu0
      %v1224 = vadd.f32 0.0, %v1223
      %v1225 = vpop.f32.mrb[0].mxu0
      %v1226 = vpop.f32.mrb[0].mxu0
      %v1227 = vadd.f32 0.0, %v1226
      %v1228 = vpop.f32.mrb[0].mxu0
      %1229 = vmatprep.mubr.bf16.mxu0 0
      %1230 = vmatmul.mubr.bf16.gmra.mrb[0].mxu0 %v1115
      %v1231 = vpop.f32.mrb[0].mxu0
      %v1232 = vadd.f32 0.0, %v1231
      %v1233 = vpop.f32.mrb[0].mxu0
      %v1234 = vpop.f32.mrb[0].mxu0
      %v1235 = vadd.f32 0.0, %v1234
      %v1236 = vpop.f32.mrb[0].mxu0
      %1237 = vmatprep.mubr.bf16.mxu0 0
      %1238 = vmatmul.mubr.bf16.gmra.mrb[0].mxu0 %v1118
      %v1239 = vpop.f32.mrb[0].mxu0
      %v1240 = vadd.f32 0.0, %v1239
      %v1241 = vpop.f32.mrb[0].mxu0
      %v1242 = vpop.f32.mrb[0].mxu0
      %v1243 = vadd.f32 0.0, %v1242
      %v1244 = vpop.f32.mrb[0].mxu0
      %1245 = vmatprep.mubr.bf16.mxu0 0
      %1246 = vmatmul.mubr.bf16.gmra.mrb[0].mxu0 %v1121
      %v1247 = vpop.f32.mrb[0].mxu0
      %v1248 = vadd.f32 0.0, %v1247
      %v1249 = vpop.f32.mrb[0].mxu0
      %v1250 = vpop.f32.mrb[0].mxu0
      %v1251 = vadd.f32 0.0, %v1250
      %v1252 = vpop.f32.mrb[0].mxu0
      %1253 = vmatprep.mubr.bf16.mxu0 0
      %1254 = vmatmul.mubr.bf16.gmra.mrb[0].mxu0 %v1124
      %v1255 = vpop.f32.mrb[0].mxu0
      %v1256 = vadd.f32 0.0, %v1255
      %v1257 = vpop.f32.mrb[0].mxu0
      %v1258 = vpop.f32.mrb[0].mxu0
      %v1259 = vadd.f32 0.0, %v1258
      %v1260 = vpop.f32.mrb[0].mxu0
      %1261 = vmatprep.mubr.bf16.mxu0 0
      %1262 = vmatmul.mubr.bf16.gmra.mrb[0].mxu0 %v1127
      %v1263 = vpop.f32.mrb[0].mxu0
      %v1264 = vadd.f32 0.0, %v1263
      %v1265 = vpop.f32.mrb[0].mxu0
      %v1266 = vpop.f32.mrb[0].mxu0
      %v1267 = vadd.f32 0.0, %v1266
      %v1268 = vpop.f32.mrb[0].mxu0
      %1269 = vmatprep.mubr.bf16.mxu0 0
      %1270 = vmatmul.mubr.bf16.gmra.mrb[0].mxu0 %v1130
      %v1271 = vpop.f32.mrb[0].mxu0
      %v1272 = vadd.f32 0.0, %v1271
      %v1273 = vpop.f32.mrb[0].mxu0
      %v1274 = vpop.f32.mrb[0].mxu0
      %v1275 = vadd.f32 0.0, %v1274
      %v1276 = vpop.f32.mrb[0].mxu0
      %1277 = vmatprep.mubr.bf16.mxu0 0
      %1278 = vmatmul.mubr.bf16.gmra.mrb[0].mxu0 %v1133
      %v1279 = vpop.f32.mrb[0].mxu0
      %v1280 = vadd.f32 0.0, %v1279
      %v1281 = vpop.f32.mrb[0].mxu0
      %v1282 = vpop.f32.mrb[0].mxu0
      %v1283 = vadd.f32 0.0, %v1282
      %v1284 = vpop.f32.mrb[0].mxu0
      %1285 = vmatprep.mubr.bf16.mxu0 0
      %1286 = vmatmul.mubr.bf16.gmra.mrb[0].mxu0 %v1136
      %v1287 = vpop.f32.mrb[0].mxu0
      %v1288 = vadd.f32 0.0, %v1287
      %v1289 = vpop.f32.mrb[0].mxu0
      %v1290 = vpop.f32.mrb[0].mxu0
      %v1291 = vadd.f32 0.0, %v1290
      %v1292 = vpop.f32.mrb[0].mxu0
      %1293 = vmatprep.mubr.bf16.mxu0 0
      %1294 = vmatmul.mubr.bf16.gmra.mrb[0].mxu0 %v1139
      %v1295 = vpop.f32.mrb[0].mxu0
      %v1296 = vadd.f32 0.0, %v1295
      %v1297 = vpop.f32.mrb[0].mxu0
      %v1298 = vpop.f32.mrb[0].mxu0
      %v1299 = vadd.f32 0.0, %v1298
      %v1300 = vpop.f32.mrb[0].mxu0
      %1301 = vdwg.mxu0
      %v1302 = vld [vmem:[#allocation2] sm:$0xff]
      %v1303 = vld [vmem:[#allocation2 + $0x8] sm:$0xff]
      %v1304 = vld [vmem:[#allocation2 + $0x10] sm:$0xff]
      %v1305 = vld [vmem:[#allocation2 + $0x18] sm:$0xff]
      %v1306 = vld [vmem:[#allocation2 + $0x20] sm:$0xff]
      %v1307 = vld [vmem:[#allocation2 + $0x28] sm:$0xff]
      %v1308 = vld [vmem:[#allocation2 + $0x30] sm:$0xff]
      %v1309 = vld [vmem:[#allocation2 + $0x38] sm:$0xff]
      %v1310 = vld [vmem:[#allocation2 + $0x40] sm:$0xff]
      %v1311 = vld [vmem:[#allocation2 + $0x48] sm:$0xff]
      %v1312 = vld [vmem:[#allocation2 + $0x50] sm:$0xff]
      %v1313 = vld [vmem:[#allocation2 + $0x58] sm:$0xff]
      %v1314 = vld [vmem:[#allocation2 + $0x60] sm:$0xff]
      %v1315 = vld [vmem:[#allocation2 + $0x68] sm:$0xff]
      %v1316 = vld [vmem:[#allocation2 + $0x70] sm:$0xff]
      %v1317 = vld [vmem:[#allocation2 + $0x78] sm:$0xff]
      %v1318 = vld [vmem:[#allocation2 + $0x80] sm:$0xff]
      %v1319 = vld [vmem:[#allocation2 + $0x88] sm:$0xff]
      %v1320 = vld [vmem:[#allocation2 + $0x90] sm:$0xff]
      %v1321 = vld [vmem:[#allocation2 + $0x98] sm:$0xff]
      %v1322 = vld [vmem:[#allocation2 + $0xa0] sm:$0xff]
      %v1323 = vld [vmem:[#allocation2 + $0xa8] sm:$0xff]
      %v1324 = vld [vmem:[#allocation2 + $0xb0] sm:$0xff]
      %v1325 = vld [vmem:[#allocation2 + $0xb8] sm:$0xff]
      %v1326 = vld [vmem:[#allocation2 + $0xc0] sm:$0xff]
      %v1327 = vld [vmem:[#allocation2 + $0xc8] sm:$0xff]
      %v1328 = vld [vmem:[#allocation2 + $0xd0] sm:$0xff]
      %v1329 = vld [vmem:[#allocation2 + $0xd8] sm:$0xff]
      %v1330 = vld [vmem:[#allocation2 + $0xe0] sm:$0xff]
      %v1331 = vld [vmem:[#allocation2 + $0xe8] sm:$0xff]
      %v1332 = vld [vmem:[#allocation2 + $0xf0] sm:$0xff]
      %v1333 = vld [vmem:[#allocation2 + $0xf8] sm:$0xff]
      %v1334 = vadd.f32 %v1302, %v1176
      %v1335 = vadd.f32 %v1303, %v1179
      %v1336 = vadd.f32 %v1304, %v1184
      %v1337 = vadd.f32 %v1305, %v1187
      %v1338 = vadd.f32 %v1306, %v1192
      %v1339 = vadd.f32 %v1307, %v1195
      %v1340 = vadd.f32 %v1308, %v1200
      %v1341 = vadd.f32 %v1309, %v1203
      %v1342 = vadd.f32 %v1310, %v1208
      %v1343 = vadd.f32 %v1311, %v1211
      %v1344 = vadd.f32 %v1312, %v1216
      %v1345 = vadd.f32 %v1313, %v1219
      %v1346 = vadd.f32 %v1314, %v1224
      %v1347 = vadd.f32 %v1315, %v1227
      %v1348 = vadd.f32 %v1316, %v1232
      %v1349 = vadd.f32 %v1317, %v1235
      %v1350 = vadd.f32 %v1318, %v1240
      %v1351 = vadd.f32 %v1319, %v1243
      %v1352 = vadd.f32 %v1320, %v1248
      %v1353 = vadd.f32 %v1321, %v1251
      %v1354 = vadd.f32 %v1322, %v1256
      %v1355 = vadd.f32 %v1323, %v1259
      %v1356 = vadd.f32 %v1324, %v1264
      %v1357 = vadd.f32 %v1325, %v1267
      %v1358 = vadd.f32 %v1326, %v1272
      %v1359 = vadd.f32 %v1327, %v1275
      %v1360 = vadd.f32 %v1328, %v1280
      %v1361 = vadd.f32 %v1329, %v1283
      %v1362 = vadd.f32 %v1330, %v1288
      %v1363 = vadd.f32 %v1331, %v1291
      %v1364 = vadd.f32 %v1332, %v1296
      %v1365 = vadd.f32 %v1333, %v1299
      %1366 = vst.msk [vmem:[#allocation2] sm:$0xff] %vm608, %v1334
      %1367 = vst.msk [vmem:[#allocation2 + $0x8] sm:$0xff] %vm608, %v1335
      %1368 = vst.msk [vmem:[#allocation2 + $0x10] sm:$0xff] %vm608, %v1336
      %1369 = vst.msk [vmem:[#allocation2 + $0x18] sm:$0xff] %vm608, %v1337
      %1370 = vst.msk [vmem:[#allocation2 + $0x20] sm:$0xff] %vm608, %v1338
      %1371 = vst.msk [vmem:[#allocation2 + $0x28] sm:$0xff] %vm608, %v1339
      %1372 = vst.msk [vmem:[#allocation2 + $0x30] sm:$0xff] %vm608, %v1340
      %1373 = vst.msk [vmem:[#allocation2 + $0x38] sm:$0xff] %vm608, %v1341
      %1374 = vst.msk [vmem:[#allocation2 + $0x40] sm:$0xff] %vm608, %v1342
      %1375 = vst.msk [vmem:[#allocation2 + $0x48] sm:$0xff] %vm608, %v1343
      %1376 = vst.msk [vmem:[#allocation2 + $0x50] sm:$0xff] %vm608, %v1344
      %1377 = vst.msk [vmem:[#allocation2 + $0x58] sm:$0xff] %vm608, %v1345
      %1378 = vst.msk [vmem:[#allocation2 + $0x60] sm:$0xff] %vm608, %v1346
      %1379 = vst.msk [vmem:[#allocation2 + $0x68] sm:$0xff] %vm608, %v1347
      %1380 = vst.msk [vmem:[#allocation2 + $0x70] sm:$0xff] %vm608, %v1348
      %1381 = vst.msk [vmem:[#allocation2 + $0x78] sm:$0xff] %vm608, %v1349
      %1382 = vst.msk [vmem:[#allocation2 + $0x80] sm:$0xff] %vm608, %v1350
      %1383 = vst.msk [vmem:[#allocation2 + $0x88] sm:$0xff] %vm608, %v1351
      %1384 = vst.msk [vmem:[#allocation2 + $0x90] sm:$0xff] %vm608, %v1352
      %1385 = vst.msk [vmem:[#allocation2 + $0x98] sm:$0xff] %vm608, %v1353
      %1386 = vst.msk [vmem:[#allocation2 + $0xa0] sm:$0xff] %vm608, %v1354
      %1387 = vst.msk [vmem:[#allocation2 + $0xa8] sm:$0xff] %vm608, %v1355
      %1388 = vst.msk [vmem:[#allocation2 + $0xb0] sm:$0xff] %vm608, %v1356
      %1389 = vst.msk [vmem:[#allocation2 + $0xb8] sm:$0xff] %vm608, %v1357
      %1390 = vst.msk [vmem:[#allocation2 + $0xc0] sm:$0xff] %vm608, %v1358
      %1391 = vst.msk [vmem:[#allocation2 + $0xc8] sm:$0xff] %vm608, %v1359
      %1392 = vst.msk [vmem:[#allocation2 + $0xd0] sm:$0xff] %vm608, %v1360
      %1393 = vst.msk [vmem:[#allocation2 + $0xd8] sm:$0xff] %vm608, %v1361
      %1394 = vst.msk [vmem:[#allocation2 + $0xe0] sm:$0xff] %vm608, %v1362
      %1395 = vst.msk [vmem:[#allocation2 + $0xe8] sm:$0xff] %vm608, %v1363
      %1396 = vst.msk [vmem:[#allocation2 + $0xf0] sm:$0xff] %vm608, %v1364
      %1397 = vst.msk [vmem:[#allocation2 + $0xf8] sm:$0xff] %vm608, %v1365
      %vm1414 = vcmask 1042432
      %vm1415 = vcmask 1046532
      %vm1416 = vmor %vm1414, %vm1415
      %v1417 = vrot.slane %v248, 5
      %v1418 = vrot.slane %v1417, 4
      %v1419 = vrot.slane %v249, 5
      %v1420 = vsel %vm1416, %v1418, %v1419
      %v1421 = vrot.slane %v1419, 4
      %v1422 = vrot.slane %v250, 5
      %v1423 = vsel %vm1416, %v1421, %v1422
      %v1424 = vrot.slane %v251, 5
      %v1425 = vrot.slane %v1424, 4
      %v1426 = vrot.slane %v252, 5
      %v1427 = vsel %vm1416, %v1425, %v1426
      %v1428 = vrot.slane %v1426, 4
      %v1429 = vrot.slane %v253, 5
      %v1430 = vsel %vm1416, %v1428, %v1429
      %v1431 = vrot.slane %v254, 5
      %v1432 = vrot.slane %v1431, 4
      %v1433 = vrot.slane %v255, 5
      %v1434 = vsel %vm1416, %v1432, %v1433
      %v1435 = vrot.slane %v1433, 4
      %v1436 = vrot.slane %v256, 5
      %v1437 = vsel %vm1416, %v1435, %v1436
      %v1438 = vrot.slane %v257, 5
      %v1439 = vrot.slane %v1438, 4
      %v1440 = vrot.slane %v258, 5
      %v1441 = vsel %vm1416, %v1439, %v1440
      %v1442 = vrot.slane %v1440, 4
      %v1443 = vrot.slane %v259, 5
      %v1444 = vsel %vm1416, %v1442, %v1443
      %v1445 = vrot.slane %v260, 5
      %v1446 = vrot.slane %v1445, 4
      %v1447 = vrot.slane %v261, 5
      %v1448 = vsel %vm1416, %v1446, %v1447
      %v1449 = vrot.slane %v1447, 4
      %v1450 = vrot.slane %v262, 5
      %v1451 = vsel %vm1416, %v1449, %v1450
      %v1452 = vrot.slane %v263, 5
      %v1453 = vrot.slane %v1452, 4
      %v1454 = vrot.slane %v264, 5
      %v1455 = vsel %vm1416, %v1453, %v1454
      %v1456 = vrot.slane %v1454, 4
      %v1457 = vrot.slane %v265, 5
      %v1458 = vsel %vm1416, %v1456, %v1457
      %v1459 = vrot.slane %v266, 5
      %v1460 = vrot.slane %v1459, 4
      %v1461 = vrot.slane %v267, 5
      %v1462 = vsel %vm1416, %v1460, %v1461
      %v1463 = vrot.slane %v1461, 4
      %v1464 = vrot.slane %v268, 5
      %v1465 = vsel %vm1416, %v1463, %v1464
      %v1466 = vrot.slane %v269, 5
      %v1467 = vrot.slane %v1466, 4
      %v1468 = vrot.slane %v270, 5
      %v1469 = vsel %vm1416, %v1467, %v1468
      %v1470 = vrot.slane %v1468, 4
      %v1471 = vrot.slane %v271, 5
      %v1472 = vsel %vm1416, %v1470, %v1471
      %v1473 = vrot.slane %v272, 5
      %v1474 = vrot.slane %v1473, 4
      %v1475 = vrot.slane %v273, 5
      %v1476 = vsel %vm1416, %v1474, %v1475
      %v1477 = vrot.slane %v1475, 4
      %v1478 = vrot.slane %v274, 5
      %v1479 = vsel %vm1416, %v1477, %v1478
      %v1480 = vrot.slane %v275, 5
      %v1481 = vrot.slane %v1480, 4
      %v1482 = vrot.slane %v276, 5
      %v1483 = vsel %vm1416, %v1481, %v1482
      %v1484 = vrot.slane %v1482, 4
      %v1485 = vrot.slane %v277, 5
      %v1486 = vsel %vm1416, %v1484, %v1485
      %v1487 = vrot.slane %v278, 5
      %v1488 = vrot.slane %v1487, 4
      %v1489 = vrot.slane %v279, 5
      %v1490 = vsel %vm1416, %v1488, %v1489
      %v1491 = vrot.slane %v1489, 4
      %v1492 = vrot.slane %v280, 5
      %v1493 = vsel %vm1416, %v1491, %v1492
      %v1494 = vrot.slane %v281, 5
      %v1495 = vrot.slane %v1494, 4
      %v1496 = vrot.slane %v282, 5
      %v1497 = vsel %vm1416, %v1495, %v1496
      %v1498 = vrot.slane %v1496, 4
      %v1499 = vrot.slane %v283, 5
      %v1500 = vsel %vm1416, %v1498, %v1499
      %v1501 = vrot.slane %v284, 5
      %v1502 = vrot.slane %v1501, 4
      %v1503 = vrot.slane %v285, 5
      %v1504 = vsel %vm1416, %v1502, %v1503
      %v1505 = vrot.slane %v1503, 4
      %v1506 = vrot.slane %v286, 5
      %v1507 = vsel %vm1416, %v1505, %v1506
      %v1508 = vrot.slane %v287, 5
      %v1509 = vrot.slane %v1508, 4
      %v1510 = vrot.slane %v288, 5
      %v1511 = vsel %vm1416, %v1509, %v1510
      %v1512 = vrot.slane %v1510, 4
      %v1513 = vrot.slane %v289, 5
      %v1514 = vsel %vm1416, %v1512, %v1513
      %v1515 = vrot.slane %v290, 5
      %v1516 = vrot.slane %v1515, 4
      %v1517 = vrot.slane %v291, 5
      %v1518 = vsel %vm1416, %v1516, %v1517
      %v1519 = vrot.slane %v1517, 4
      %v1520 = vrot.slane %v292, 5
      %v1521 = vsel %vm1416, %v1519, %v1520
      %v1522 = vrot.slane %v293, 5
      %v1523 = vrot.slane %v1522, 4
      %v1524 = vrot.slane %v294, 5
      %v1525 = vsel %vm1416, %v1523, %v1524
      %v1526 = vrot.slane %v1524, 4
      %v1527 = vrot.slane %v295, 5
      %v1528 = vsel %vm1416, %v1526, %v1527
      %s1529 = scalar_lea.vmem %s1, 32
      %v1530 = vld [vmem:[%s1529] sm:$0xf]
      %v1531 = vld [vmem:[%s1529 + $0x4] sm:$0xf]
      %v1532 = vld [vmem:[%s1529 + $0x8] sm:$0xf]
      %v1533 = vld [vmem:[%s1529 + $0xc] sm:$0xf]
      %v1534 = vunpack.c.l.b16 %v1420
      %v1535 = vunpack.c.l.b16 %v1423
      %v1536 = vunpack.c.l.b16 %v1427
      %v1537 = vunpack.c.l.b16 %v1430
      %v1538 = vunpack.c.l.b16 %v1434
      %v1539 = vunpack.c.l.b16 %v1437
      %v1540 = vunpack.c.l.b16 %v1441
      %v1541 = vunpack.c.l.b16 %v1444
      %v1542 = vunpack.c.l.b16 %v1448
      %v1543 = vunpack.c.l.b16 %v1451
      %v1544 = vunpack.c.l.b16 %v1455
      %v1545 = vunpack.c.l.b16 %v1458
      %v1546 = vunpack.c.l.b16 %v1462
      %v1547 = vunpack.c.l.b16 %v1465
      %v1548 = vunpack.c.l.b16 %v1469
      %v1549 = vunpack.c.l.b16 %v1472
      %v1550 = vunpack.c.l.b16 %v1476
      %v1551 = vunpack.c.l.b16 %v1479
      %v1552 = vunpack.c.l.b16 %v1483
      %v1553 = vunpack.c.l.b16 %v1486
      %v1554 = vunpack.c.l.b16 %v1490
      %v1555 = vunpack.c.l.b16 %v1493
      %v1556 = vunpack.c.l.b16 %v1497
      %v1557 = vunpack.c.l.b16 %v1500
      %v1558 = vunpack.c.l.b16 %v1504
      %v1559 = vunpack.c.l.b16 %v1507
      %v1560 = vunpack.c.l.b16 %v1511
      %v1561 = vunpack.c.l.b16 %v1514
      %v1562 = vunpack.c.l.b16 %v1518
      %v1563 = vunpack.c.l.b16 %v1521
      %v1564 = vunpack.c.l.b16 %v1525
      %v1565 = vunpack.c.l.b16 %v1528
      %v1566 = vpack.c.b16 %v1535, %v1534
      %v1567 = vpack.c.b16 %v1537, %v1536
      %v1568 = vpack.c.b16 %v1539, %v1538
      %v1569 = vpack.c.b16 %v1541, %v1540
      %v1570 = vpack.c.b16 %v1543, %v1542
      %v1571 = vpack.c.b16 %v1545, %v1544
      %v1572 = vpack.c.b16 %v1547, %v1546
      %v1573 = vpack.c.b16 %v1549, %v1548
      %v1574 = vpack.c.b16 %v1551, %v1550
      %v1575 = vpack.c.b16 %v1553, %v1552
      %v1576 = vpack.c.b16 %v1555, %v1554
      %v1577 = vpack.c.b16 %v1557, %v1556
      %v1578 = vpack.c.b16 %v1559, %v1558
      %v1579 = vpack.c.b16 %v1561, %v1560
      %v1580 = vpack.c.b16 %v1563, %v1562
      %v1581 = vpack.c.b16 %v1565, %v1564
      %v1586 = vunpack.c.l.b16 %v1530
      %v1587 = vunpack.c.l.b16 %v1531
      %v1588 = vunpack.c.l.b16 %v1532
      %v1589 = vunpack.c.l.b16 %v1533
      %v1590 = vpack.c.b16 %v1587, %v1586
      %v1591 = vpack.c.b16 %v1589, %v1588
      %v1595 = vsel %vm398, %v1566, 0
      %v1598 = vsel %vm398, %v1567, 0
      %v1601 = vsel %vm398, %v1568, 0
      %v1604 = vsel %vm398, %v1569, 0
      %v1607 = vsel %vm398, %v1570, 0
      %v1610 = vsel %vm398, %v1571, 0
      %v1613 = vsel %vm398, %v1572, 0
      %v1616 = vsel %vm398, %v1573, 0
      %v1619 = vsel %vm398, %v1574, 0
      %v1622 = vsel %vm398, %v1575, 0
      %v1625 = vsel %vm398, %v1576, 0
      %v1628 = vsel %vm398, %v1577, 0
      %v1631 = vsel %vm398, %v1578, 0
      %v1634 = vsel %vm398, %v1579, 0
      %v1637 = vsel %vm398, %v1580, 0
      %v1640 = vsel %vm398, %v1581, 0
      %1642 = vmatprep.subr.bf16.mxu0 0
      %1643 = vmatpush1.bf16.msra.mxu0 %v1590
      %1644 = vmatprep.subr.bf16.mxu0 0
      %1645 = vmatpush1.bf16.msra.mxu0 %v1591
      %1646 = vmatprep.subr.bf16.mxu0 0
      %1647 = vmatpush1.bf16.msra.mxu0 0
      %1648 = vmatprep.subr.bf16.mxu0 0
      %1649 = vmatpush1.bf16.msra.mxu0 0
      %1650 = vmatprep.subr.bf16.mxu0 0
      %1651 = vmatpush1.bf16.msra.mxu0 0
      %1652 = vmatprep.subr.bf16.mxu0 0
      %1653 = vmatpush1.bf16.msra.mxu0 0
      %1654 = vmatprep.subr.bf16.mxu0 0
      %1655 = vmatpush1.bf16.msra.mxu0 0
      %1656 = vmatprep.subr.bf16.mxu0 0
      %1657 = vmatpush1.bf16.msra.mxu0 0
      %1658 = vmatprep.subr.bf16.mxu0 0
      %1659 = vmatpush1.bf16.msra.mxu0 0
      %1660 = vmatprep.subr.bf16.mxu0 0
      %1661 = vmatpush1.bf16.msra.mxu0 0
      %1662 = vmatprep.subr.bf16.mxu0 0
      %1663 = vmatpush1.bf16.msra.mxu0 0
      %1664 = vmatprep.subr.bf16.mxu0 0
      %1665 = vmatpush1.bf16.msra.mxu0 0
      %1666 = vmatprep.subr.bf16.mxu0 0
      %1667 = vmatpush1.bf16.msra.mxu0 0
      %1668 = vmatprep.subr.bf16.mxu0 0
      %1669 = vmatpush1.bf16.msra.mxu0 0
      %1670 = vmatprep.subr.bf16.mxu0 0
      %1671 = vmatpush1.bf16.msra.mxu0 0
      %1672 = vmatprep.subr.bf16.mxu0 0
      %1673 = vmatpush1.bf16.msra.mxu0 0
      %1674 = vmatprep.mubr.bf16.mxu0 0
      %1675 = vmatmul.mubr.bf16.gmra.mrb[0].mxu0 %v1595
      %v1676 = vpop.f32.mrb[0].mxu0
      %v1677 = vadd.f32 0.0, %v1676
      %v1678 = vpop.f32.mrb[0].mxu0
      %v1679 = vpop.f32.mrb[0].mxu0
      %v1680 = vadd.f32 0.0, %v1679
      %v1681 = vpop.f32.mrb[0].mxu0
      %1682 = vmatprep.mubr.bf16.mxu0 0
      %1683 = vmatmul.mubr.bf16.gmra.mrb[0].mxu0 %v1598
      %v1684 = vpop.f32.mrb[0].mxu0
      %v1685 = vadd.f32 0.0, %v1684
      %v1686 = vpop.f32.mrb[0].mxu0
      %v1687 = vpop.f32.mrb[0].mxu0
      %v1688 = vadd.f32 0.0, %v1687
      %v1689 = vpop.f32.mrb[0].mxu0
      %1690 = vmatprep.mubr.bf16.mxu0 0
      %1691 = vmatmul.mubr.bf16.gmra.mrb[0].mxu0 %v1601
      %v1692 = vpop.f32.mrb[0].mxu0
      %v1693 = vadd.f32 0.0, %v1692
      %v1694 = vpop.f32.mrb[0].mxu0
      %v1695 = vpop.f32.mrb[0].mxu0
      %v1696 = vadd.f32 0.0, %v1695
      %v1697 = vpop.f32.mrb[0].mxu0
      %1698 = vmatprep.mubr.bf16.mxu0 0
      %1699 = vmatmul.mubr.bf16.gmra.mrb[0].mxu0 %v1604
      %v1700 = vpop.f32.mrb[0].mxu0
      %v1701 = vadd.f32 0.0, %v1700
      %v1702 = vpop.f32.mrb[0].mxu0
      %v1703 = vpop.f32.mrb[0].mxu0
      %v1704 = vadd.f32 0.0, %v1703
      %v1705 = vpop.f32.mrb[0].mxu0
      %1706 = vmatprep.mubr.bf16.mxu0 0
      %1707 = vmatmul.mubr.bf16.gmra.mrb[0].mxu0 %v1607
      %v1708 = vpop.f32.mrb[0].mxu0
      %v1709 = vadd.f32 0.0, %v1708
      %v1710 = vpop.f32.mrb[0].mxu0
      %v1711 = vpop.f32.mrb[0].mxu0
      %v1712 = vadd.f32 0.0, %v1711
      %v1713 = vpop.f32.mrb[0].mxu0
      %1714 = vmatprep.mubr.bf16.mxu0 0
      %1715 = vmatmul.mubr.bf16.gmra.mrb[0].mxu0 %v1610
      %v1716 = vpop.f32.mrb[0].mxu0
      %v1717 = vadd.f32 0.0, %v1716
      %v1718 = vpop.f32.mrb[0].mxu0
      %v1719 = vpop.f32.mrb[0].mxu0
      %v1720 = vadd.f32 0.0, %v1719
      %v1721 = vpop.f32.mrb[0].mxu0
      %1722 = vmatprep.mubr.bf16.mxu0 0
      %1723 = vmatmul.mubr.bf16.gmra.mrb[0].mxu0 %v1613
      %v1724 = vpop.f32.mrb[0].mxu0
      %v1725 = vadd.f32 0.0, %v1724
      %v1726 = vpop.f32.mrb[0].mxu0
      %v1727 = vpop.f32.mrb[0].mxu0
      %v1728 = vadd.f32 0.0, %v1727
      %v1729 = vpop.f32.mrb[0].mxu0
      %1730 = vmatprep.mubr.bf16.mxu0 0
      %1731 = vmatmul.mubr.bf16.gmra.mrb[0].mxu0 %v1616
      %v1732 = vpop.f32.mrb[0].mxu0
      %v1733 = vadd.f32 0.0, %v1732
      %v1734 = vpop.f32.mrb[0].mxu0
      %v1735 = vpop.f32.mrb[0].mxu0
      %v1736 = vadd.f32 0.0, %v1735
      %v1737 = vpop.f32.mrb[0].mxu0
      %1738 = vmatprep.mubr.bf16.mxu0 0
      %1739 = vmatmul.mubr.bf16.gmra.mrb[0].mxu0 %v1619
      %v1740 = vpop.f32.mrb[0].mxu0
      %v1741 = vadd.f32 0.0, %v1740
      %v1742 = vpop.f32.mrb[0].mxu0
      %v1743 = vpop.f32.mrb[0].mxu0
      %v1744 = vadd.f32 0.0, %v1743
      %v1745 = vpop.f32.mrb[0].mxu0
      %1746 = vmatprep.mubr.bf16.mxu0 0
      %1747 = vmatmul.mubr.bf16.gmra.mrb[0].mxu0 %v1622
      %v1748 = vpop.f32.mrb[0].mxu0
      %v1749 = vadd.f32 0.0, %v1748
      %v1750 = vpop.f32.mrb[0].mxu0
      %v1751 = vpop.f32.mrb[0].mxu0
      %v1752 = vadd.f32 0.0, %v1751
      %v1753 = vpop.f32.mrb[0].mxu0
      %1754 = vmatprep.mubr.bf16.mxu0 0
      %1755 = vmatmul.mubr.bf16.gmra.mrb[0].mxu0 %v1625
      %v1756 = vpop.f32.mrb[0].mxu0
      %v1757 = vadd.f32 0.0, %v1756
      %v1758 = vpop.f32.mrb[0].mxu0
      %v1759 = vpop.f32.mrb[0].mxu0
      %v1760 = vadd.f32 0.0, %v1759
      %v1761 = vpop.f32.mrb[0].mxu0
      %1762 = vmatprep.mubr.bf16.mxu0 0
      %1763 = vmatmul.mubr.bf16.gmra.mrb[0].mxu0 %v1628
      %v1764 = vpop.f32.mrb[0].mxu0
      %v1765 = vadd.f32 0.0, %v1764
      %v1766 = vpop.f32.mrb[0].mxu0
      %v1767 = vpop.f32.mrb[0].mxu0
      %v1768 = vadd.f32 0.0, %v1767
      %v1769 = vpop.f32.mrb[0].mxu0
      %1770 = vmatprep.mubr.bf16.mxu0 0
      %1771 = vmatmul.mubr.bf16.gmra.mrb[0].mxu0 %v1631
      %v1772 = vpop.f32.mrb[0].mxu0
      %v1773 = vadd.f32 0.0, %v1772
      %v1774 = vpop.f32.mrb[0].mxu0
      %v1775 = vpop.f32.mrb[0].mxu0
      %v1776 = vadd.f32 0.0, %v1775
      %v1777 = vpop.f32.mrb[0].mxu0
      %1778 = vmatprep.mubr.bf16.mxu0 0
      %1779 = vmatmul.mubr.bf16.gmra.mrb[0].mxu0 %v1634
      %v1780 = vpop.f32.mrb[0].mxu0
      %v1781 = vadd.f32 0.0, %v1780
      %v1782 = vpop.f32.mrb[0].mxu0
      %v1783 = vpop.f32.mrb[0].mxu0
      %v1784 = vadd.f32 0.0, %v1783
      %v1785 = vpop.f32.mrb[0].mxu0
      %1786 = vmatprep.mubr.bf16.mxu0 0
      %1787 = vmatmul.mubr.bf16.gmra.mrb[0].mxu0 %v1637
      %v1788 = vpop.f32.mrb[0].mxu0
      %v1789 = vadd.f32 0.0, %v1788
      %v1790 = vpop.f32.mrb[0].mxu0
      %v1791 = vpop.f32.mrb[0].mxu0
      %v1792 = vadd.f32 0.0, %v1791
      %v1793 = vpop.f32.mrb[0].mxu0
      %1794 = vmatprep.mubr.bf16.mxu0 0
      %1795 = vmatmul.mubr.bf16.gmra.mrb[0].mxu0 %v1640
      %v1796 = vpop.f32.mrb[0].mxu0
      %v1797 = vadd.f32 0.0, %v1796
      %v1798 = vpop.f32.mrb[0].mxu0
      %v1799 = vpop.f32.mrb[0].mxu0
      %v1800 = vadd.f32 0.0, %v1799
      %v1801 = vpop.f32.mrb[0].mxu0
      %1802 = vdwg.mxu0
      %v1803 = vld [vmem:[#allocation2] sm:$0xff]
      %v1804 = vld [vmem:[#allocation2 + $0x8] sm:$0xff]
      %v1805 = vld [vmem:[#allocation2 + $0x10] sm:$0xff]
      %v1806 = vld [vmem:[#allocation2 + $0x18] sm:$0xff]
      %v1807 = vld [vmem:[#allocation2 + $0x20] sm:$0xff]
      %v1808 = vld [vmem:[#allocation2 + $0x28] sm:$0xff]
      %v1809 = vld [vmem:[#allocation2 + $0x30] sm:$0xff]
      %v1810 = vld [vmem:[#allocation2 + $0x38] sm:$0xff]
      %v1811 = vld [vmem:[#allocation2 + $0x40] sm:$0xff]
      %v1812 = vld [vmem:[#allocation2 + $0x48] sm:$0xff]
      %v1813 = vld [vmem:[#allocation2 + $0x50] sm:$0xff]
      %v1814 = vld [vmem:[#allocation2 + $0x58] sm:$0xff]
      %v1815 = vld [vmem:[#allocation2 + $0x60] sm:$0xff]
      %v1816 = vld [vmem:[#allocation2 + $0x68] sm:$0xff]
      %v1817 = vld [vmem:[#allocation2 + $0x70] sm:$0xff]
      %v1818 = vld [vmem:[#allocation2 + $0x78] sm:$0xff]
      %v1819 = vld [vmem:[#allocation2 + $0x80] sm:$0xff]
      %v1820 = vld [vmem:[#allocation2 + $0x88] sm:$0xff]
      %v1821 = vld [vmem:[#allocation2 + $0x90] sm:$0xff]
      %v1822 = vld [vmem:[#allocation2 + $0x98] sm:$0xff]
      %v1823 = vld [vmem:[#allocation2 + $0xa0] sm:$0xff]
      %v1824 = vld [vmem:[#allocation2 + $0xa8] sm:$0xff]
      %v1825 = vld [vmem:[#allocation2 + $0xb0] sm:$0xff]
      %v1826 = vld [vmem:[#allocation2 + $0xb8] sm:$0xff]
      %v1827 = vld [vmem:[#allocation2 + $0xc0] sm:$0xff]
      %v1828 = vld [vmem:[#allocation2 + $0xc8] sm:$0xff]
      %v1829 = vld [vmem:[#allocation2 + $0xd0] sm:$0xff]
      %v1830 = vld [vmem:[#allocation2 + $0xd8] sm:$0xff]
      %v1831 = vld [vmem:[#allocation2 + $0xe0] sm:$0xff]
      %v1832 = vld [vmem:[#allocation2 + $0xe8] sm:$0xff]
      %v1833 = vld [vmem:[#allocation2 + $0xf0] sm:$0xff]
      %v1834 = vld [vmem:[#allocation2 + $0xf8] sm:$0xff]
      %v1835 = vadd.f32 %v1803, %v1677
      %v1836 = vadd.f32 %v1804, %v1680
      %v1837 = vadd.f32 %v1805, %v1685
      %v1838 = vadd.f32 %v1806, %v1688
      %v1839 = vadd.f32 %v1807, %v1693
      %v1840 = vadd.f32 %v1808, %v1696
      %v1841 = vadd.f32 %v1809, %v1701
      %v1842 = vadd.f32 %v1810, %v1704
      %v1843 = vadd.f32 %v1811, %v1709
      %v1844 = vadd.f32 %v1812, %v1712
      %v1845 = vadd.f32 %v1813, %v1717
      %v1846 = vadd.f32 %v1814, %v1720
      %v1847 = vadd.f32 %v1815, %v1725
      %v1848 = vadd.f32 %v1816, %v1728
      %v1849 = vadd.f32 %v1817, %v1733
      %v1850 = vadd.f32 %v1818, %v1736
      %v1851 = vadd.f32 %v1819, %v1741
      %v1852 = vadd.f32 %v1820, %v1744
      %v1853 = vadd.f32 %v1821, %v1749
      %v1854 = vadd.f32 %v1822, %v1752
      %v1855 = vadd.f32 %v1823, %v1757
      %v1856 = vadd.f32 %v1824, %v1760
      %v1857 = vadd.f32 %v1825, %v1765
      %v1858 = vadd.f32 %v1826, %v1768
      %v1859 = vadd.f32 %v1827, %v1773
      %v1860 = vadd.f32 %v1828, %v1776
      %v1861 = vadd.f32 %v1829, %v1781
      %v1862 = vadd.f32 %v1830, %v1784
      %v1863 = vadd.f32 %v1831, %v1789
      %v1864 = vadd.f32 %v1832, %v1792
      %v1865 = vadd.f32 %v1833, %v1797
      %v1866 = vadd.f32 %v1834, %v1800
      %1867 = vst.msk [vmem:[#allocation2] sm:$0xff] %vm608, %v1835
      %1868 = vst.msk [vmem:[#allocation2 + $0x8] sm:$0xff] %vm608, %v1836
      %1869 = vst.msk [vmem:[#allocation2 + $0x10] sm:$0xff] %vm608, %v1837
      %1870 = vst.msk [vmem:[#allocation2 + $0x18] sm:$0xff] %vm608, %v1838
      %1871 = vst.msk [vmem:[#allocation2 + $0x20] sm:$0xff] %vm608, %v1839
      %1872 = vst.msk [vmem:[#allocation2 + $0x28] sm:$0xff] %vm608, %v1840
      %1873 = vst.msk [vmem:[#allocation2 + $0x30] sm:$0xff] %vm608, %v1841
      %1874 = vst.msk [vmem:[#allocation2 + $0x38] sm:$0xff] %vm608, %v1842
      %1875 = vst.msk [vmem:[#allocation2 + $0x40] sm:$0xff] %vm608, %v1843
      %1876 = vst.msk [vmem:[#allocation2 + $0x48] sm:$0xff] %vm608, %v1844
      %1877 = vst.msk [vmem:[#allocation2 + $0x50] sm:$0xff] %vm608, %v1845
      %1878 = vst.msk [vmem:[#allocation2 + $0x58] sm:$0xff] %vm608, %v1846
      %1879 = vst.msk [vmem:[#allocation2 + $0x60] sm:$0xff] %vm608, %v1847
      %1880 = vst.msk [vmem:[#allocation2 + $0x68] sm:$0xff] %vm608, %v1848
      %1881 = vst.msk [vmem:[#allocation2 + $0x70] sm:$0xff] %vm608, %v1849
      %1882 = vst.msk [vmem:[#allocation2 + $0x78] sm:$0xff] %vm608, %v1850
      %1883 = vst.msk [vmem:[#allocation2 + $0x80] sm:$0xff] %vm608, %v1851
      %1884 = vst.msk [vmem:[#allocation2 + $0x88] sm:$0xff] %vm608, %v1852
      %1885 = vst.msk [vmem:[#allocation2 + $0x90] sm:$0xff] %vm608, %v1853
      %1886 = vst.msk [vmem:[#allocation2 + $0x98] sm:$0xff] %vm608, %v1854
      %1887 = vst.msk [vmem:[#allocation2 + $0xa0] sm:$0xff] %vm608, %v1855
      %1888 = vst.msk [vmem:[#allocation2 + $0xa8] sm:$0xff] %vm608, %v1856
      %1889 = vst.msk [vmem:[#allocation2 + $0xb0] sm:$0xff] %vm608, %v1857
      %1890 = vst.msk [vmem:[#allocation2 + $0xb8] sm:$0xff] %vm608, %v1858
      %1891 = vst.msk [vmem:[#allocation2 + $0xc0] sm:$0xff] %vm608, %v1859
      %1892 = vst.msk [vmem:[#allocation2 + $0xc8] sm:$0xff] %vm608, %v1860
      %1893 = vst.msk [vmem:[#allocation2 + $0xd0] sm:$0xff] %vm608, %v1861
      %1894 = vst.msk [vmem:[#allocation2 + $0xd8] sm:$0xff] %vm608, %v1862
      %1895 = vst.msk [vmem:[#allocation2 + $0xe0] sm:$0xff] %vm608, %v1863
      %1896 = vst.msk [vmem:[#allocation2 + $0xe8] sm:$0xff] %vm608, %v1864
      %1897 = vst.msk [vmem:[#allocation2 + $0xf0] sm:$0xff] %vm608, %v1865
      %1898 = vst.msk [vmem:[#allocation2 + $0xf8] sm:$0xff] %vm608, %v1866
      %s1899 = scalar_lea.vmem %s1, 48
      %v1900 = vld [vmem:[%s1899] sm:$0xf]
      %v1901 = vld [vmem:[%s1899 + $0x4] sm:$0xf]
      %v1902 = vld [vmem:[%s1899 + $0x8] sm:$0xf]
      %v1903 = vld [vmem:[%s1899 + $0xc] sm:$0xf]
      %v1906 = vunpack.c.l.b16 %v296
      %v1907 = vunpack.c.l.b16 %v297
      %v1908 = vpack.c.b16 %v1907, %v1906
      %v1913 = vunpack.c.l.b16 %v1900
      %v1914 = vunpack.c.l.b16 %v1901
      %v1915 = vunpack.c.l.b16 %v1902
      %v1916 = vunpack.c.l.b16 %v1903
      %v1917 = vpack.c.b16 %v1914, %v1913
      %v1918 = vpack.c.b16 %v1916, %v1915
      %v1922 = vsel %vm398, %v1908, 0
      %1924 = vmatprep.subr.bf16.mxu0 0
      %1925 = vmatpush1.bf16.msra.mxu0 %v1917
      %1926 = vmatprep.subr.bf16.mxu0 0
      %1927 = vmatpush1.bf16.msra.mxu0 %v1918
      %1928 = vmatprep.subr.bf16.mxu0 0
      %1929 = vmatpush1.bf16.msra.mxu0 0
      %1930 = vmatprep.subr.bf16.mxu0 0
      %1931 = vmatpush1.bf16.msra.mxu0 0
      %1932 = vmatprep.subr.bf16.mxu0 0
      %1933 = vmatpush1.bf16.msra.mxu0 0
      %1934 = vmatprep.subr.bf16.mxu0 0
      %1935 = vmatpush1.bf16.msra.mxu0 0
      %1936 = vmatprep.subr.bf16.mxu0 0
      %1937 = vmatpush1.bf16.msra.mxu0 0
      %1938 = vmatprep.subr.bf16.mxu0 0
      %1939 = vmatpush1.bf16.msra.mxu0 0
      %1940 = vmatprep.subr.bf16.mxu0 0
      %1941 = vmatpush1.bf16.msra.mxu0 0
      %1942 = vmatprep.subr.bf16.mxu0 0
      %1943 = vmatpush1.bf16.msra.mxu0 0
      %1944 = vmatprep.subr.bf16.mxu0 0
      %1945 = vmatpush1.bf16.msra.mxu0 0
      %1946 = vmatprep.subr.bf16.mxu0 0
      %1947 = vmatpush1.bf16.msra.mxu0 0
      %1948 = vmatprep.subr.bf16.mxu0 0
      %1949 = vmatpush1.bf16.msra.mxu0 0
      %1950 = vmatprep.subr.bf16.mxu0 0
      %1951 = vmatpush1.bf16.msra.mxu0 0
      %1952 = vmatprep.subr.bf16.mxu0 0
      %1953 = vmatpush1.bf16.msra.mxu0 0
      %1954 = vmatprep.subr.bf16.mxu0 0
      %1955 = vmatpush1.bf16.msra.mxu0 0
      %1956 = vmatprep.mubr.bf16.mxu0 0
      %1957 = vmatmul.mubr.bf16.gmra.mrb[0].mxu0 %v403
      %v1958 = vpop.f32.mrb[0].mxu0
      %v1959 = vadd.f32 0.0, %v1958
      %v1960 = vpop.f32.mrb[0].mxu0
      %v1961 = vpop.f32.mrb[0].mxu0
      %v1962 = vadd.f32 0.0, %v1961
      %v1963 = vpop.f32.mrb[0].mxu0
      %1964 = vmatprep.mubr.bf16.mxu0 0
      %1965 = vmatmul.mubr.bf16.gmra.mrb[0].mxu0 %v406
      %v1966 = vpop.f32.mrb[0].mxu0
      %v1967 = vadd.f32 0.0, %v1966
      %v1968 = vpop.f32.mrb[0].mxu0
      %v1969 = vpop.f32.mrb[0].mxu0
      %v1970 = vadd.f32 0.0, %v1969
      %v1971 = vpop.f32.mrb[0].mxu0
      %1972 = vmatprep.mubr.bf16.mxu0 0
      %1973 = vmatmul.mubr.bf16.gmra.mrb[0].mxu0 %v409
      %v1974 = vpop.f32.mrb[0].mxu0
      %v1975 = vadd.f32 0.0, %v1974
      %v1976 = vpop.f32.mrb[0].mxu0
      %v1977 = vpop.f32.mrb[0].mxu0
      %v1978 = vadd.f32 0.0, %v1977
      %v1979 = vpop.f32.mrb[0].mxu0
      %1980 = vmatprep.mubr.bf16.mxu0 0
      %1981 = vmatmul.mubr.bf16.gmra.mrb[0].mxu0 %v412
      %v1982 = vpop.f32.mrb[0].mxu0
      %v1983 = vadd.f32 0.0, %v1982
      %v1984 = vpop.f32.mrb[0].mxu0
      %v1985 = vpop.f32.mrb[0].mxu0
      %v1986 = vadd.f32 0.0, %v1985
      %v1987 = vpop.f32.mrb[0].mxu0
      %1988 = vmatprep.mubr.bf16.mxu0 0
      %1989 = vmatmul.mubr.bf16.gmra.mrb[0].mxu0 %v415
      %v1990 = vpop.f32.mrb[0].mxu0
      %v1991 = vadd.f32 0.0, %v1990
      %v1992 = vpop.f32.mrb[0].mxu0
      %v1993 = vpop.f32.mrb[0].mxu0
      %v1994 = vadd.f32 0.0, %v1993
      %v1995 = vpop.f32.mrb[0].mxu0
      %1996 = vmatprep.mubr.bf16.mxu0 0
      %1997 = vmatmul.mubr.bf16.gmra.mrb[0].mxu0 %v418
      %v1998 = vpop.f32.mrb[0].mxu0
      %v1999 = vadd.f32 0.0, %v1998
      %v2000 = vpop.f32.mrb[0].mxu0
      %v2001 = vpop.f32.mrb[0].mxu0
      %v2002 = vadd.f32 0.0, %v2001
      %v2003 = vpop.f32.mrb[0].mxu0
      %2004 = vmatprep.mubr.bf16.mxu0 0
      %2005 = vmatmul.mubr.bf16.gmra.mrb[0].mxu0 %v421
      %v2006 = vpop.f32.mrb[0].mxu0
      %v2007 = vadd.f32 0.0, %v2006
      %v2008 = vpop.f32.mrb[0].mxu0
      %v2009 = vpop.f32.mrb[0].mxu0
      %v2010 = vadd.f32 0.0, %v2009
      %v2011 = vpop.f32.mrb[0].mxu0
      %2012 = vmatprep.mubr.bf16.mxu0 0
      %2013 = vmatmul.mubr.bf16.gmra.mrb[0].mxu0 %v424
      %v2014 = vpop.f32.mrb[0].mxu0
      %v2015 = vadd.f32 0.0, %v2014
      %v2016 = vpop.f32.mrb[0].mxu0
      %v2017 = vpop.f32.mrb[0].mxu0
      %v2018 = vadd.f32 0.0, %v2017
      %v2019 = vpop.f32.mrb[0].mxu0
      %2020 = vmatprep.mubr.bf16.mxu0 0
      %2021 = vmatmul.mubr.bf16.gmra.mrb[0].mxu0 %v427
      %v2022 = vpop.f32.mrb[0].mxu0
      %v2023 = vadd.f32 0.0, %v2022
      %v2024 = vpop.f32.mrb[0].mxu0
      %v2025 = vpop.f32.mrb[0].mxu0
      %v2026 = vadd.f32 0.0, %v2025
      %v2027 = vpop.f32.mrb[0].mxu0
      %2028 = vmatprep.mubr.bf16.mxu0 0
      %2029 = vmatmul.mubr.bf16.gmra.mrb[0].mxu0 %v430
      %v2030 = vpop.f32.mrb[0].mxu0
      %v2031 = vadd.f32 0.0, %v2030
      %v2032 = vpop.f32.mrb[0].mxu0
      %v2033 = vpop.f32.mrb[0].mxu0
      %v2034 = vadd.f32 0.0, %v2033
      %v2035 = vpop.f32.mrb[0].mxu0
      %2036 = vmatprep.mubr.bf16.mxu0 0
      %2037 = vmatmul.mubr.bf16.gmra.mrb[0].mxu0 %v433
      %v2038 = vpop.f32.mrb[0].mxu0
      %v2039 = vadd.f32 0.0, %v2038
      %v2040 = vpop.f32.mrb[0].mxu0
      %v2041 = vpop.f32.mrb[0].mxu0
      %v2042 = vadd.f32 0.0, %v2041
      %v2043 = vpop.f32.mrb[0].mxu0
      %2044 = vmatprep.mubr.bf16.mxu0 0
      %2045 = vmatmul.mubr.bf16.gmra.mrb[0].mxu0 %v436
      %v2046 = vpop.f32.mrb[0].mxu0
      %v2047 = vadd.f32 0.0, %v2046
      %v2048 = vpop.f32.mrb[0].mxu0
      %v2049 = vpop.f32.mrb[0].mxu0
      %v2050 = vadd.f32 0.0, %v2049
      %v2051 = vpop.f32.mrb[0].mxu0
      %2052 = vmatprep.mubr.bf16.mxu0 0
      %2053 = vmatmul.mubr.bf16.gmra.mrb[0].mxu0 %v439
      %v2054 = vpop.f32.mrb[0].mxu0
      %v2055 = vadd.f32 0.0, %v2054
      %v2056 = vpop.f32.mrb[0].mxu0
      %v2057 = vpop.f32.mrb[0].mxu0
      %v2058 = vadd.f32 0.0, %v2057
      %v2059 = vpop.f32.mrb[0].mxu0
      %2060 = vmatprep.mubr.bf16.mxu0 0
      %2061 = vmatmul.mubr.bf16.gmra.mrb[0].mxu0 %v442
      %v2062 = vpop.f32.mrb[0].mxu0
      %v2063 = vadd.f32 0.0, %v2062
      %v2064 = vpop.f32.mrb[0].mxu0
      %v2065 = vpop.f32.mrb[0].mxu0
      %v2066 = vadd.f32 0.0, %v2065
      %v2067 = vpop.f32.mrb[0].mxu0
      %2068 = vmatprep.mubr.bf16.mxu0 0
      %2069 = vmatmul.mubr.bf16.gmra.mrb[0].mxu0 %v445
      %v2070 = vpop.f32.mrb[0].mxu0
      %v2071 = vadd.f32 0.0, %v2070
      %v2072 = vpop.f32.mrb[0].mxu0
      %v2073 = vpop.f32.mrb[0].mxu0
      %v2074 = vadd.f32 0.0, %v2073
      %v2075 = vpop.f32.mrb[0].mxu0
      %2076 = vmatprep.mubr.bf16.mxu0 0
      %2077 = vmatmul.mubr.bf16.gmra.mrb[0].mxu0 %v1922
      %v2078 = vpop.f32.mrb[0].mxu0
      %v2079 = vadd.f32 0.0, %v2078
      %v2080 = vpop.f32.mrb[0].mxu0
      %v2081 = vpop.f32.mrb[0].mxu0
      %v2082 = vadd.f32 0.0, %v2081
      %v2083 = vpop.f32.mrb[0].mxu0
      %2084 = vdwg.mxu0
      %v2085 = vld [vmem:[#allocation2] sm:$0xff]
      %v2086 = vld [vmem:[#allocation2 + $0x8] sm:$0xff]
      %v2087 = vld [vmem:[#allocation2 + $0x10] sm:$0xff]
      %v2088 = vld [vmem:[#allocation2 + $0x18] sm:$0xff]
      %v2089 = vld [vmem:[#allocation2 + $0x20] sm:$0xff]
      %v2090 = vld [vmem:[#allocation2 + $0x28] sm:$0xff]
      %v2091 = vld [vmem:[#allocation2 + $0x30] sm:$0xff]
      %v2092 = vld [vmem:[#allocation2 + $0x38] sm:$0xff]
      %v2093 = vld [vmem:[#allocation2 + $0x40] sm:$0xff]
      %v2094 = vld [vmem:[#allocation2 + $0x48] sm:$0xff]
      %v2095 = vld [vmem:[#allocation2 + $0x50] sm:$0xff]
      %v2096 = vld [vmem:[#allocation2 + $0x58] sm:$0xff]
      %v2097 = vld [vmem:[#allocation2 + $0x60] sm:$0xff]
      %v2098 = vld [vmem:[#allocation2 + $0x68] sm:$0xff]
      %v2099 = vld [vmem:[#allocation2 + $0x70] sm:$0xff]
      %v2100 = vld [vmem:[#allocation2 + $0x78] sm:$0xff]
      %v2101 = vld [vmem:[#allocation2 + $0x80] sm:$0xff]
      %v2102 = vld [vmem:[#allocation2 + $0x88] sm:$0xff]
      %v2103 = vld [vmem:[#allocation2 + $0x90] sm:$0xff]
      %v2104 = vld [vmem:[#allocation2 + $0x98] sm:$0xff]
      %v2105 = vld [vmem:[#allocation2 + $0xa0] sm:$0xff]
      %v2106 = vld [vmem:[#allocation2 + $0xa8] sm:$0xff]
      %v2107 = vld [vmem:[#allocation2 + $0xb0] sm:$0xff]
      %v2108 = vld [vmem:[#allocation2 + $0xb8] sm:$0xff]
      %v2109 = vld [vmem:[#allocation2 + $0xc0] sm:$0xff]
      %v2110 = vld [vmem:[#allocation2 + $0xc8] sm:$0xff]
      %v2111 = vld [vmem:[#allocation2 + $0xd0] sm:$0xff]
      %v2112 = vld [vmem:[#allocation2 + $0xd8] sm:$0xff]
      %v2113 = vld [vmem:[#allocation2 + $0xe0] sm:$0xff]
      %v2114 = vld [vmem:[#allocation2 + $0xe8] sm:$0xff]
      %v2115 = vld [vmem:[#allocation2 + $0xf0] sm:$0xff]
      %v2116 = vld [vmem:[#allocation2 + $0xf8] sm:$0xff]
      %v2117 = vadd.f32 %v2085, %v1959
      %v2118 = vadd.f32 %v2086, %v1962
      %v2119 = vadd.f32 %v2087, %v1967
      %v2120 = vadd.f32 %v2088, %v1970
      %v2121 = vadd.f32 %v2089, %v1975
      %v2122 = vadd.f32 %v2090, %v1978
      %v2123 = vadd.f32 %v2091, %v1983
      %v2124 = vadd.f32 %v2092, %v1986
      %v2125 = vadd.f32 %v2093, %v1991
      %v2126 = vadd.f32 %v2094, %v1994
      %v2127 = vadd.f32 %v2095, %v1999
      %v2128 = vadd.f32 %v2096, %v2002
      %v2129 = vadd.f32 %v2097, %v2007
      %v2130 = vadd.f32 %v2098, %v2010
      %v2131 = vadd.f32 %v2099, %v2015
      %v2132 = vadd.f32 %v2100, %v2018
      %v2133 = vadd.f32 %v2101, %v2023
      %v2134 = vadd.f32 %v2102, %v2026
      %v2135 = vadd.f32 %v2103, %v2031
      %v2136 = vadd.f32 %v2104, %v2034
      %v2137 = vadd.f32 %v2105, %v2039
      %v2138 = vadd.f32 %v2106, %v2042
      %v2139 = vadd.f32 %v2107, %v2047
      %v2140 = vadd.f32 %v2108, %v2050
      %v2141 = vadd.f32 %v2109, %v2055
      %v2142 = vadd.f32 %v2110, %v2058
      %v2143 = vadd.f32 %v2111, %v2063
      %v2144 = vadd.f32 %v2112, %v2066
      %v2145 = vadd.f32 %v2113, %v2071
      %v2146 = vadd.f32 %v2114, %v2074
      %v2147 = vadd.f32 %v2115, %v2079
      %v2148 = vadd.f32 %v2116, %v2082
      %2149 = vst.msk [vmem:[#allocation2] sm:$0xff] %vm608, %v2117
      %2150 = vst.msk [vmem:[#allocation2 + $0x8] sm:$0xff] %vm608, %v2118
      %2151 = vst.msk [vmem:[#allocation2 + $0x10] sm:$0xff] %vm608, %v2119
      %2152 = vst.msk [vmem:[#allocation2 + $0x18] sm:$0xff] %vm608, %v2120
      %2153 = vst.msk [vmem:[#allocation2 + $0x20] sm:$0xff] %vm608, %v2121
      %2154 = vst.msk [vmem:[#allocation2 + $0x28] sm:$0xff] %vm608, %v2122
      %2155 = vst.msk [vmem:[#allocation2 + $0x30] sm:$0xff] %vm608, %v2123
      %2156 = vst.msk [vmem:[#allocation2 + $0x38] sm:$0xff] %vm608, %v2124
      %2157 = vst.msk [vmem:[#allocation2 + $0x40] sm:$0xff] %vm608, %v2125
      %2158 = vst.msk [vmem:[#allocation2 + $0x48] sm:$0xff] %vm608, %v2126
      %2159 = vst.msk [vmem:[#allocation2 + $0x50] sm:$0xff] %vm608, %v2127
      %2160 = vst.msk [vmem:[#allocation2 + $0x58] sm:$0xff] %vm608, %v2128
      %2161 = vst.msk [vmem:[#allocation2 + $0x60] sm:$0xff] %vm608, %v2129
      %2162 = vst.msk [vmem:[#allocation2 + $0x68] sm:$0xff] %vm608, %v2130
      %2163 = vst.msk [vmem:[#allocation2 + $0x70] sm:$0xff] %vm608, %v2131
      %2164 = vst.msk [vmem:[#allocation2 + $0x78] sm:$0xff] %vm608, %v2132
      %2165 = vst.msk [vmem:[#allocation2 + $0x80] sm:$0xff] %vm608, %v2133
      %2166 = vst.msk [vmem:[#allocation2 + $0x88] sm:$0xff] %vm608, %v2134
      %2167 = vst.msk [vmem:[#allocation2 + $0x90] sm:$0xff] %vm608, %v2135
      %2168 = vst.msk [vmem:[#allocation2 + $0x98] sm:$0xff] %vm608, %v2136
      %2169 = vst.msk [vmem:[#allocation2 + $0xa0] sm:$0xff] %vm608, %v2137
      %2170 = vst.msk [vmem:[#allocation2 + $0xa8] sm:$0xff] %vm608, %v2138
      %2171 = vst.msk [vmem:[#allocation2 + $0xb0] sm:$0xff] %vm608, %v2139
      %2172 = vst.msk [vmem:[#allocation2 + $0xb8] sm:$0xff] %vm608, %v2140
      %2173 = vst.msk [vmem:[#allocation2 + $0xc0] sm:$0xff] %vm608, %v2141
      %2174 = vst.msk [vmem:[#allocation2 + $0xc8] sm:$0xff] %vm608, %v2142
      %2175 = vst.msk [vmem:[#allocation2 + $0xd0] sm:$0xff] %vm608, %v2143
      %2176 = vst.msk [vmem:[#allocation2 + $0xd8] sm:$0xff] %vm608, %v2144
      %2177 = vst.msk [vmem:[#allocation2 + $0xe0] sm:$0xff] %vm608, %v2145
      %2178 = vst.msk [vmem:[#allocation2 + $0xe8] sm:$0xff] %vm608, %v2146
      %2179 = vst.msk [vmem:[#allocation2 + $0xf0] sm:$0xff] %vm608, %v2147
      %2180 = vst.msk [vmem:[#allocation2 + $0xf8] sm:$0xff] %vm608, %v2148
      %v2182 = vshrl.u32 %v296, 16
      %v2184 = vrot.slane %v2182, 4
      %v2185 = vshll.u32 %v296, 16
      %v2187 = vrot.slane %v2185, 5
      %v2188 = vor.u32 %v2184, %v2187
      %v2189 = vrot.slane %v2188, 4
      %v2191 = vshll.u32 %v297, 16
      %v2193 = vrot.slane %v2191, 5
      %v2194 = vsel %vm643, %v2189, %v2193
      %v2195 = vshrl.u32 %v297, 16
      %v2197 = vrot.slane %v2195, 4
      %v2198 = vor.u32 %v2197, %v2193
      %v2199 = vrot.slane %v2198, 4
      %v2201 = vshll.u32 %v298, 16
      %v2203 = vrot.slane %v2201, 5
      %v2204 = vsel %vm643, %v2199, %v2203
      %s2205 = scalar_lea.vmem %s1, 64
      %v2206 = vld [vmem:[%s2205] sm:$0xf]
      %v2207 = vld [vmem:[%s2205 + $0x4] sm:$0xf]
      %v2208 = vld [vmem:[%s2205 + $0x8] sm:$0xf]
      %v2209 = vld [vmem:[%s2205 + $0xc] sm:$0xf]
      %v2210 = vunpack.c.l.b16 %v2194
      %v2211 = vunpack.c.l.b16 %v2204
      %v2212 = vpack.c.b16 %v2211, %v2210
      %v2217 = vunpack.c.l.b16 %v2206
      %v2218 = vunpack.c.l.b16 %v2207
      %v2219 = vunpack.c.l.b16 %v2208
      %v2220 = vunpack.c.l.b16 %v2209
      %v2221 = vpack.c.b16 %v2218, %v2217
      %v2222 = vpack.c.b16 %v2220, %v2219
      %v2226 = vsel %vm398, %v2212, 0
      %2228 = vmatprep.subr.bf16.mxu0 0
      %2229 = vmatpush1.bf16.msra.mxu0 %v2221
      %2230 = vmatprep.subr.bf16.mxu0 0
      %2231 = vmatpush1.bf16.msra.mxu0 %v2222
      %2232 = vmatprep.subr.bf16.mxu0 0
      %2233 = vmatpush1.bf16.msra.mxu0 0
      %2234 = vmatprep.subr.bf16.mxu0 0
      %2235 = vmatpush1.bf16.msra.mxu0 0
      %2236 = vmatprep.subr.bf16.mxu0 0
      %2237 = vmatpush1.bf16.msra.mxu0 0
      %2238 = vmatprep.subr.bf16.mxu0 0
      %2239 = vmatpush1.bf16.msra.mxu0 0
      %2240 = vmatprep.subr.bf16.mxu0 0
      %2241 = vmatpush1.bf16.msra.mxu0 0
      %2242 = vmatprep.subr.bf16.mxu0 0
      %2243 = vmatpush1.bf16.msra.mxu0 0
      %2244 = vmatprep.subr.bf16.mxu0 0
      %2245 = vmatpush1.bf16.msra.mxu0 0
      %2246 = vmatprep.subr.bf16.mxu0 0
      %2247 = vmatpush1.bf16.msra.mxu0 0
      %2248 = vmatprep.subr.bf16.mxu0 0
      %2249 = vmatpush1.bf16.msra.mxu0 0
      %2250 = vmatprep.subr.bf16.mxu0 0
      %2251 = vmatpush1.bf16.msra.mxu0 0
      %2252 = vmatprep.subr.bf16.mxu0 0
      %2253 = vmatpush1.bf16.msra.mxu0 0
      %2254 = vmatprep.subr.bf16.mxu0 0
      %2255 = vmatpush1.bf16.msra.mxu0 0
      %2256 = vmatprep.subr.bf16.mxu0 0
      %2257 = vmatpush1.bf16.msra.mxu0 0
      %2258 = vmatprep.subr.bf16.mxu0 0
      %2259 = vmatpush1.bf16.msra.mxu0 0
      %2260 = vmatprep.mubr.bf16.mxu0 0
      %2261 = vmatmul.mubr.bf16.gmra.mrb[0].mxu0 %v1097
      %v2262 = vpop.f32.mrb[0].mxu0
      %v2263 = vadd.f32 0.0, %v2262
      %v2264 = vpop.f32.mrb[0].mxu0
      %v2265 = vpop.f32.mrb[0].mxu0
      %v2266 = vadd.f32 0.0, %v2265
      %v2267 = vpop.f32.mrb[0].mxu0
      %2268 = vmatprep.mubr.bf16.mxu0 0
      %2269 = vmatmul.mubr.bf16.gmra.mrb[0].mxu0 %v1100
      %v2270 = vpop.f32.mrb[0].mxu0
      %v2271 = vadd.f32 0.0, %v2270
      %v2272 = vpop.f32.mrb[0].mxu0
      %v2273 = vpop.f32.mrb[0].mxu0
      %v2274 = vadd.f32 0.0, %v2273
      %v2275 = vpop.f32.mrb[0].mxu0
      %2276 = vmatprep.mubr.bf16.mxu0 0
      %2277 = vmatmul.mubr.bf16.gmra.mrb[0].mxu0 %v1103
      %v2278 = vpop.f32.mrb[0].mxu0
      %v2279 = vadd.f32 0.0, %v2278
      %v2280 = vpop.f32.mrb[0].mxu0
      %v2281 = vpop.f32.mrb[0].mxu0
      %v2282 = vadd.f32 0.0, %v2281
      %v2283 = vpop.f32.mrb[0].mxu0
      %2284 = vmatprep.mubr.bf16.mxu0 0
      %2285 = vmatmul.mubr.bf16.gmra.mrb[0].mxu0 %v1106
      %v2286 = vpop.f32.mrb[0].mxu0
      %v2287 = vadd.f32 0.0, %v2286
      %v2288 = vpop.f32.mrb[0].mxu0
      %v2289 = vpop.f32.mrb[0].mxu0
      %v2290 = vadd.f32 0.0, %v2289
      %v2291 = vpop.f32.mrb[0].mxu0
      %2292 = vmatprep.mubr.bf16.mxu0 0
      %2293 = vmatmul.mubr.bf16.gmra.mrb[0].mxu0 %v1109
      %v2294 = vpop.f32.mrb[0].mxu0
      %v2295 = vadd.f32 0.0, %v2294
      %v2296 = vpop.f32.mrb[0].mxu0
      %v2297 = vpop.f32.mrb[0].mxu0
      %v2298 = vadd.f32 0.0, %v2297
      %v2299 = vpop.f32.mrb[0].mxu0
      %2300 = vmatprep.mubr.bf16.mxu0 0
      %2301 = vmatmul.mubr.bf16.gmra.mrb[0].mxu0 %v1112
      %v2302 = vpop.f32.mrb[0].mxu0
      %v2303 = vadd.f32 0.0, %v2302
      %v2304 = vpop.f32.mrb[0].mxu0
      %v2305 = vpop.f32.mrb[0].mxu0
      %v2306 = vadd.f32 0.0, %v2305
      %v2307 = vpop.f32.mrb[0].mxu0
      %2308 = vmatprep.mubr.bf16.mxu0 0
      %2309 = vmatmul.mubr.bf16.gmra.mrb[0].mxu0 %v1115
      %v2310 = vpop.f32.mrb[0].mxu0
      %v2311 = vadd.f32 0.0, %v2310
      %v2312 = vpop.f32.mrb[0].mxu0
      %v2313 = vpop.f32.mrb[0].mxu0
      %v2314 = vadd.f32 0.0, %v2313
      %v2315 = vpop.f32.mrb[0].mxu0
      %2316 = vmatprep.mubr.bf16.mxu0 0
      %2317 = vmatmul.mubr.bf16.gmra.mrb[0].mxu0 %v1118
      %v2318 = vpop.f32.mrb[0].mxu0
      %v2319 = vadd.f32 0.0, %v2318
      %v2320 = vpop.f32.mrb[0].mxu0
      %v2321 = vpop.f32.mrb[0].mxu0
      %v2322 = vadd.f32 0.0, %v2321
      %v2323 = vpop.f32.mrb[0].mxu0
      %2324 = vmatprep.mubr.bf16.mxu0 0
      %2325 = vmatmul.mubr.bf16.gmra.mrb[0].mxu0 %v1121
      %v2326 = vpop.f32.mrb[0].mxu0
      %v2327 = vadd.f32 0.0, %v2326
      %v2328 = vpop.f32.mrb[0].mxu0
      %v2329 = vpop.f32.mrb[0].mxu0
      %v2330 = vadd.f32 0.0, %v2329
      %v2331 = vpop.f32.mrb[0].mxu0
      %2332 = vmatprep.mubr.bf16.mxu0 0
      %2333 = vmatmul.mubr.bf16.gmra.mrb[0].mxu0 %v1124
      %v2334 = vpop.f32.mrb[0].mxu0
      %v2335 = vadd.f32 0.0, %v2334
      %v2336 = vpop.f32.mrb[0].mxu0
      %v2337 = vpop.f32.mrb[0].mxu0
      %v2338 = vadd.f32 0.0, %v2337
      %v2339 = vpop.f32.mrb[0].mxu0
      %2340 = vmatprep.mubr.bf16.mxu0 0
      %2341 = vmatmul.mubr.bf16.gmra.mrb[0].mxu0 %v1127
      %v2342 = vpop.f32.mrb[0].mxu0
      %v2343 = vadd.f32 0.0, %v2342
      %v2344 = vpop.f32.mrb[0].mxu0
      %v2345 = vpop.f32.mrb[0].mxu0
      %v2346 = vadd.f32 0.0, %v2345
      %v2347 = vpop.f32.mrb[0].mxu0
      %2348 = vmatprep.mubr.bf16.mxu0 0
      %2349 = vmatmul.mubr.bf16.gmra.mrb[0].mxu0 %v1130
      %v2350 = vpop.f32.mrb[0].mxu0
      %v2351 = vadd.f32 0.0, %v2350
      %v2352 = vpop.f32.mrb[0].mxu0
      %v2353 = vpop.f32.mrb[0].mxu0
      %v2354 = vadd.f32 0.0, %v2353
      %v2355 = vpop.f32.mrb[0].mxu0
      %2356 = vmatprep.mubr.bf16.mxu0 0
      %2357 = vmatmul.mubr.bf16.gmra.mrb[0].mxu0 %v1133
      %v2358 = vpop.f32.mrb[0].mxu0
      %v2359 = vadd.f32 0.0, %v2358
      %v2360 = vpop.f32.mrb[0].mxu0
      %v2361 = vpop.f32.mrb[0].mxu0
      %v2362 = vadd.f32 0.0, %v2361
      %v2363 = vpop.f32.mrb[0].mxu0
      %2364 = vmatprep.mubr.bf16.mxu0 0
      %2365 = vmatmul.mubr.bf16.gmra.mrb[0].mxu0 %v1136
      %v2366 = vpop.f32.mrb[0].mxu0
      %v2367 = vadd.f32 0.0, %v2366
      %v2368 = vpop.f32.mrb[0].mxu0
      %v2369 = vpop.f32.mrb[0].mxu0
      %v2370 = vadd.f32 0.0, %v2369
      %v2371 = vpop.f32.mrb[0].mxu0
      %2372 = vmatprep.mubr.bf16.mxu0 0
      %2373 = vmatmul.mubr.bf16.gmra.mrb[0].mxu0 %v1139
      %v2374 = vpop.f32.mrb[0].mxu0
      %v2375 = vadd.f32 0.0, %v2374
      %v2376 = vpop.f32.mrb[0].mxu0
      %v2377 = vpop.f32.mrb[0].mxu0
      %v2378 = vadd.f32 0.0, %v2377
      %v2379 = vpop.f32.mrb[0].mxu0
      %2380 = vmatprep.mubr.bf16.mxu0 0
      %2381 = vmatmul.mubr.bf16.gmra.mrb[0].mxu0 %v2226
      %v2382 = vpop.f32.mrb[0].mxu0
      %v2383 = vadd.f32 0.0, %v2382
      %v2384 = vpop.f32.mrb[0].mxu0
      %v2385 = vpop.f32.mrb[0].mxu0
      %v2386 = vadd.f32 0.0, %v2385
      %v2387 = vpop.f32.mrb[0].mxu0
      %2388 = vdwg.mxu0
      %v2389 = vld [vmem:[#allocation2] sm:$0xff]
      %v2390 = vld [vmem:[#allocation2 + $0x8] sm:$0xff]
      %v2391 = vld [vmem:[#allocation2 + $0x10] sm:$0xff]
      %v2392 = vld [vmem:[#allocation2 + $0x18] sm:$0xff]
      %v2393 = vld [vmem:[#allocation2 + $0x20] sm:$0xff]
      %v2394 = vld [vmem:[#allocation2 + $0x28] sm:$0xff]
      %v2395 = vld [vmem:[#allocation2 + $0x30] sm:$0xff]
      %v2396 = vld [vmem:[#allocation2 + $0x38] sm:$0xff]
      %v2397 = vld [vmem:[#allocation2 + $0x40] sm:$0xff]
      %v2398 = vld [vmem:[#allocation2 + $0x48] sm:$0xff]
      %v2399 = vld [vmem:[#allocation2 + $0x50] sm:$0xff]
      %v2400 = vld [vmem:[#allocation2 + $0x58] sm:$0xff]
      %v2401 = vld [vmem:[#allocation2 + $0x60] sm:$0xff]
      %v2402 = vld [vmem:[#allocation2 + $0x68] sm:$0xff]
      %v2403 = vld [vmem:[#allocation2 + $0x70] sm:$0xff]
      %v2404 = vld [vmem:[#allocation2 + $0x78] sm:$0xff]
      %v2405 = vld [vmem:[#allocation2 + $0x80] sm:$0xff]
      %v2406 = vld [vmem:[#allocation2 + $0x88] sm:$0xff]
      %v2407 = vld [vmem:[#allocation2 + $0x90] sm:$0xff]
      %v2408 = vld [vmem:[#allocation2 + $0x98] sm:$0xff]
      %v2409 = vld [vmem:[#allocation2 + $0xa0] sm:$0xff]
      %v2410 = vld [vmem:[#allocation2 + $0xa8] sm:$0xff]
      %v2411 = vld [vmem:[#allocation2 + $0xb0] sm:$0xff]
      %v2412 = vld [vmem:[#allocation2 + $0xb8] sm:$0xff]
      %v2413 = vld [vmem:[#allocation2 + $0xc0] sm:$0xff]
      %v2414 = vld [vmem:[#allocation2 + $0xc8] sm:$0xff]
      %v2415 = vld [vmem:[#allocation2 + $0xd0] sm:$0xff]
      %v2416 = vld [vmem:[#allocation2 + $0xd8] sm:$0xff]
      %v2417 = vld [vmem:[#allocation2 + $0xe0] sm:$0xff]
      %v2418 = vld [vmem:[#allocation2 + $0xe8] sm:$0xff]
      %v2419 = vld [vmem:[#allocation2 + $0xf0] sm:$0xff]
      %v2420 = vld [vmem:[#allocation2 + $0xf8] sm:$0xff]
      %v2421 = vadd.f32 %v2389, %v2263
      %v2422 = vadd.f32 %v2390, %v2266
      %v2423 = vadd.f32 %v2391, %v2271
      %v2424 = vadd.f32 %v2392, %v2274
      %v2425 = vadd.f32 %v2393, %v2279
      %v2426 = vadd.f32 %v2394, %v2282
      %v2427 = vadd.f32 %v2395, %v2287
      %v2428 = vadd.f32 %v2396, %v2290
      %v2429 = vadd.f32 %v2397, %v2295
      %v2430 = vadd.f32 %v2398, %v2298
      %v2431 = vadd.f32 %v2399, %v2303
      %v2432 = vadd.f32 %v2400, %v2306
      %v2433 = vadd.f32 %v2401, %v2311
      %v2434 = vadd.f32 %v2402, %v2314
      %v2435 = vadd.f32 %v2403, %v2319
      %v2436 = vadd.f32 %v2404, %v2322
      %v2437 = vadd.f32 %v2405, %v2327
      %v2438 = vadd.f32 %v2406, %v2330
      %v2439 = vadd.f32 %v2407, %v2335
      %v2440 = vadd.f32 %v2408, %v2338
      %v2441 = vadd.f32 %v2409, %v2343
      %v2442 = vadd.f32 %v2410, %v2346
      %v2443 = vadd.f32 %v2411, %v2351
      %v2444 = vadd.f32 %v2412, %v2354
      %v2445 = vadd.f32 %v2413, %v2359
      %v2446 = vadd.f32 %v2414, %v2362
      %v2447 = vadd.f32 %v2415, %v2367
      %v2448 = vadd.f32 %v2416, %v2370
      %v2449 = vadd.f32 %v2417, %v2375
      %v2450 = vadd.f32 %v2418, %v2378
      %v2451 = vadd.f32 %v2419, %v2383
      %v2452 = vadd.f32 %v2420, %v2386
      %2453 = vst.msk [vmem:[#allocation2] sm:$0xff] %vm608, %v2421
      %2454 = vst.msk [vmem:[#allocation2 + $0x8] sm:$0xff] %vm608, %v2422
      %2455 = vst.msk [vmem:[#allocation2 + $0x10] sm:$0xff] %vm608, %v2423
      %2456 = vst.msk [vmem:[#allocation2 + $0x18] sm:$0xff] %vm608, %v2424
      %2457 = vst.msk [vmem:[#allocation2 + $0x20] sm:$0xff] %vm608, %v2425
      %2458 = vst.msk [vmem:[#allocation2 + $0x28] sm:$0xff] %vm608, %v2426
      %2459 = vst.msk [vmem:[#allocation2 + $0x30] sm:$0xff] %vm608, %v2427
      %2460 = vst.msk [vmem:[#allocation2 + $0x38] sm:$0xff] %vm608, %v2428
      %2461 = vst.msk [vmem:[#allocation2 + $0x40] sm:$0xff] %vm608, %v2429
      %2462 = vst.msk [vmem:[#allocation2 + $0x48] sm:$0xff] %vm608, %v2430
      %2463 = vst.msk [vmem:[#allocation2 + $0x50] sm:$0xff] %vm608, %v2431
      %2464 = vst.msk [vmem:[#allocation2 + $0x58] sm:$0xff] %vm608, %v2432
      %2465 = vst.msk [vmem:[#allocation2 + $0x60] sm:$0xff] %vm608, %v2433
      %2466 = vst.msk [vmem:[#allocation2 + $0x68] sm:$0xff] %vm608, %v2434
      %2467 = vst.msk [vmem:[#allocation2 + $0x70] sm:$0xff] %vm608, %v2435
      %2468 = vst.msk [vmem:[#allocation2 + $0x78] sm:$0xff] %vm608, %v2436
      %2469 = vst.msk [vmem:[#allocation2 + $0x80] sm:$0xff] %vm608, %v2437
      %2470 = vst.msk [vmem:[#allocation2 + $0x88] sm:$0xff] %vm608, %v2438
      %2471 = vst.msk [vmem:[#allocation2 + $0x90] sm:$0xff] %vm608, %v2439
      %2472 = vst.msk [vmem:[#allocation2 + $0x98] sm:$0xff] %vm608, %v2440
      %2473 = vst.msk [vmem:[#allocation2 + $0xa0] sm:$0xff] %vm608, %v2441
      %2474 = vst.msk [vmem:[#allocation2 + $0xa8] sm:$0xff] %vm608, %v2442
      %2475 = vst.msk [vmem:[#allocation2 + $0xb0] sm:$0xff] %vm608, %v2443
      %2476 = vst.msk [vmem:[#allocation2 + $0xb8] sm:$0xff] %vm608, %v2444
      %2477 = vst.msk [vmem:[#allocation2 + $0xc0] sm:$0xff] %vm608, %v2445
      %2478 = vst.msk [vmem:[#allocation2 + $0xc8] sm:$0xff] %vm608, %v2446
      %2479 = vst.msk [vmem:[#allocation2 + $0xd0] sm:$0xff] %vm608, %v2447
      %2480 = vst.msk [vmem:[#allocation2 + $0xd8] sm:$0xff] %vm608, %v2448
      %2481 = vst.msk [vmem:[#allocation2 + $0xe0] sm:$0xff] %vm608, %v2449
      %2482 = vst.msk [vmem:[#allocation2 + $0xe8] sm:$0xff] %vm608, %v2450
      %2483 = vst.msk [vmem:[#allocation2 + $0xf0] sm:$0xff] %vm608, %v2451
      %2484 = vst.msk [vmem:[#allocation2 + $0xf8] sm:$0xff] %vm608, %v2452
      %v2486 = vrot.slane %v296, 5
      %v2487 = vrot.slane %v2486, 4
      %v2488 = vrot.slane %v297, 5
      %v2489 = vsel %vm1416, %v2487, %v2488
      %v2490 = vrot.slane %v2488, 4
      %v2491 = vrot.slane %v298, 5
      %v2492 = vsel %vm1416, %v2490, %v2491
      %s2493 = scalar_lea.vmem %s1, 80
      %v2494 = vld [vmem:[%s2493] sm:$0xf]
      %v2495 = vld [vmem:[%s2493 + $0x4] sm:$0xf]
      %v2496 = vld [vmem:[%s2493 + $0x8] sm:$0xf]
      %v2497 = vld [vmem:[%s2493 + $0xc] sm:$0xf]
      %v2498 = vunpack.c.l.b16 %v2489
      %v2499 = vunpack.c.l.b16 %v2492
      %v2500 = vpack.c.b16 %v2499, %v2498
      %v2505 = vunpack.c.l.b16 %v2494
      %v2506 = vunpack.c.l.b16 %v2495
      %v2507 = vunpack.c.l.b16 %v2496
      %v2508 = vunpack.c.l.b16 %v2497
      %v2509 = vpack.c.b16 %v2506, %v2505
      %v2510 = vpack.c.b16 %v2508, %v2507
      %v2514 = vsel %vm398, %v2500, 0
      %2516 = vmatprep.subr.bf16.mxu0 0
      %2517 = vmatpush1.bf16.msra.mxu0 %v2509
      %2518 = vmatprep.subr.bf16.mxu0 0
      %2519 = vmatpush1.bf16.msra.mxu0 %v2510
      %2520 = vmatprep.subr.bf16.mxu0 0
      %2521 = vmatpush1.bf16.msra.mxu0 0
      %2522 = vmatprep.subr.bf16.mxu0 0
      %2523 = vmatpush1.bf16.msra.mxu0 0
      %2524 = vmatprep.subr.bf16.mxu0 0
      %2525 = vmatpush1.bf16.msra.mxu0 0
      %2526 = vmatprep.subr.bf16.mxu0 0
      %2527 = vmatpush1.bf16.msra.mxu0 0
      %2528 = vmatprep.subr.bf16.mxu0 0
      %2529 = vmatpush1.bf16.msra.mxu0 0
      %2530 = vmatprep.subr.bf16.mxu0 0
      %2531 = vmatpush1.bf16.msra.mxu0 0
      %2532 = vmatprep.subr.bf16.mxu0 0
      %2533 = vmatpush1.bf16.msra.mxu0 0
      %2534 = vmatprep.subr.bf16.mxu0 0
      %2535 = vmatpush1.bf16.msra.mxu0 0
      %2536 = vmatprep.subr.bf16.mxu0 0
      %2537 = vmatpush1.bf16.msra.mxu0 0
      %2538 = vmatprep.subr.bf16.mxu0 0
      %2539 = vmatpush1.bf16.msra.mxu0 0
      %2540 = vmatprep.subr.bf16.mxu0 0
      %2541 = vmatpush1.bf16.msra.mxu0 0
      %2542 = vmatprep.subr.bf16.mxu0 0
      %2543 = vmatpush1.bf16.msra.mxu0 0
      %2544 = vmatprep.subr.bf16.mxu0 0
      %2545 = vmatpush1.bf16.msra.mxu0 0
      %2546 = vmatprep.subr.bf16.mxu0 0
      %2547 = vmatpush1.bf16.msra.mxu0 0
      %2548 = vmatprep.mubr.bf16.mxu0 0
      %2549 = vmatmul.mubr.bf16.gmra.mrb[0].mxu0 %v1598
      %v2550 = vpop.f32.mrb[0].mxu0
      %v2551 = vadd.f32 0.0, %v2550
      %v2552 = vpop.f32.mrb[0].mxu0
      %v2553 = vpop.f32.mrb[0].mxu0
      %v2554 = vadd.f32 0.0, %v2553
      %v2555 = vpop.f32.mrb[0].mxu0
      %2556 = vmatprep.mubr.bf16.mxu0 0
      %2557 = vmatmul.mubr.bf16.gmra.mrb[0].mxu0 %v1601
      %v2558 = vpop.f32.mrb[0].mxu0
      %v2559 = vadd.f32 0.0, %v2558
      %v2560 = vpop.f32.mrb[0].mxu0
      %v2561 = vpop.f32.mrb[0].mxu0
      %v2562 = vadd.f32 0.0, %v2561
      %v2563 = vpop.f32.mrb[0].mxu0
      %2564 = vmatprep.mubr.bf16.mxu0 0
      %2565 = vmatmul.mubr.bf16.gmra.mrb[0].mxu0 %v1604
      %v2566 = vpop.f32.mrb[0].mxu0
      %v2567 = vadd.f32 0.0, %v2566
      %v2568 = vpop.f32.mrb[0].mxu0
      %v2569 = vpop.f32.mrb[0].mxu0
      %v2570 = vadd.f32 0.0, %v2569
      %v2571 = vpop.f32.mrb[0].mxu0
      %2572 = vmatprep.mubr.bf16.mxu0 0
      %2573 = vmatmul.mubr.bf16.gmra.mrb[0].mxu0 %v1607
      %v2574 = vpop.f32.mrb[0].mxu0
      %v2575 = vadd.f32 0.0, %v2574
      %v2576 = vpop.f32.mrb[0].mxu0
      %v2577 = vpop.f32.mrb[0].mxu0
      %v2578 = vadd.f32 0.0, %v2577
      %v2579 = vpop.f32.mrb[0].mxu0
      %2580 = vmatprep.mubr.bf16.mxu0 0
      %2581 = vmatmul.mubr.bf16.gmra.mrb[0].mxu0 %v1610
      %v2582 = vpop.f32.mrb[0].mxu0
      %v2583 = vadd.f32 0.0, %v2582
      %v2584 = vpop.f32.mrb[0].mxu0
      %v2585 = vpop.f32.mrb[0].mxu0
      %v2586 = vadd.f32 0.0, %v2585
      %v2587 = vpop.f32.mrb[0].mxu0
      %2588 = vmatprep.mubr.bf16.mxu0 0
      %2589 = vmatmul.mubr.bf16.gmra.mrb[0].mxu0 %v1613
      %v2590 = vpop.f32.mrb[0].mxu0
      %v2591 = vadd.f32 0.0, %v2590
      %v2592 = vpop.f32.mrb[0].mxu0
      %v2593 = vpop.f32.mrb[0].mxu0
      %v2594 = vadd.f32 0.0, %v2593
      %v2595 = vpop.f32.mrb[0].mxu0
      %2596 = vmatprep.mubr.bf16.mxu0 0
      %2597 = vmatmul.mubr.bf16.gmra.mrb[0].mxu0 %v1616
      %v2598 = vpop.f32.mrb[0].mxu0
      %v2599 = vadd.f32 0.0, %v2598
      %v2600 = vpop.f32.mrb[0].mxu0
      %v2601 = vpop.f32.mrb[0].mxu0
      %v2602 = vadd.f32 0.0, %v2601
      %v2603 = vpop.f32.mrb[0].mxu0
      %2604 = vmatprep.mubr.bf16.mxu0 0
      %2605 = vmatmul.mubr.bf16.gmra.mrb[0].mxu0 %v1619
      %v2606 = vpop.f32.mrb[0].mxu0
      %v2607 = vadd.f32 0.0, %v2606
      %v2608 = vpop.f32.mrb[0].mxu0
      %v2609 = vpop.f32.mrb[0].mxu0
      %v2610 = vadd.f32 0.0, %v2609
      %v2611 = vpop.f32.mrb[0].mxu0
      %2612 = vmatprep.mubr.bf16.mxu0 0
      %2613 = vmatmul.mubr.bf16.gmra.mrb[0].mxu0 %v1622
      %v2614 = vpop.f32.mrb[0].mxu0
      %v2615 = vadd.f32 0.0, %v2614
      %v2616 = vpop.f32.mrb[0].mxu0
      %v2617 = vpop.f32.mrb[0].mxu0
      %v2618 = vadd.f32 0.0, %v2617
      %v2619 = vpop.f32.mrb[0].mxu0
      %2620 = vmatprep.mubr.bf16.mxu0 0
      %2621 = vmatmul.mubr.bf16.gmra.mrb[0].mxu0 %v1625
      %v2622 = vpop.f32.mrb[0].mxu0
      %v2623 = vadd.f32 0.0, %v2622
      %v2624 = vpop.f32.mrb[0].mxu0
      %v2625 = vpop.f32.mrb[0].mxu0
      %v2626 = vadd.f32 0.0, %v2625
      %v2627 = vpop.f32.mrb[0].mxu0
      %2628 = vmatprep.mubr.bf16.mxu0 0
      %2629 = vmatmul.mubr.bf16.gmra.mrb[0].mxu0 %v1628
      %v2630 = vpop.f32.mrb[0].mxu0
      %v2631 = vadd.f32 0.0, %v2630
      %v2632 = vpop.f32.mrb[0].mxu0
      %v2633 = vpop.f32.mrb[0].mxu0
      %v2634 = vadd.f32 0.0, %v2633
      %v2635 = vpop.f32.mrb[0].mxu0
      %2636 = vmatprep.mubr.bf16.mxu0 0
      %2637 = vmatmul.mubr.bf16.gmra.mrb[0].mxu0 %v1631
      %v2638 = vpop.f32.mrb[0].mxu0
      %v2639 = vadd.f32 0.0, %v2638
      %v2640 = vpop.f32.mrb[0].mxu0
      %v2641 = vpop.f32.mrb[0].mxu0
      %v2642 = vadd.f32 0.0, %v2641
      %v2643 = vpop.f32.mrb[0].mxu0
      %2644 = vmatprep.mubr.bf16.mxu0 0
      %2645 = vmatmul.mubr.bf16.gmra.mrb[0].mxu0 %v1634
      %v2646 = vpop.f32.mrb[0].mxu0
      %v2647 = vadd.f32 0.0, %v2646
      %v2648 = vpop.f32.mrb[0].mxu0
      %v2649 = vpop.f32.mrb[0].mxu0
      %v2650 = vadd.f32 0.0, %v2649
      %v2651 = vpop.f32.mrb[0].mxu0
      %2652 = vmatprep.mubr.bf16.mxu0 0
      %2653 = vmatmul.mubr.bf16.gmra.mrb[0].mxu0 %v1637
      %v2654 = vpop.f32.mrb[0].mxu0
      %v2655 = vadd.f32 0.0, %v2654
      %v2656 = vpop.f32.mrb[0].mxu0
      %v2657 = vpop.f32.mrb[0].mxu0
      %v2658 = vadd.f32 0.0, %v2657
      %v2659 = vpop.f32.mrb[0].mxu0
      %2660 = vmatprep.mubr.bf16.mxu0 0
      %2661 = vmatmul.mubr.bf16.gmra.mrb[0].mxu0 %v1640
      %v2662 = vpop.f32.mrb[0].mxu0
      %v2663 = vadd.f32 0.0, %v2662
      %v2664 = vpop.f32.mrb[0].mxu0
      %v2665 = vpop.f32.mrb[0].mxu0
      %v2666 = vadd.f32 0.0, %v2665
      %v2667 = vpop.f32.mrb[0].mxu0
      %2668 = vmatprep.mubr.bf16.mxu0 0
      %2669 = vmatmul.mubr.bf16.gmra.mrb[0].mxu0 %v2514
      %v2670 = vpop.f32.mrb[0].mxu0
      %v2671 = vadd.f32 0.0, %v2670
      %v2672 = vpop.f32.mrb[0].mxu0
      %v2673 = vpop.f32.mrb[0].mxu0
      %v2674 = vadd.f32 0.0, %v2673
      %v2675 = vpop.f32.mrb[0].mxu0
      %2676 = vdwg.mxu0
      %v2677 = vld [vmem:[#allocation2] sm:$0xff]
      %v2678 = vld [vmem:[#allocation2 + $0x8] sm:$0xff]
      %v2679 = vld [vmem:[#allocation2 + $0x10] sm:$0xff]
      %v2680 = vld [vmem:[#allocation2 + $0x18] sm:$0xff]
      %v2681 = vld [vmem:[#allocation2 + $0x20] sm:$0xff]
      %v2682 = vld [vmem:[#allocation2 + $0x28] sm:$0xff]
      %v2683 = vld [vmem:[#allocation2 + $0x30] sm:$0xff]
      %v2684 = vld [vmem:[#allocation2 + $0x38] sm:$0xff]
      %v2685 = vld [vmem:[#allocation2 + $0x40] sm:$0xff]
      %v2686 = vld [vmem:[#allocation2 + $0x48] sm:$0xff]
      %v2687 = vld [vmem:[#allocation2 + $0x50] sm:$0xff]
      %v2688 = vld [vmem:[#allocation2 + $0x58] sm:$0xff]
      %v2689 = vld [vmem:[#allocation2 + $0x60] sm:$0xff]
      %v2690 = vld [vmem:[#allocation2 + $0x68] sm:$0xff]
      %v2691 = vld [vmem:[#allocation2 + $0x70] sm:$0xff]
      %v2692 = vld [vmem:[#allocation2 + $0x78] sm:$0xff]
      %v2693 = vld [vmem:[#allocation2 + $0x80] sm:$0xff]
      %v2694 = vld [vmem:[#allocation2 + $0x88] sm:$0xff]
      %v2695 = vld [vmem:[#allocation2 + $0x90] sm:$0xff]
      %v2696 = vld [vmem:[#allocation2 + $0x98] sm:$0xff]
      %v2697 = vld [vmem:[#allocation2 + $0xa0] sm:$0xff]
      %v2698 = vld [vmem:[#allocation2 + $0xa8] sm:$0xff]
      %v2699 = vld [vmem:[#allocation2 + $0xb0] sm:$0xff]
      %v2700 = vld [vmem:[#allocation2 + $0xb8] sm:$0xff]
      %v2701 = vld [vmem:[#allocation2 + $0xc0] sm:$0xff]
      %v2702 = vld [vmem:[#allocation2 + $0xc8] sm:$0xff]
      %v2703 = vld [vmem:[#allocation2 + $0xd0] sm:$0xff]
      %v2704 = vld [vmem:[#allocation2 + $0xd8] sm:$0xff]
      %v2705 = vld [vmem:[#allocation2 + $0xe0] sm:$0xff]
      %v2706 = vld [vmem:[#allocation2 + $0xe8] sm:$0xff]
      %v2707 = vld [vmem:[#allocation2 + $0xf0] sm:$0xff]
      %v2708 = vld [vmem:[#allocation2 + $0xf8] sm:$0xff]
      %v2709 = vadd.f32 %v2677, %v2551
      %v2710 = vadd.f32 %v2678, %v2554
      %v2711 = vadd.f32 %v2679, %v2559
      %v2712 = vadd.f32 %v2680, %v2562
      %v2713 = vadd.f32 %v2681, %v2567
      %v2714 = vadd.f32 %v2682, %v2570
      %v2715 = vadd.f32 %v2683, %v2575
      %v2716 = vadd.f32 %v2684, %v2578
      %v2717 = vadd.f32 %v2685, %v2583
      %v2718 = vadd.f32 %v2686, %v2586
      %v2719 = vadd.f32 %v2687, %v2591
      %v2720 = vadd.f32 %v2688, %v2594
      %v2721 = vadd.f32 %v2689, %v2599
      %v2722 = vadd.f32 %v2690, %v2602
      %v2723 = vadd.f32 %v2691, %v2607
      %v2724 = vadd.f32 %v2692, %v2610
      %v2725 = vadd.f32 %v2693, %v2615
      %v2726 = vadd.f32 %v2694, %v2618
      %v2727 = vadd.f32 %v2695, %v2623
      %v2728 = vadd.f32 %v2696, %v2626
      %v2729 = vadd.f32 %v2697, %v2631
      %v2730 = vadd.f32 %v2698, %v2634
      %v2731 = vadd.f32 %v2699, %v2639
      %v2732 = vadd.f32 %v2700, %v2642
      %v2733 = vadd.f32 %v2701, %v2647
      %v2734 = vadd.f32 %v2702, %v2650
      %v2735 = vadd.f32 %v2703, %v2655
      %v2736 = vadd.f32 %v2704, %v2658
      %v2737 = vadd.f32 %v2705, %v2663
      %v2738 = vadd.f32 %v2706, %v2666
      %v2739 = vadd.f32 %v2707, %v2671
      %v2740 = vadd.f32 %v2708, %v2674
      %2741 = vst.msk [vmem:[#allocation2] sm:$0xff] %vm608, %v2709
      %2742 = vst.msk [vmem:[#allocation2 + $0x8] sm:$0xff] %vm608, %v2710
      %2743 = vst.msk [vmem:[#allocation2 + $0x10] sm:$0xff] %vm608, %v2711
      %2744 = vst.msk [vmem:[#allocation2 + $0x18] sm:$0xff] %vm608, %v2712
      %2745 = vst.msk [vmem:[#allocation2 + $0x20] sm:$0xff] %vm608, %v2713
      %2746 = vst.msk [vmem:[#allocation2 + $0x28] sm:$0xff] %vm608, %v2714
      %2747 = vst.msk [vmem:[#allocation2 + $0x30] sm:$0xff] %vm608, %v2715
      %2748 = vst.msk [vmem:[#allocation2 + $0x38] sm:$0xff] %vm608, %v2716
      %2749 = vst.msk [vmem:[#allocation2 + $0x40] sm:$0xff] %vm608, %v2717
      %2750 = vst.msk [vmem:[#allocation2 + $0x48] sm:$0xff] %vm608, %v2718
      %2751 = vst.msk [vmem:[#allocation2 + $0x50] sm:$0xff] %vm608, %v2719
      %2752 = vst.msk [vmem:[#allocation2 + $0x58] sm:$0xff] %vm608, %v2720
      %2753 = vst.msk [vmem:[#allocation2 + $0x60] sm:$0xff] %vm608, %v2721
      %2754 = vst.msk [vmem:[#allocation2 + $0x68] sm:$0xff] %vm608, %v2722
      %2755 = vst.msk [vmem:[#allocation2 + $0x70] sm:$0xff] %vm608, %v2723
      %2756 = vst.msk [vmem:[#allocation2 + $0x78] sm:$0xff] %vm608, %v2724
      %2757 = vst.msk [vmem:[#allocation2 + $0x80] sm:$0xff] %vm608, %v2725
      %2758 = vst.msk [vmem:[#allocation2 + $0x88] sm:$0xff] %vm608, %v2726
      %2759 = vst.msk [vmem:[#allocation2 + $0x90] sm:$0xff] %vm608, %v2727
      %2760 = vst.msk [vmem:[#allocation2 + $0x98] sm:$0xff] %vm608, %v2728
      %2761 = vst.msk [vmem:[#allocation2 + $0xa0] sm:$0xff] %vm608, %v2729
      %2762 = vst.msk [vmem:[#allocation2 + $0xa8] sm:$0xff] %vm608, %v2730
      %2763 = vst.msk [vmem:[#allocation2 + $0xb0] sm:$0xff] %vm608, %v2731
      %2764 = vst.msk [vmem:[#allocation2 + $0xb8] sm:$0xff] %vm608, %v2732
      %2765 = vst.msk [vmem:[#allocation2 + $0xc0] sm:$0xff] %vm608, %v2733
      %2766 = vst.msk [vmem:[#allocation2 + $0xc8] sm:$0xff] %vm608, %v2734
      %2767 = vst.msk [vmem:[#allocation2 + $0xd0] sm:$0xff] %vm608, %v2735
      %2768 = vst.msk [vmem:[#allocation2 + $0xd8] sm:$0xff] %vm608, %v2736
      %2769 = vst.msk [vmem:[#allocation2 + $0xe0] sm:$0xff] %vm608, %v2737
      %2770 = vst.msk [vmem:[#allocation2 + $0xe8] sm:$0xff] %vm608, %v2738
      %2771 = vst.msk [vmem:[#allocation2 + $0xf0] sm:$0xff] %vm608, %v2739
      %2772 = vst.msk [vmem:[#allocation2 + $0xf8] sm:$0xff] %vm608, %v2740
      %s2773 = scalar_lea.vmem %s1, 96
      %v2774 = vld [vmem:[%s2773] sm:$0xf]
      %v2775 = vld [vmem:[%s2773 + $0x4] sm:$0xf]
      %v2776 = vld [vmem:[%s2773 + $0x8] sm:$0xf]
      %v2777 = vld [vmem:[%s2773 + $0xc] sm:$0xf]
      %v2780 = vunpack.c.l.b16 %v299
      %v2781 = vunpack.c.l.b16 %v300
      %v2782 = vpack.c.b16 %v2781, %v2780
      %v2787 = vunpack.c.l.b16 %v2774
      %v2788 = vunpack.c.l.b16 %v2775
      %v2789 = vunpack.c.l.b16 %v2776
      %v2790 = vunpack.c.l.b16 %v2777
      %v2791 = vpack.c.b16 %v2788, %v2787
      %v2792 = vpack.c.b16 %v2790, %v2789
      %v2796 = vsel %vm398, %v2782, 0
      %2798 = vmatprep.subr.bf16.mxu0 0
      %2799 = vmatpush1.bf16.msra.mxu0 %v2791
      %2800 = vmatprep.subr.bf16.mxu0 0
      %2801 = vmatpush1.bf16.msra.mxu0 %v2792
      %2802 = vmatprep.subr.bf16.mxu0 0
      %2803 = vmatpush1.bf16.msra.mxu0 0
      %2804 = vmatprep.subr.bf16.mxu0 0
      %2805 = vmatpush1.bf16.msra.mxu0 0
      %2806 = vmatprep.subr.bf16.mxu0 0
      %2807 = vmatpush1.bf16.msra.mxu0 0
      %2808 = vmatprep.subr.bf16.mxu0 0
      %2809 = vmatpush1.bf16.msra.mxu0 0
      %2810 = vmatprep.subr.bf16.mxu0 0
      %2811 = vmatpush1.bf16.msra.mxu0 0
      %2812 = vmatprep.subr.bf16.mxu0 0
      %2813 = vmatpush1.bf16.msra.mxu0 0
      %2814 = vmatprep.subr.bf16.mxu0 0
      %2815 = vmatpush1.bf16.msra.mxu0 0
      %2816 = vmatprep.subr.bf16.mxu0 0
      %2817 = vmatpush1.bf16.msra.mxu0 0
      %2818 = vmatprep.subr.bf16.mxu0 0
      %2819 = vmatpush1.bf16.msra.mxu0 0
      %2820 = vmatprep.subr.bf16.mxu0 0
      %2821 = vmatpush1.bf16.msra.mxu0 0
      %2822 = vmatprep.subr.bf16.mxu0 0
      %2823 = vmatpush1.bf16.msra.mxu0 0
      %2824 = vmatprep.subr.bf16.mxu0 0
      %2825 = vmatpush1.bf16.msra.mxu0 0
      %2826 = vmatprep.subr.bf16.mxu0 0
      %2827 = vmatpush1.bf16.msra.mxu0 0
      %2828 = vmatprep.subr.bf16.mxu0 0
      %2829 = vmatpush1.bf16.msra.mxu0 0
      %2830 = vmatprep.mubr.bf16.mxu0 0
      %2831 = vmatmul.mubr.bf16.gmra.mrb[0].mxu0 %v406
      %v2832 = vpop.f32.mrb[0].mxu0
      %v2833 = vadd.f32 0.0, %v2832
      %v2834 = vpop.f32.mrb[0].mxu0
      %v2835 = vpop.f32.mrb[0].mxu0
      %v2836 = vadd.f32 0.0, %v2835
      %v2837 = vpop.f32.mrb[0].mxu0
      %2838 = vmatprep.mubr.bf16.mxu0 0
      %2839 = vmatmul.mubr.bf16.gmra.mrb[0].mxu0 %v409
      %v2840 = vpop.f32.mrb[0].mxu0
      %v2841 = vadd.f32 0.0, %v2840
      %v2842 = vpop.f32.mrb[0].mxu0
      %v2843 = vpop.f32.mrb[0].mxu0
      %v2844 = vadd.f32 0.0, %v2843
      %v2845 = vpop.f32.mrb[0].mxu0
      %2846 = vmatprep.mubr.bf16.mxu0 0
      %2847 = vmatmul.mubr.bf16.gmra.mrb[0].mxu0 %v412
      %v2848 = vpop.f32.mrb[0].mxu0
      %v2849 = vadd.f32 0.0, %v2848
      %v2850 = vpop.f32.mrb[0].mxu0
      %v2851 = vpop.f32.mrb[0].mxu0
      %v2852 = vadd.f32 0.0, %v2851
      %v2853 = vpop.f32.mrb[0].mxu0
      %2854 = vmatprep.mubr.bf16.mxu0 0
      %2855 = vmatmul.mubr.bf16.gmra.mrb[0].mxu0 %v415
      %v2856 = vpop.f32.mrb[0].mxu0
      %v2857 = vadd.f32 0.0, %v2856
      %v2858 = vpop.f32.mrb[0].mxu0
      %v2859 = vpop.f32.mrb[0].mxu0
      %v2860 = vadd.f32 0.0, %v2859
      %v2861 = vpop.f32.mrb[0].mxu0
      %2862 = vmatprep.mubr.bf16.mxu0 0
      %2863 = vmatmul.mubr.bf16.gmra.mrb[0].mxu0 %v418
      %v2864 = vpop.f32.mrb[0].mxu0
      %v2865 = vadd.f32 0.0, %v2864
      %v2866 = vpop.f32.mrb[0].mxu0
      %v2867 = vpop.f32.mrb[0].mxu0
      %v2868 = vadd.f32 0.0, %v2867
      %v2869 = vpop.f32.mrb[0].mxu0
      %2870 = vmatprep.mubr.bf16.mxu0 0
      %2871 = vmatmul.mubr.bf16.gmra.mrb[0].mxu0 %v421
      %v2872 = vpop.f32.mrb[0].mxu0
      %v2873 = vadd.f32 0.0, %v2872
      %v2874 = vpop.f32.mrb[0].mxu0
      %v2875 = vpop.f32.mrb[0].mxu0
      %v2876 = vadd.f32 0.0, %v2875
      %v2877 = vpop.f32.mrb[0].mxu0
      %2878 = vmatprep.mubr.bf16.mxu0 0
      %2879 = vmatmul.mubr.bf16.gmra.mrb[0].mxu0 %v424
      %v2880 = vpop.f32.mrb[0].mxu0
      %v2881 = vadd.f32 0.0, %v2880
      %v2882 = vpop.f32.mrb[0].mxu0
      %v2883 = vpop.f32.mrb[0].mxu0
      %v2884 = vadd.f32 0.0, %v2883
      %v2885 = vpop.f32.mrb[0].mxu0
      %2886 = vmatprep.mubr.bf16.mxu0 0
      %2887 = vmatmul.mubr.bf16.gmra.mrb[0].mxu0 %v427
      %v2888 = vpop.f32.mrb[0].mxu0
      %v2889 = vadd.f32 0.0, %v2888
      %v2890 = vpop.f32.mrb[0].mxu0
      %v2891 = vpop.f32.mrb[0].mxu0
      %v2892 = vadd.f32 0.0, %v2891
      %v2893 = vpop.f32.mrb[0].mxu0
      %2894 = vmatprep.mubr.bf16.mxu0 0
      %2895 = vmatmul.mubr.bf16.gmra.mrb[0].mxu0 %v430
      %v2896 = vpop.f32.mrb[0].mxu0
      %v2897 = vadd.f32 0.0, %v2896
      %v2898 = vpop.f32.mrb[0].mxu0
      %v2899 = vpop.f32.mrb[0].mxu0
      %v2900 = vadd.f32 0.0, %v2899
      %v2901 = vpop.f32.mrb[0].mxu0
      %2902 = vmatprep.mubr.bf16.mxu0 0
      %2903 = vmatmul.mubr.bf16.gmra.mrb[0].mxu0 %v433
      %v2904 = vpop.f32.mrb[0].mxu0
      %v2905 = vadd.f32 0.0, %v2904
      %v2906 = vpop.f32.mrb[0].mxu0
      %v2907 = vpop.f32.mrb[0].mxu0
      %v2908 = vadd.f32 0.0, %v2907
      %v2909 = vpop.f32.mrb[0].mxu0
      %2910 = vmatprep.mubr.bf16.mxu0 0
      %2911 = vmatmul.mubr.bf16.gmra.mrb[0].mxu0 %v436
      %v2912 = vpop.f32.mrb[0].mxu0
      %v2913 = vadd.f32 0.0, %v2912
      %v2914 = vpop.f32.mrb[0].mxu0
      %v2915 = vpop.f32.mrb[0].mxu0
      %v2916 = vadd.f32 0.0, %v2915
      %v2917 = vpop.f32.mrb[0].mxu0
      %2918 = vmatprep.mubr.bf16.mxu0 0
      %2919 = vmatmul.mubr.bf16.gmra.mrb[0].mxu0 %v439
      %v2920 = vpop.f32.mrb[0].mxu0
      %v2921 = vadd.f32 0.0, %v2920
      %v2922 = vpop.f32.mrb[0].mxu0
      %v2923 = vpop.f32.mrb[0].mxu0
      %v2924 = vadd.f32 0.0, %v2923
      %v2925 = vpop.f32.mrb[0].mxu0
      %2926 = vmatprep.mubr.bf16.mxu0 0
      %2927 = vmatmul.mubr.bf16.gmra.mrb[0].mxu0 %v442
      %v2928 = vpop.f32.mrb[0].mxu0
      %v2929 = vadd.f32 0.0, %v2928
      %v2930 = vpop.f32.mrb[0].mxu0
      %v2931 = vpop.f32.mrb[0].mxu0
      %v2932 = vadd.f32 0.0, %v2931
      %v2933 = vpop.f32.mrb[0].mxu0
      %2934 = vmatprep.mubr.bf16.mxu0 0
      %2935 = vmatmul.mubr.bf16.gmra.mrb[0].mxu0 %v445
      %v2936 = vpop.f32.mrb[0].mxu0
      %v2937 = vadd.f32 0.0, %v2936
      %v2938 = vpop.f32.mrb[0].mxu0
      %v2939 = vpop.f32.mrb[0].mxu0
      %v2940 = vadd.f32 0.0, %v2939
      %v2941 = vpop.f32.mrb[0].mxu0
      %2942 = vmatprep.mubr.bf16.mxu0 0
      %2943 = vmatmul.mubr.bf16.gmra.mrb[0].mxu0 %v1922
      %v2944 = vpop.f32.mrb[0].mxu0
      %v2945 = vadd.f32 0.0, %v2944
      %v2946 = vpop.f32.mrb[0].mxu0
      %v2947 = vpop.f32.mrb[0].mxu0
      %v2948 = vadd.f32 0.0, %v2947
      %v2949 = vpop.f32.mrb[0].mxu0
      %2950 = vmatprep.mubr.bf16.mxu0 0
      %2951 = vmatmul.mubr.bf16.gmra.mrb[0].mxu0 %v2796
      %v2952 = vpop.f32.mrb[0].mxu0
      %v2953 = vadd.f32 0.0, %v2952
      %v2954 = vpop.f32.mrb[0].mxu0
      %v2955 = vpop.f32.mrb[0].mxu0
      %v2956 = vadd.f32 0.0, %v2955
      %v2957 = vpop.f32.mrb[0].mxu0
      %2958 = vdwg.mxu0
      %v2959 = vld [vmem:[#allocation2] sm:$0xff]
      %v2960 = vld [vmem:[#allocation2 + $0x8] sm:$0xff]
      %v2961 = vld [vmem:[#allocation2 + $0x10] sm:$0xff]
      %v2962 = vld [vmem:[#allocation2 + $0x18] sm:$0xff]
      %v2963 = vld [vmem:[#allocation2 + $0x20] sm:$0xff]
      %v2964 = vld [vmem:[#allocation2 + $0x28] sm:$0xff]
      %v2965 = vld [vmem:[#allocation2 + $0x30] sm:$0xff]
      %v2966 = vld [vmem:[#allocation2 + $0x38] sm:$0xff]
      %v2967 = vld [vmem:[#allocation2 + $0x40] sm:$0xff]
      %v2968 = vld [vmem:[#allocation2 + $0x48] sm:$0xff]
      %v2969 = vld [vmem:[#allocation2 + $0x50] sm:$0xff]
      %v2970 = vld [vmem:[#allocation2 + $0x58] sm:$0xff]
      %v2971 = vld [vmem:[#allocation2 + $0x60] sm:$0xff]
      %v2972 = vld [vmem:[#allocation2 + $0x68] sm:$0xff]
      %v2973 = vld [vmem:[#allocation2 + $0x70] sm:$0xff]
      %v2974 = vld [vmem:[#allocation2 + $0x78] sm:$0xff]
      %v2975 = vld [vmem:[#allocation2 + $0x80] sm:$0xff]
      %v2976 = vld [vmem:[#allocation2 + $0x88] sm:$0xff]
      %v2977 = vld [vmem:[#allocation2 + $0x90] sm:$0xff]
      %v2978 = vld [vmem:[#allocation2 + $0x98] sm:$0xff]
      %v2979 = vld [vmem:[#allocation2 + $0xa0] sm:$0xff]
      %v2980 = vld [vmem:[#allocation2 + $0xa8] sm:$0xff]
      %v2981 = vld [vmem:[#allocation2 + $0xb0] sm:$0xff]
      %v2982 = vld [vmem:[#allocation2 + $0xb8] sm:$0xff]
      %v2983 = vld [vmem:[#allocation2 + $0xc0] sm:$0xff]
      %v2984 = vld [vmem:[#allocation2 + $0xc8] sm:$0xff]
      %v2985 = vld [vmem:[#allocation2 + $0xd0] sm:$0xff]
      %v2986 = vld [vmem:[#allocation2 + $0xd8] sm:$0xff]
      %v2987 = vld [vmem:[#allocation2 + $0xe0] sm:$0xff]
      %v2988 = vld [vmem:[#allocation2 + $0xe8] sm:$0xff]
      %v2989 = vld [vmem:[#allocation2 + $0xf0] sm:$0xff]
      %v2990 = vld [vmem:[#allocation2 + $0xf8] sm:$0xff]
      %v2991 = vadd.f32 %v2959, %v2833
      %v2992 = vadd.f32 %v2960, %v2836
      %v2993 = vadd.f32 %v2961, %v2841
      %v2994 = vadd.f32 %v2962, %v2844
      %v2995 = vadd.f32 %v2963, %v2849
      %v2996 = vadd.f32 %v2964, %v2852
      %v2997 = vadd.f32 %v2965, %v2857
      %v2998 = vadd.f32 %v2966, %v2860
      %v2999 = vadd.f32 %v2967, %v2865
      %v3000 = vadd.f32 %v2968, %v2868
      %v3001 = vadd.f32 %v2969, %v2873
      %v3002 = vadd.f32 %v2970, %v2876
      %v3003 = vadd.f32 %v2971, %v2881
      %v3004 = vadd.f32 %v2972, %v2884
      %v3005 = vadd.f32 %v2973, %v2889
      %v3006 = vadd.f32 %v2974, %v2892
      %v3007 = vadd.f32 %v2975, %v2897
      %v3008 = vadd.f32 %v2976, %v2900
      %v3009 = vadd.f32 %v2977, %v2905
      %v3010 = vadd.f32 %v2978, %v2908
      %v3011 = vadd.f32 %v2979, %v2913
      %v3012 = vadd.f32 %v2980, %v2916
      %v3013 = vadd.f32 %v2981, %v2921
      %v3014 = vadd.f32 %v2982, %v2924
      %v3015 = vadd.f32 %v2983, %v2929
      %v3016 = vadd.f32 %v2984, %v2932
      %v3017 = vadd.f32 %v2985, %v2937
      %v3018 = vadd.f32 %v2986, %v2940
      %v3019 = vadd.f32 %v2987, %v2945
      %v3020 = vadd.f32 %v2988, %v2948
      %v3021 = vadd.f32 %v2989, %v2953
      %v3022 = vadd.f32 %v2990, %v2956
      %3023 = vst.msk [vmem:[#allocation2] sm:$0xff] %vm608, %v2991
      %3024 = vst.msk [vmem:[#allocation2 + $0x8] sm:$0xff] %vm608, %v2992
      %3025 = vst.msk [vmem:[#allocation2 + $0x10] sm:$0xff] %vm608, %v2993
      %3026 = vst.msk [vmem:[#allocation2 + $0x18] sm:$0xff] %vm608, %v2994
      %3027 = vst.msk [vmem:[#allocation2 + $0x20] sm:$0xff] %vm608, %v2995
      %3028 = vst.msk [vmem:[#allocation2 + $0x28] sm:$0xff] %vm608, %v2996
      %3029 = vst.msk [vmem:[#allocation2 + $0x30] sm:$0xff] %vm608, %v2997
      %3030 = vst.msk [vmem:[#allocation2 + $0x38] sm:$0xff] %vm608, %v2998
      %3031 = vst.msk [vmem:[#allocation2 + $0x40] sm:$0xff] %vm608, %v2999
      %3032 = vst.msk [vmem:[#allocation2 + $0x48] sm:$0xff] %vm608, %v3000
      %3033 = vst.msk [vmem:[#allocation2 + $0x50] sm:$0xff] %vm608, %v3001
      %3034 = vst.msk [vmem:[#allocation2 + $0x58] sm:$0xff] %vm608, %v3002
      %3035 = vst.msk [vmem:[#allocation2 + $0x60] sm:$0xff] %vm608, %v3003
      %3036 = vst.msk [vmem:[#allocation2 + $0x68] sm:$0xff] %vm608, %v3004
      %3037 = vst.msk [vmem:[#allocation2 + $0x70] sm:$0xff] %vm608, %v3005
      %3038 = vst.msk [vmem:[#allocation2 + $0x78] sm:$0xff] %vm608, %v3006
      %3039 = vst.msk [vmem:[#allocation2 + $0x80] sm:$0xff] %vm608, %v3007
      %3040 = vst.msk [vmem:[#allocation2 + $0x88] sm:$0xff] %vm608, %v3008
      %3041 = vst.msk [vmem:[#allocation2 + $0x90] sm:$0xff] %vm608, %v3009
      %3042 = vst.msk [vmem:[#allocation2 + $0x98] sm:$0xff] %vm608, %v3010
      %3043 = vst.msk [vmem:[#allocation2 + $0xa0] sm:$0xff] %vm608, %v3011
      %3044 = vst.msk [vmem:[#allocation2 + $0xa8] sm:$0xff] %vm608, %v3012
      %3045 = vst.msk [vmem:[#allocation2 + $0xb0] sm:$0xff] %vm608, %v3013
      %3046 = vst.msk [vmem:[#allocation2 + $0xb8] sm:$0xff] %vm608, %v3014
      %3047 = vst.msk [vmem:[#allocation2 + $0xc0] sm:$0xff] %vm608, %v3015
      %3048 = vst.msk [vmem:[#allocation2 + $0xc8] sm:$0xff] %vm608, %v3016
      %3049 = vst.msk [vmem:[#allocation2 + $0xd0] sm:$0xff] %vm608, %v3017
      %3050 = vst.msk [vmem:[#allocation2 + $0xd8] sm:$0xff] %vm608, %v3018
      %3051 = vst.msk [vmem:[#allocation2 + $0xe0] sm:$0xff] %vm608, %v3019
      %3052 = vst.msk [vmem:[#allocation2 + $0xe8] sm:$0xff] %vm608, %v3020
      %3053 = vst.msk [vmem:[#allocation2 + $0xf0] sm:$0xff] %vm608, %v3021
      %3054 = vst.msk [vmem:[#allocation2 + $0xf8] sm:$0xff] %vm608, %v3022
      %v3056 = vshrl.u32 %v299, 16
      %v3058 = vrot.slane %v3056, 4
      %v3059 = vshll.u32 %v299, 16
      %v3061 = vrot.slane %v3059, 5
      %v3062 = vor.u32 %v3058, %v3061
      %v3063 = vrot.slane %v3062, 4
      %v3065 = vshll.u32 %v300, 16
      %v3067 = vrot.slane %v3065, 5
      %v3068 = vsel %vm643, %v3063, %v3067
      %v3069 = vshrl.u32 %v300, 16
      %v3071 = vrot.slane %v3069, 4
      %v3072 = vor.u32 %v3071, %v3067
      %v3073 = vrot.slane %v3072, 4
      %v3075 = vshll.u32 %v301, 16
      %v3077 = vrot.slane %v3075, 5
      %v3078 = vsel %vm643, %v3073, %v3077
      %s3079 = scalar_lea.vmem %s1, 112
      %v3080 = vld [vmem:[%s3079] sm:$0xf]
      %v3081 = vld [vmem:[%s3079 + $0x4] sm:$0xf]
      %v3082 = vld [vmem:[%s3079 + $0x8] sm:$0xf]
      %v3083 = vld [vmem:[%s3079 + $0xc] sm:$0xf]
      %v3084 = vunpack.c.l.b16 %v3068
      %v3085 = vunpack.c.l.b16 %v3078
      %v3086 = vpack.c.b16 %v3085, %v3084
      %v3091 = vunpack.c.l.b16 %v3080
      %v3092 = vunpack.c.l.b16 %v3081
      %v3093 = vunpack.c.l.b16 %v3082
      %v3094 = vunpack.c.l.b16 %v3083
      %v3095 = vpack.c.b16 %v3092, %v3091
      %v3096 = vpack.c.b16 %v3094, %v3093
      %v3100 = vsel %vm398, %v3086, 0
      %3102 = vmatprep.subr.bf16.mxu0 0
      %3103 = vmatpush1.bf16.msra.mxu0 %v3095
      %3104 = vmatprep.subr.bf16.mxu0 0
      %3105 = vmatpush1.bf16.msra.mxu0 %v3096
      %3106 = vmatprep.subr.bf16.mxu0 0
      %3107 = vmatpush1.bf16.msra.mxu0 0
      %3108 = vmatprep.subr.bf16.mxu0 0
      %3109 = vmatpush1.bf16.msra.mxu0 0
      %3110 = vmatprep.subr.bf16.mxu0 0
      %3111 = vmatpush1.bf16.msra.mxu0 0
      %3112 = vmatprep.subr.bf16.mxu0 0
      %3113 = vmatpush1.bf16.msra.mxu0 0
      %3114 = vmatprep.subr.bf16.mxu0 0
      %3115 = vmatpush1.bf16.msra.mxu0 0
      %3116 = vmatprep.subr.bf16.mxu0 0
      %3117 = vmatpush1.bf16.msra.mxu0 0
      %3118 = vmatprep.subr.bf16.mxu0 0
      %3119 = vmatpush1.bf16.msra.mxu0 0
      %3120 = vmatprep.subr.bf16.mxu0 0
      %3121 = vmatpush1.bf16.msra.mxu0 0
      %3122 = vmatprep.subr.bf16.mxu0 0
      %3123 = vmatpush1.bf16.msra.mxu0 0
      %3124 = vmatprep.subr.bf16.mxu0 0
      %3125 = vmatpush1.bf16.msra.mxu0 0
      %3126 = vmatprep.subr.bf16.mxu0 0
      %3127 = vmatpush1.bf16.msra.mxu0 0
      %3128 = vmatprep.subr.bf16.mxu0 0
      %3129 = vmatpush1.bf16.msra.mxu0 0
      %3130 = vmatprep.subr.bf16.mxu0 0
      %3131 = vmatpush1.bf16.msra.mxu0 0
      %3132 = vmatprep.subr.bf16.mxu0 0
      %3133 = vmatpush1.bf16.msra.mxu0 0
      %3134 = vmatprep.mubr.bf16.mxu0 0
      %3135 = vmatmul.mubr.bf16.gmra.mrb[0].mxu0 %v1100
      %v3136 = vpop.f32.mrb[0].mxu0
      %v3137 = vadd.f32 0.0, %v3136
      %v3138 = vpop.f32.mrb[0].mxu0
      %v3139 = vpop.f32.mrb[0].mxu0
      %v3140 = vadd.f32 0.0, %v3139
      %v3141 = vpop.f32.mrb[0].mxu0
      %3142 = vmatprep.mubr.bf16.mxu0 0
      %3143 = vmatmul.mubr.bf16.gmra.mrb[0].mxu0 %v1103
      %v3144 = vpop.f32.mrb[0].mxu0
      %v3145 = vadd.f32 0.0, %v3144
      %v3146 = vpop.f32.mrb[0].mxu0
      %v3147 = vpop.f32.mrb[0].mxu0
      %v3148 = vadd.f32 0.0, %v3147
      %v3149 = vpop.f32.mrb[0].mxu0
      %3150 = vmatprep.mubr.bf16.mxu0 0
      %3151 = vmatmul.mubr.bf16.gmra.mrb[0].mxu0 %v1106
      %v3152 = vpop.f32.mrb[0].mxu0
      %v3153 = vadd.f32 0.0, %v3152
      %v3154 = vpop.f32.mrb[0].mxu0
      %v3155 = vpop.f32.mrb[0].mxu0
      %v3156 = vadd.f32 0.0, %v3155
      %v3157 = vpop.f32.mrb[0].mxu0
      %3158 = vmatprep.mubr.bf16.mxu0 0
      %3159 = vmatmul.mubr.bf16.gmra.mrb[0].mxu0 %v1109
      %v3160 = vpop.f32.mrb[0].mxu0
      %v3161 = vadd.f32 0.0, %v3160
      %v3162 = vpop.f32.mrb[0].mxu0
      %v3163 = vpop.f32.mrb[0].mxu0
      %v3164 = vadd.f32 0.0, %v3163
      %v3165 = vpop.f32.mrb[0].mxu0
      %3166 = vmatprep.mubr.bf16.mxu0 0
      %3167 = vmatmul.mubr.bf16.gmra.mrb[0].mxu0 %v1112
      %v3168 = vpop.f32.mrb[0].mxu0
      %v3169 = vadd.f32 0.0, %v3168
      %v3170 = vpop.f32.mrb[0].mxu0
      %v3171 = vpop.f32.mrb[0].mxu0
      %v3172 = vadd.f32 0.0, %v3171
      %v3173 = vpop.f32.mrb[0].mxu0
      %3174 = vmatprep.mubr.bf16.mxu0 0
      %3175 = vmatmul.mubr.bf16.gmra.mrb[0].mxu0 %v1115
      %v3176 = vpop.f32.mrb[0].mxu0
      %v3177 = vadd.f32 0.0, %v3176
      %v3178 = vpop.f32.mrb[0].mxu0
      %v3179 = vpop.f32.mrb[0].mxu0
      %v3180 = vadd.f32 0.0, %v3179
      %v3181 = vpop.f32.mrb[0].mxu0
      %3182 = vmatprep.mubr.bf16.mxu0 0
      %3183 = vmatmul.mubr.bf16.gmra.mrb[0].mxu0 %v1118
      %v3184 = vpop.f32.mrb[0].mxu0
      %v3185 = vadd.f32 0.0, %v3184
      %v3186 = vpop.f32.mrb[0].mxu0
      %v3187 = vpop.f32.mrb[0].mxu0
      %v3188 = vadd.f32 0.0, %v3187
      %v3189 = vpop.f32.mrb[0].mxu0
      %3190 = vmatprep.mubr.bf16.mxu0 0
      %3191 = vmatmul.mubr.bf16.gmra.mrb[0].mxu0 %v1121
      %v3192 = vpop.f32.mrb[0].mxu0
      %v3193 = vadd.f32 0.0, %v3192
      %v3194 = vpop.f32.mrb[0].mxu0
      %v3195 = vpop.f32.mrb[0].mxu0
      %v3196 = vadd.f32 0.0, %v3195
      %v3197 = vpop.f32.mrb[0].mxu0
      %3198 = vmatprep.mubr.bf16.mxu0 0
      %3199 = vmatmul.mubr.bf16.gmra.mrb[0].mxu0 %v1124
      %v3200 = vpop.f32.mrb[0].mxu0
      %v3201 = vadd.f32 0.0, %v3200
      %v3202 = vpop.f32.mrb[0].mxu0
      %v3203 = vpop.f32.mrb[0].mxu0
      %v3204 = vadd.f32 0.0, %v3203
      %v3205 = vpop.f32.mrb[0].mxu0
      %3206 = vmatprep.mubr.bf16.mxu0 0
      %3207 = vmatmul.mubr.bf16.gmra.mrb[0].mxu0 %v1127
      %v3208 = vpop.f32.mrb[0].mxu0
      %v3209 = vadd.f32 0.0, %v3208
      %v3210 = vpop.f32.mrb[0].mxu0
      %v3211 = vpop.f32.mrb[0].mxu0
      %v3212 = vadd.f32 0.0, %v3211
      %v3213 = vpop.f32.mrb[0].mxu0
      %3214 = vmatprep.mubr.bf16.mxu0 0
      %3215 = vmatmul.mubr.bf16.gmra.mrb[0].mxu0 %v1130
      %v3216 = vpop.f32.mrb[0].mxu0
      %v3217 = vadd.f32 0.0, %v3216
      %v3218 = vpop.f32.mrb[0].mxu0
      %v3219 = vpop.f32.mrb[0].mxu0
      %v3220 = vadd.f32 0.0, %v3219
      %v3221 = vpop.f32.mrb[0].mxu0
      %3222 = vmatprep.mubr.bf16.mxu0 0
      %3223 = vmatmul.mubr.bf16.gmra.mrb[0].mxu0 %v1133
      %v3224 = vpop.f32.mrb[0].mxu0
      %v3225 = vadd.f32 0.0, %v3224
      %v3226 = vpop.f32.mrb[0].mxu0
      %v3227 = vpop.f32.mrb[0].mxu0
      %v3228 = vadd.f32 0.0, %v3227
      %v3229 = vpop.f32.mrb[0].mxu0
      %3230 = vmatprep.mubr.bf16.mxu0 0
      %3231 = vmatmul.mubr.bf16.gmra.mrb[0].mxu0 %v1136
      %v3232 = vpop.f32.mrb[0].mxu0
      %v3233 = vadd.f32 0.0, %v3232
      %v3234 = vpop.f32.mrb[0].mxu0
      %v3235 = vpop.f32.mrb[0].mxu0
      %v3236 = vadd.f32 0.0, %v3235
      %v3237 = vpop.f32.mrb[0].mxu0
      %3238 = vmatprep.mubr.bf16.mxu0 0
      %3239 = vmatmul.mubr.bf16.gmra.mrb[0].mxu0 %v1139
      %v3240 = vpop.f32.mrb[0].mxu0
      %v3241 = vadd.f32 0.0, %v3240
      %v3242 = vpop.f32.mrb[0].mxu0
      %v3243 = vpop.f32.mrb[0].mxu0
      %v3244 = vadd.f32 0.0, %v3243
      %v3245 = vpop.f32.mrb[0].mxu0
      %3246 = vmatprep.mubr.bf16.mxu0 0
      %3247 = vmatmul.mubr.bf16.gmra.mrb[0].mxu0 %v2226
      %v3248 = vpop.f32.mrb[0].mxu0
      %v3249 = vadd.f32 0.0, %v3248
      %v3250 = vpop.f32.mrb[0].mxu0
      %v3251 = vpop.f32.mrb[0].mxu0
      %v3252 = vadd.f32 0.0, %v3251
      %v3253 = vpop.f32.mrb[0].mxu0
      %3254 = vmatprep.mubr.bf16.mxu0 0
      %3255 = vmatmul.mubr.bf16.gmra.mrb[0].mxu0 %v3100
      %v3256 = vpop.f32.mrb[0].mxu0
      %v3257 = vadd.f32 0.0, %v3256
      %v3258 = vpop.f32.mrb[0].mxu0
      %v3259 = vpop.f32.mrb[0].mxu0
      %v3260 = vadd.f32 0.0, %v3259
      %v3261 = vpop.f32.mrb[0].mxu0
      %3262 = vdwg.mxu0
      %v3263 = vld [vmem:[#allocation2] sm:$0xff]
      %v3264 = vld [vmem:[#allocation2 + $0x8] sm:$0xff]
      %v3265 = vld [vmem:[#allocation2 + $0x10] sm:$0xff]
      %v3266 = vld [vmem:[#allocation2 + $0x18] sm:$0xff]
      %v3267 = vld [vmem:[#allocation2 + $0x20] sm:$0xff]
      %v3268 = vld [vmem:[#allocation2 + $0x28] sm:$0xff]
      %v3269 = vld [vmem:[#allocation2 + $0x30] sm:$0xff]
      %v3270 = vld [vmem:[#allocation2 + $0x38] sm:$0xff]
      %v3271 = vld [vmem:[#allocation2 + $0x40] sm:$0xff]
      %v3272 = vld [vmem:[#allocation2 + $0x48] sm:$0xff]
      %v3273 = vld [vmem:[#allocation2 + $0x50] sm:$0xff]
      %v3274 = vld [vmem:[#allocation2 + $0x58] sm:$0xff]
      %v3275 = vld [vmem:[#allocation2 + $0x60] sm:$0xff]
      %v3276 = vld [vmem:[#allocation2 + $0x68] sm:$0xff]
      %v3277 = vld [vmem:[#allocation2 + $0x70] sm:$0xff]
      %v3278 = vld [vmem:[#allocation2 + $0x78] sm:$0xff]
      %v3279 = vld [vmem:[#allocation2 + $0x80] sm:$0xff]
      %v3280 = vld [vmem:[#allocation2 + $0x88] sm:$0xff]
      %v3281 = vld [vmem:[#allocation2 + $0x90] sm:$0xff]
      %v3282 = vld [vmem:[#allocation2 + $0x98] sm:$0xff]
      %v3283 = vld [vmem:[#allocation2 + $0xa0] sm:$0xff]
      %v3284 = vld [vmem:[#allocation2 + $0xa8] sm:$0xff]
      %v3285 = vld [vmem:[#allocation2 + $0xb0] sm:$0xff]
      %v3286 = vld [vmem:[#allocation2 + $0xb8] sm:$0xff]
      %v3287 = vld [vmem:[#allocation2 + $0xc0] sm:$0xff]
      %v3288 = vld [vmem:[#allocation2 + $0xc8] sm:$0xff]
      %v3289 = vld [vmem:[#allocation2 + $0xd0] sm:$0xff]
      %v3290 = vld [vmem:[#allocation2 + $0xd8] sm:$0xff]
      %v3291 = vld [vmem:[#allocation2 + $0xe0] sm:$0xff]
      %v3292 = vld [vmem:[#allocation2 + $0xe8] sm:$0xff]
      %v3293 = vld [vmem:[#allocation2 + $0xf0] sm:$0xff]
      %v3294 = vld [vmem:[#allocation2 + $0xf8] sm:$0xff]
      %v3295 = vadd.f32 %v3263, %v3137
      %v3296 = vadd.f32 %v3264, %v3140
      %v3297 = vadd.f32 %v3265, %v3145
      %v3298 = vadd.f32 %v3266, %v3148
      %v3299 = vadd.f32 %v3267, %v3153
      %v3300 = vadd.f32 %v3268, %v3156
      %v3301 = vadd.f32 %v3269, %v3161
      %v3302 = vadd.f32 %v3270, %v3164
      %v3303 = vadd.f32 %v3271, %v3169
      %v3304 = vadd.f32 %v3272, %v3172
      %v3305 = vadd.f32 %v3273, %v3177
      %v3306 = vadd.f32 %v3274, %v3180
      %v3307 = vadd.f32 %v3275, %v3185
      %v3308 = vadd.f32 %v3276, %v3188
      %v3309 = vadd.f32 %v3277, %v3193
      %v3310 = vadd.f32 %v3278, %v3196
      %v3311 = vadd.f32 %v3279, %v3201
      %v3312 = vadd.f32 %v3280, %v3204
      %v3313 = vadd.f32 %v3281, %v3209
      %v3314 = vadd.f32 %v3282, %v3212
      %v3315 = vadd.f32 %v3283, %v3217
      %v3316 = vadd.f32 %v3284, %v3220
      %v3317 = vadd.f32 %v3285, %v3225
      %v3318 = vadd.f32 %v3286, %v3228
      %v3319 = vadd.f32 %v3287, %v3233
      %v3320 = vadd.f32 %v3288, %v3236
      %v3321 = vadd.f32 %v3289, %v3241
      %v3322 = vadd.f32 %v3290, %v3244
      %v3323 = vadd.f32 %v3291, %v3249
      %v3324 = vadd.f32 %v3292, %v3252
      %v3325 = vadd.f32 %v3293, %v3257
      %v3326 = vadd.f32 %v3294, %v3260
      %3327 = vst.msk [vmem:[#allocation2] sm:$0xff] %vm608, %v3295
      %3328 = vst.msk [vmem:[#allocation2 + $0x8] sm:$0xff] %vm608, %v3296
      %3329 = vst.msk [vmem:[#allocation2 + $0x10] sm:$0xff] %vm608, %v3297
      %3330 = vst.msk [vmem:[#allocation2 + $0x18] sm:$0xff] %vm608, %v3298
      %3331 = vst.msk [vmem:[#allocation2 + $0x20] sm:$0xff] %vm608, %v3299
      %3332 = vst.msk [vmem:[#allocation2 + $0x28] sm:$0xff] %vm608, %v3300
      %3333 = vst.msk [vmem:[#allocation2 + $0x30] sm:$0xff] %vm608, %v3301
      %3334 = vst.msk [vmem:[#allocation2 + $0x38] sm:$0xff] %vm608, %v3302
      %3335 = vst.msk [vmem:[#allocation2 + $0x40] sm:$0xff] %vm608, %v3303
      %3336 = vst.msk [vmem:[#allocation2 + $0x48] sm:$0xff] %vm608, %v3304
      %3337 = vst.msk [vmem:[#allocation2 + $0x50] sm:$0xff] %vm608, %v3305
      %3338 = vst.msk [vmem:[#allocation2 + $0x58] sm:$0xff] %vm608, %v3306
      %3339 = vst.msk [vmem:[#allocation2 + $0x60] sm:$0xff] %vm608, %v3307
      %3340 = vst.msk [vmem:[#allocation2 + $0x68] sm:$0xff] %vm608, %v3308
      %3341 = vst.msk [vmem:[#allocation2 + $0x70] sm:$0xff] %vm608, %v3309
      %3342 = vst.msk [vmem:[#allocation2 + $0x78] sm:$0xff] %vm608, %v3310
      %3343 = vst.msk [vmem:[#allocation2 + $0x80] sm:$0xff] %vm608, %v3311
      %3344 = vst.msk [vmem:[#allocation2 + $0x88] sm:$0xff] %vm608, %v3312
      %3345 = vst.msk [vmem:[#allocation2 + $0x90] sm:$0xff] %vm608, %v3313
      %3346 = vst.msk [vmem:[#allocation2 + $0x98] sm:$0xff] %vm608, %v3314
      %3347 = vst.msk [vmem:[#allocation2 + $0xa0] sm:$0xff] %vm608, %v3315
      %3348 = vst.msk [vmem:[#allocation2 + $0xa8] sm:$0xff] %vm608, %v3316
      %3349 = vst.msk [vmem:[#allocation2 + $0xb0] sm:$0xff] %vm608, %v3317
      %3350 = vst.msk [vmem:[#allocation2 + $0xb8] sm:$0xff] %vm608, %v3318
      %3351 = vst.msk [vmem:[#allocation2 + $0xc0] sm:$0xff] %vm608, %v3319
      %3352 = vst.msk [vmem:[#allocation2 + $0xc8] sm:$0xff] %vm608, %v3320
      %3353 = vst.msk [vmem:[#allocation2 + $0xd0] sm:$0xff] %vm608, %v3321
      %3354 = vst.msk [vmem:[#allocation2 + $0xd8] sm:$0xff] %vm608, %v3322
      %3355 = vst.msk [vmem:[#allocation2 + $0xe0] sm:$0xff] %vm608, %v3323
      %3356 = vst.msk [vmem:[#allocation2 + $0xe8] sm:$0xff] %vm608, %v3324
      %3357 = vst.msk [vmem:[#allocation2 + $0xf0] sm:$0xff] %vm608, %v3325
      %3358 = vst.msk [vmem:[#allocation2 + $0xf8] sm:$0xff] %vm608, %v3326
      %v3360 = vrot.slane %v299, 5
      %v3361 = vrot.slane %v3360, 4
      %v3362 = vrot.slane %v300, 5
      %v3363 = vsel %vm1416, %v3361, %v3362
      %v3364 = vrot.slane %v3362, 4
      %v3365 = vrot.slane %v301, 5
      %v3366 = vsel %vm1416, %v3364, %v3365
      %s3367 = scalar_lea.vmem %s1, 128
      %v3368 = vld [vmem:[%s3367] sm:$0xf]
      %v3369 = vld [vmem:[%s3367 + $0x4] sm:$0xf]
      %v3370 = vld [vmem:[%s3367 + $0x8] sm:$0xf]
      %v3371 = vld [vmem:[%s3367 + $0xc] sm:$0xf]
      %v3372 = vunpack.c.l.b16 %v3363
      %v3373 = vunpack.c.l.b16 %v3366
      %v3374 = vpack.c.b16 %v3373, %v3372
      %v3379 = vunpack.c.l.b16 %v3368
      %v3380 = vunpack.c.l.b16 %v3369
      %v3381 = vunpack.c.l.b16 %v3370
      %v3382 = vunpack.c.l.b16 %v3371
      %v3383 = vpack.c.b16 %v3380, %v3379
      %v3384 = vpack.c.b16 %v3382, %v3381
      %v3388 = vsel %vm398, %v3374, 0
      %3390 = vmatprep.subr.bf16.mxu0 0
      %3391 = vmatpush1.bf16.msra.mxu0 %v3383
      %3392 = vmatprep.subr.bf16.mxu0 0
      %3393 = vmatpush1.bf16.msra.mxu0 %v3384
      %3394 = vmatprep.subr.bf16.mxu0 0
      %3395 = vmatpush1.bf16.msra.mxu0 0
      %3396 = vmatprep.subr.bf16.mxu0 0
      %3397 = vmatpush1.bf16.msra.mxu0 0
      %3398 = vmatprep.subr.bf16.mxu0 0
      %3399 = vmatpush1.bf16.msra.mxu0 0
      %3400 = vmatprep.subr.bf16.mxu0 0
      %3401 = vmatpush1.bf16.msra.mxu0 0
      %3402 = vmatprep.subr.bf16.mxu0 0
      %3403 = vmatpush1.bf16.msra.mxu0 0
      %3404 = vmatprep.subr.bf16.mxu0 0
      %3405 = vmatpush1.bf16.msra.mxu0 0
      %3406 = vmatprep.subr.bf16.mxu0 0
      %3407 = vmatpush1.bf16.msra.mxu0 0
      %3408 = vmatprep.subr.bf16.mxu0 0
      %3409 = vmatpush1.bf16.msra.mxu0 0
      %3410 = vmatprep.subr.bf16.mxu0 0
      %3411 = vmatpush1.bf16.msra.mxu0 0
      %3412 = vmatprep.subr.bf16.mxu0 0
      %3413 = vmatpush1.bf16.msra.mxu0 0
      %3414 = vmatprep.subr.bf16.mxu0 0
      %3415 = vmatpush1.bf16.msra.mxu0 0
      %3416 = vmatprep.subr.bf16.mxu0 0
      %3417 = vmatpush1.bf16.msra.mxu0 0
      %3418 = vmatprep.subr.bf16.mxu0 0
      %3419 = vmatpush1.bf16.msra.mxu0 0
      %3420 = vmatprep.subr.bf16.mxu0 0
      %3421 = vmatpush1.bf16.msra.mxu0 0
      %3422 = vmatprep.mubr.bf16.mxu0 0
      %3423 = vmatmul.mubr.bf16.gmra.mrb[0].mxu0 %v1601
      %v3424 = vpop.f32.mrb[0].mxu0
      %v3425 = vadd.f32 0.0, %v3424
      %v3426 = vpop.f32.mrb[0].mxu0
      %v3427 = vpop.f32.mrb[0].mxu0
      %v3428 = vadd.f32 0.0, %v3427
      %v3429 = vpop.f32.mrb[0].mxu0
      %3430 = vmatprep.mubr.bf16.mxu0 0
      %3431 = vmatmul.mubr.bf16.gmra.mrb[0].mxu0 %v1604
      %v3432 = vpop.f32.mrb[0].mxu0
      %v3433 = vadd.f32 0.0, %v3432
      %v3434 = vpop.f32.mrb[0].mxu0
      %v3435 = vpop.f32.mrb[0].mxu0
      %v3436 = vadd.f32 0.0, %v3435
      %v3437 = vpop.f32.mrb[0].mxu0
      %3438 = vmatprep.mubr.bf16.mxu0 0
      %3439 = vmatmul.mubr.bf16.gmra.mrb[0].mxu0 %v1607
      %v3440 = vpop.f32.mrb[0].mxu0
      %v3441 = vadd.f32 0.0, %v3440
      %v3442 = vpop.f32.mrb[0].mxu0
      %v3443 = vpop.f32.mrb[0].mxu0
      %v3444 = vadd.f32 0.0, %v3443
      %v3445 = vpop.f32.mrb[0].mxu0
      %3446 = vmatprep.mubr.bf16.mxu0 0
      %3447 = vmatmul.mubr.bf16.gmra.mrb[0].mxu0 %v1610
      %v3448 = vpop.f32.mrb[0].mxu0
      %v3449 = vadd.f32 0.0, %v3448
      %v3450 = vpop.f32.mrb[0].mxu0
      %v3451 = vpop.f32.mrb[0].mxu0
      %v3452 = vadd.f32 0.0, %v3451
      %v3453 = vpop.f32.mrb[0].mxu0
      %3454 = vmatprep.mubr.bf16.mxu0 0
      %3455 = vmatmul.mubr.bf16.gmra.mrb[0].mxu0 %v1613
      %v3456 = vpop.f32.mrb[0].mxu0
      %v3457 = vadd.f32 0.0, %v3456
      %v3458 = vpop.f32.mrb[0].mxu0
      %v3459 = vpop.f32.mrb[0].mxu0
      %v3460 = vadd.f32 0.0, %v3459
      %v3461 = vpop.f32.mrb[0].mxu0
      %3462 = vmatprep.mubr.bf16.mxu0 0
      %3463 = vmatmul.mubr.bf16.gmra.mrb[0].mxu0 %v1616
      %v3464 = vpop.f32.mrb[0].mxu0
      %v3465 = vadd.f32 0.0, %v3464
      %v3466 = vpop.f32.mrb[0].mxu0
      %v3467 = vpop.f32.mrb[0].mxu0
      %v3468 = vadd.f32 0.0, %v3467
      %v3469 = vpop.f32.mrb[0].mxu0
      %3470 = vmatprep.mubr.bf16.mxu0 0
      %3471 = vmatmul.mubr.bf16.gmra.mrb[0].mxu0 %v1619
      %v3472 = vpop.f32.mrb[0].mxu0
      %v3473 = vadd.f32 0.0, %v3472
      %v3474 = vpop.f32.mrb[0].mxu0
      %v3475 = vpop.f32.mrb[0].mxu0
      %v3476 = vadd.f32 0.0, %v3475
      %v3477 = vpop.f32.mrb[0].mxu0
      %3478 = vmatprep.mubr.bf16.mxu0 0
      %3479 = vmatmul.mubr.bf16.gmra.mrb[0].mxu0 %v1622
      %v3480 = vpop.f32.mrb[0].mxu0
      %v3481 = vadd.f32 0.0, %v3480
      %v3482 = vpop.f32.mrb[0].mxu0
      %v3483 = vpop.f32.mrb[0].mxu0
      %v3484 = vadd.f32 0.0, %v3483
      %v3485 = vpop.f32.mrb[0].mxu0
      %3486 = vmatprep.mubr.bf16.mxu0 0
      %3487 = vmatmul.mubr.bf16.gmra.mrb[0].mxu0 %v1625
      %v3488 = vpop.f32.mrb[0].mxu0
      %v3489 = vadd.f32 0.0, %v3488
      %v3490 = vpop.f32.mrb[0].mxu0
      %v3491 = vpop.f32.mrb[0].mxu0
      %v3492 = vadd.f32 0.0, %v3491
      %v3493 = vpop.f32.mrb[0].mxu0
      %3494 = vmatprep.mubr.bf16.mxu0 0
      %3495 = vmatmul.mubr.bf16.gmra.mrb[0].mxu0 %v1628
      %v3496 = vpop.f32.mrb[0].mxu0
      %v3497 = vadd.f32 0.0, %v3496
      %v3498 = vpop.f32.mrb[0].mxu0
      %v3499 = vpop.f32.mrb[0].mxu0
      %v3500 = vadd.f32 0.0, %v3499
      %v3501 = vpop.f32.mrb[0].mxu0
      %3502 = vmatprep.mubr.bf16.mxu0 0
      %3503 = vmatmul.mubr.bf16.gmra.mrb[0].mxu0 %v1631
      %v3504 = vpop.f32.mrb[0].mxu0
      %v3505 = vadd.f32 0.0, %v3504
      %v3506 = vpop.f32.mrb[0].mxu0
      %v3507 = vpop.f32.mrb[0].mxu0
      %v3508 = vadd.f32 0.0, %v3507
      %v3509 = vpop.f32.mrb[0].mxu0
      %3510 = vmatprep.mubr.bf16.mxu0 0
      %3511 = vmatmul.mubr.bf16.gmra.mrb[0].mxu0 %v1634
      %v3512 = vpop.f32.mrb[0].mxu0
      %v3513 = vadd.f32 0.0, %v3512
      %v3514 = vpop.f32.mrb[0].mxu0
      %v3515 = vpop.f32.mrb[0].mxu0
      %v3516 = vadd.f32 0.0, %v3515
      %v3517 = vpop.f32.mrb[0].mxu0
      %3518 = vmatprep.mubr.bf16.mxu0 0
      %3519 = vmatmul.mubr.bf16.gmra.mrb[0].mxu0 %v1637
      %v3520 = vpop.f32.mrb[0].mxu0
      %v3521 = vadd.f32 0.0, %v3520
      %v3522 = vpop.f32.mrb[0].mxu0
      %v3523 = vpop.f32.mrb[0].mxu0
      %v3524 = vadd.f32 0.0, %v3523
      %v3525 = vpop.f32.mrb[0].mxu0
      %3526 = vmatprep.mubr.bf16.mxu0 0
      %3527 = vmatmul.mubr.bf16.gmra.mrb[0].mxu0 %v1640
      %v3528 = vpop.f32.mrb[0].mxu0
      %v3529 = vadd.f32 0.0, %v3528
      %v3530 = vpop.f32.mrb[0].mxu0
      %v3531 = vpop.f32.mrb[0].mxu0
      %v3532 = vadd.f32 0.0, %v3531
      %v3533 = vpop.f32.mrb[0].mxu0
      %3534 = vmatprep.mubr.bf16.mxu0 0
      %3535 = vmatmul.mubr.bf16.gmra.mrb[0].mxu0 %v2514
      %v3536 = vpop.f32.mrb[0].mxu0
      %v3537 = vadd.f32 0.0, %v3536
      %v3538 = vpop.f32.mrb[0].mxu0
      %v3539 = vpop.f32.mrb[0].mxu0
      %v3540 = vadd.f32 0.0, %v3539
      %v3541 = vpop.f32.mrb[0].mxu0
      %3542 = vmatprep.mubr.bf16.mxu0 0
      %3543 = vmatmul.mubr.bf16.gmra.mrb[0].mxu0 %v3388
      %v3544 = vpop.f32.mrb[0].mxu0
      %v3545 = vadd.f32 0.0, %v3544
      %v3546 = vpop.f32.mrb[0].mxu0
      %v3547 = vpop.f32.mrb[0].mxu0
      %v3548 = vadd.f32 0.0, %v3547
      %v3549 = vpop.f32.mrb[0].mxu0
      %3550 = vdwg.mxu0
      %v3551 = vld [vmem:[#allocation2] sm:$0xff]
      %v3552 = vld [vmem:[#allocation2 + $0x8] sm:$0xff]
      %v3553 = vld [vmem:[#allocation2 + $0x10] sm:$0xff]
      %v3554 = vld [vmem:[#allocation2 + $0x18] sm:$0xff]
      %v3555 = vld [vmem:[#allocation2 + $0x20] sm:$0xff]
      %v3556 = vld [vmem:[#allocation2 + $0x28] sm:$0xff]
      %v3557 = vld [vmem:[#allocation2 + $0x30] sm:$0xff]
      %v3558 = vld [vmem:[#allocation2 + $0x38] sm:$0xff]
      %v3559 = vld [vmem:[#allocation2 + $0x40] sm:$0xff]
      %v3560 = vld [vmem:[#allocation2 + $0x48] sm:$0xff]
      %v3561 = vld [vmem:[#allocation2 + $0x50] sm:$0xff]
      %v3562 = vld [vmem:[#allocation2 + $0x58] sm:$0xff]
      %v3563 = vld [vmem:[#allocation2 + $0x60] sm:$0xff]
      %v3564 = vld [vmem:[#allocation2 + $0x68] sm:$0xff]
      %v3565 = vld [vmem:[#allocation2 + $0x70] sm:$0xff]
      %v3566 = vld [vmem:[#allocation2 + $0x78] sm:$0xff]
      %v3567 = vld [vmem:[#allocation2 + $0x80] sm:$0xff]
      %v3568 = vld [vmem:[#allocation2 + $0x88] sm:$0xff]
      %v3569 = vld [vmem:[#allocation2 + $0x90] sm:$0xff]
      %v3570 = vld [vmem:[#allocation2 + $0x98] sm:$0xff]
      %v3571 = vld [vmem:[#allocation2 + $0xa0] sm:$0xff]
      %v3572 = vld [vmem:[#allocation2 + $0xa8] sm:$0xff]
      %v3573 = vld [vmem:[#allocation2 + $0xb0] sm:$0xff]
      %v3574 = vld [vmem:[#allocation2 + $0xb8] sm:$0xff]
      %v3575 = vld [vmem:[#allocation2 + $0xc0] sm:$0xff]
      %v3576 = vld [vmem:[#allocation2 + $0xc8] sm:$0xff]
      %v3577 = vld [vmem:[#allocation2 + $0xd0] sm:$0xff]
      %v3578 = vld [vmem:[#allocation2 + $0xd8] sm:$0xff]
      %v3579 = vld [vmem:[#allocation2 + $0xe0] sm:$0xff]
      %v3580 = vld [vmem:[#allocation2 + $0xe8] sm:$0xff]
      %v3581 = vld [vmem:[#allocation2 + $0xf0] sm:$0xff]
      %v3582 = vld [vmem:[#allocation2 + $0xf8] sm:$0xff]
      %v3583 = vadd.f32 %v3551, %v3425
      %v3584 = vadd.f32 %v3552, %v3428
      %v3585 = vadd.f32 %v3553, %v3433
      %v3586 = vadd.f32 %v3554, %v3436
      %v3587 = vadd.f32 %v3555, %v3441
      %v3588 = vadd.f32 %v3556, %v3444
      %v3589 = vadd.f32 %v3557, %v3449
      %v3590 = vadd.f32 %v3558, %v3452
      %v3591 = vadd.f32 %v3559, %v3457
      %v3592 = vadd.f32 %v3560, %v3460
      %v3593 = vadd.f32 %v3561, %v3465
      %v3594 = vadd.f32 %v3562, %v3468
      %v3595 = vadd.f32 %v3563, %v3473
      %v3596 = vadd.f32 %v3564, %v3476
      %v3597 = vadd.f32 %v3565, %v3481
      %v3598 = vadd.f32 %v3566, %v3484
      %v3599 = vadd.f32 %v3567, %v3489
      %v3600 = vadd.f32 %v3568, %v3492
      %v3601 = vadd.f32 %v3569, %v3497
      %v3602 = vadd.f32 %v3570, %v3500
      %v3603 = vadd.f32 %v3571, %v3505
      %v3604 = vadd.f32 %v3572, %v3508
      %v3605 = vadd.f32 %v3573, %v3513
      %v3606 = vadd.f32 %v3574, %v3516
      %v3607 = vadd.f32 %v3575, %v3521
      %v3608 = vadd.f32 %v3576, %v3524
      %v3609 = vadd.f32 %v3577, %v3529
      %v3610 = vadd.f32 %v3578, %v3532
      %v3611 = vadd.f32 %v3579, %v3537
      %v3612 = vadd.f32 %v3580, %v3540
      %v3613 = vadd.f32 %v3581, %v3545
      %v3614 = vadd.f32 %v3582, %v3548
      %3615 = vst.msk [vmem:[#allocation2] sm:$0xff] %vm608, %v3583
      %3616 = vst.msk [vmem:[#allocation2 + $0x8] sm:$0xff] %vm608, %v3584
      %3617 = vst.msk [vmem:[#allocation2 + $0x10] sm:$0xff] %vm608, %v3585
      %3618 = vst.msk [vmem:[#allocation2 + $0x18] sm:$0xff] %vm608, %v3586
      %3619 = vst.msk [vmem:[#allocation2 + $0x20] sm:$0xff] %vm608, %v3587
      %3620 = vst.msk [vmem:[#allocation2 + $0x28] sm:$0xff] %vm608, %v3588
      %3621 = vst.msk [vmem:[#allocation2 + $0x30] sm:$0xff] %vm608, %v3589
      %3622 = vst.msk [vmem:[#allocation2 + $0x38] sm:$0xff] %vm608, %v3590
      %3623 = vst.msk [vmem:[#allocation2 + $0x40] sm:$0xff] %vm608, %v3591
      %3624 = vst.msk [vmem:[#allocation2 + $0x48] sm:$0xff] %vm608, %v3592
      %3625 = vst.msk [vmem:[#allocation2 + $0x50] sm:$0xff] %vm608, %v3593
      %3626 = vst.msk [vmem:[#allocation2 + $0x58] sm:$0xff] %vm608, %v3594
      %3627 = vst.msk [vmem:[#allocation2 + $0x60] sm:$0xff] %vm608, %v3595
      %3628 = vst.msk [vmem:[#allocation2 + $0x68] sm:$0xff] %vm608, %v3596
      %3629 = vst.msk [vmem:[#allocation2 + $0x70] sm:$0xff] %vm608, %v3597
      %3630 = vst.msk [vmem:[#allocation2 + $0x78] sm:$0xff] %vm608, %v3598
      %3631 = vst.msk [vmem:[#allocation2 + $0x80] sm:$0xff] %vm608, %v3599
      %3632 = vst.msk [vmem:[#allocation2 + $0x88] sm:$0xff] %vm608, %v3600
      %3633 = vst.msk [vmem:[#allocation2 + $0x90] sm:$0xff] %vm608, %v3601
      %3634 = vst.msk [vmem:[#allocation2 + $0x98] sm:$0xff] %vm608, %v3602
      %3635 = vst.msk [vmem:[#allocation2 + $0xa0] sm:$0xff] %vm608, %v3603
      %3636 = vst.msk [vmem:[#allocation2 + $0xa8] sm:$0xff] %vm608, %v3604
      %3637 = vst.msk [vmem:[#allocation2 + $0xb0] sm:$0xff] %vm608, %v3605
      %3638 = vst.msk [vmem:[#allocation2 + $0xb8] sm:$0xff] %vm608, %v3606
      %3639 = vst.msk [vmem:[#allocation2 + $0xc0] sm:$0xff] %vm608, %v3607
      %3640 = vst.msk [vmem:[#allocation2 + $0xc8] sm:$0xff] %vm608, %v3608
      %3641 = vst.msk [vmem:[#allocation2 + $0xd0] sm:$0xff] %vm608, %v3609
      %3642 = vst.msk [vmem:[#allocation2 + $0xd8] sm:$0xff] %vm608, %v3610
      %3643 = vst.msk [vmem:[#allocation2 + $0xe0] sm:$0xff] %vm608, %v3611
      %3644 = vst.msk [vmem:[#allocation2 + $0xe8] sm:$0xff] %vm608, %v3612
      %3645 = vst.msk [vmem:[#allocation2 + $0xf0] sm:$0xff] %vm608, %v3613
      %3646 = vst.msk [vmem:[#allocation2 + $0xf8] sm:$0xff] %vm608, %v3614
      %v3647 = vld [vmem:[#allocation2] sm:$0xff]
      %v3648 = vld [vmem:[#allocation2 + $0x8] sm:$0xff]
      %v3649 = vld [vmem:[#allocation2 + $0x10] sm:$0xff]
      %v3650 = vld [vmem:[#allocation2 + $0x18] sm:$0xff]
      %v3651 = vld [vmem:[#allocation2 + $0x20] sm:$0xff]
      %v3652 = vld [vmem:[#allocation2 + $0x28] sm:$0xff]
      %v3653 = vld [vmem:[#allocation2 + $0x30] sm:$0xff]
      %v3654 = vld [vmem:[#allocation2 + $0x38] sm:$0xff]
      %v3655 = vld [vmem:[#allocation2 + $0x40] sm:$0xff]
      %v3656 = vld [vmem:[#allocation2 + $0x48] sm:$0xff]
      %v3657 = vld [vmem:[#allocation2 + $0x50] sm:$0xff]
      %v3658 = vld [vmem:[#allocation2 + $0x58] sm:$0xff]
      %v3659 = vld [vmem:[#allocation2 + $0x60] sm:$0xff]
      %v3660 = vld [vmem:[#allocation2 + $0x68] sm:$0xff]
      %v3661 = vld [vmem:[#allocation2 + $0x70] sm:$0xff]
      %v3662 = vld [vmem:[#allocation2 + $0x78] sm:$0xff]
      %v3663 = vld [vmem:[#allocation2 + $0x80] sm:$0xff]
      %v3664 = vld [vmem:[#allocation2 + $0x88] sm:$0xff]
      %v3665 = vld [vmem:[#allocation2 + $0x90] sm:$0xff]
      %v3666 = vld [vmem:[#allocation2 + $0x98] sm:$0xff]
      %v3667 = vld [vmem:[#allocation2 + $0xa0] sm:$0xff]
      %v3668 = vld [vmem:[#allocation2 + $0xa8] sm:$0xff]
      %v3669 = vld [vmem:[#allocation2 + $0xb0] sm:$0xff]
      %v3670 = vld [vmem:[#allocation2 + $0xb8] sm:$0xff]
      %v3671 = vld [vmem:[#allocation2 + $0xc0] sm:$0xff]
      %v3672 = vld [vmem:[#allocation2 + $0xc8] sm:$0xff]
      %v3673 = vld [vmem:[#allocation2 + $0xd0] sm:$0xff]
      %v3674 = vld [vmem:[#allocation2 + $0xd8] sm:$0xff]
      %v3675 = vld [vmem:[#allocation2 + $0xe0] sm:$0xff]
      %v3676 = vld [vmem:[#allocation2 + $0xe8] sm:$0xff]
      %v3677 = vld [vmem:[#allocation2 + $0xf0] sm:$0xff]
      %v3678 = vld [vmem:[#allocation2 + $0xf8] sm:$0xff]
      %v3679 = vld [vmem:[%s2] sm:$0x1]
      %v3681 = vlaneseq
      %v3682 = vshrl.u32 %v3681, 7
      %v3683 = vsub.s32 0, %v3682
      %v3684 = vrot.slane %v3679, %v3683
      %v3686 = vadd.f32 %v3647, %v3684
      %v3687 = vadd.f32 %v3648, %v3684
      %v3688 = vadd.f32 %v3649, %v3684
      %v3689 = vadd.f32 %v3650, %v3684
      %v3690 = vadd.f32 %v3651, %v3684
      %v3691 = vadd.f32 %v3652, %v3684
      %v3692 = vadd.f32 %v3653, %v3684
      %v3693 = vadd.f32 %v3654, %v3684
      %v3694 = vadd.f32 %v3655, %v3684
      %v3695 = vadd.f32 %v3656, %v3684
      %v3696 = vadd.f32 %v3657, %v3684
      %v3697 = vadd.f32 %v3658, %v3684
      %v3698 = vadd.f32 %v3659, %v3684
      %v3699 = vadd.f32 %v3660, %v3684
      %v3700 = vadd.f32 %v3661, %v3684
      %v3701 = vadd.f32 %v3662, %v3684
      %v3702 = vadd.f32 %v3663, %v3684
      %v3703 = vadd.f32 %v3664, %v3684
      %v3704 = vadd.f32 %v3665, %v3684
      %v3705 = vadd.f32 %v3666, %v3684
      %v3706 = vadd.f32 %v3667, %v3684
      %v3707 = vadd.f32 %v3668, %v3684
      %v3708 = vadd.f32 %v3669, %v3684
      %v3709 = vadd.f32 %v3670, %v3684
      %v3710 = vadd.f32 %v3671, %v3684
      %v3711 = vadd.f32 %v3672, %v3684
      %v3712 = vadd.f32 %v3673, %v3684
      %v3713 = vadd.f32 %v3674, %v3684
      %v3714 = vadd.f32 %v3675, %v3684
      %v3715 = vadd.f32 %v3676, %v3684
      %v3716 = vadd.f32 %v3677, %v3684
      %v3717 = vadd.f32 %v3678, %v3684
      %v3718 = vmax.f32 %v3686, 0.0
      %v3719 = vmax.f32 %v3687, 0.0
      %v3720 = vmax.f32 %v3688, 0.0
      %v3721 = vmax.f32 %v3689, 0.0
      %v3722 = vmax.f32 %v3690, 0.0
      %v3723 = vmax.f32 %v3691, 0.0
      %v3724 = vmax.f32 %v3692, 0.0
      %v3725 = vmax.f32 %v3693, 0.0
      %v3726 = vmax.f32 %v3694, 0.0
      %v3727 = vmax.f32 %v3695, 0.0
      %v3728 = vmax.f32 %v3696, 0.0
      %v3729 = vmax.f32 %v3697, 0.0
      %v3730 = vmax.f32 %v3698, 0.0
      %v3731 = vmax.f32 %v3699, 0.0
      %v3732 = vmax.f32 %v3700, 0.0
      %v3733 = vmax.f32 %v3701, 0.0
      %v3734 = vmax.f32 %v3702, 0.0
      %v3735 = vmax.f32 %v3703, 0.0
      %v3736 = vmax.f32 %v3704, 0.0
      %v3737 = vmax.f32 %v3705, 0.0
      %v3738 = vmax.f32 %v3706, 0.0
      %v3739 = vmax.f32 %v3707, 0.0
      %v3740 = vmax.f32 %v3708, 0.0
      %v3741 = vmax.f32 %v3709, 0.0
      %v3742 = vmax.f32 %v3710, 0.0
      %v3743 = vmax.f32 %v3711, 0.0
      %v3744 = vmax.f32 %v3712, 0.0
      %v3745 = vmax.f32 %v3713, 0.0
      %v3746 = vmax.f32 %v3714, 0.0
      %v3747 = vmax.f32 %v3715, 0.0
      %v3748 = vmax.f32 %v3716, 0.0
      %v3749 = vmax.f32 %v3717, 0.0
      %v3750 = vpack.c.bf16 %v3719, %v3718
      %v3751 = vpack.c.bf16 %v3721, %v3720
      %v3752 = vpack.c.bf16 %v3723, %v3722
      %v3753 = vpack.c.bf16 %v3725, %v3724
      %v3754 = vpack.c.bf16 %v3727, %v3726
      %v3755 = vpack.c.bf16 %v3729, %v3728
      %v3756 = vpack.c.bf16 %v3731, %v3730
      %v3757 = vpack.c.bf16 %v3733, %v3732
      %v3758 = vpack.c.bf16 %v3735, %v3734
      %v3759 = vpack.c.bf16 %v3737, %v3736
      %v3760 = vpack.c.bf16 %v3739, %v3738
      %v3761 = vpack.c.bf16 %v3741, %v3740
      %v3762 = vpack.c.bf16 %v3743, %v3742
      %v3763 = vpack.c.bf16 %v3745, %v3744
      %v3764 = vpack.c.bf16 %v3747, %v3746
      %v3765 = vpack.c.bf16 %v3749, %v3748
      %v3766 = vunpack.c.l.bf16 %v3750
      %v3767 = vunpack.c.h.bf16 %v3750
      %v3768 = vunpack.c.l.bf16 %v3751
      %v3769 = vunpack.c.h.bf16 %v3751
      %v3770 = vunpack.c.l.bf16 %v3752
      %v3771 = vunpack.c.h.bf16 %v3752
      %v3772 = vunpack.c.l.bf16 %v3753
      %v3773 = vunpack.c.h.bf16 %v3753
      %v3774 = vunpack.c.l.bf16 %v3754
      %v3775 = vunpack.c.h.bf16 %v3754
      %v3776 = vunpack.c.l.bf16 %v3755
      %v3777 = vunpack.c.h.bf16 %v3755
      %v3778 = vunpack.c.l.bf16 %v3756
      %v3779 = vunpack.c.h.bf16 %v3756
      %v3780 = vunpack.c.l.bf16 %v3757
      %v3781 = vunpack.c.h.bf16 %v3757
      %v3782 = vunpack.c.l.bf16 %v3758
      %v3783 = vunpack.c.h.bf16 %v3758
      %v3784 = vunpack.c.l.bf16 %v3759
      %v3785 = vunpack.c.h.bf16 %v3759
      %v3786 = vunpack.c.l.bf16 %v3760
      %v3787 = vunpack.c.h.bf16 %v3760
      %v3788 = vunpack.c.l.bf16 %v3761
      %v3789 = vunpack.c.h.bf16 %v3761
      %v3790 = vunpack.c.l.bf16 %v3762
      %v3791 = vunpack.c.h.bf16 %v3762
      %v3792 = vunpack.c.l.bf16 %v3763
      %v3793 = vunpack.c.h.bf16 %v3763
      %v3794 = vunpack.c.l.bf16 %v3764
      %v3795 = vunpack.c.h.bf16 %v3764
      %v3796 = vunpack.c.l.bf16 %v3765
      %v3797 = vunpack.c.h.bf16 %v3765
      %3798 = vxpose.xlu0.b32.start [1/16] %v3766, 128
      %3799 = vxpose.xlu0.b32.cont [2/16] %v3767, 128
      %3800 = vxpose.xlu0.b32.cont [3/16] %v3768, 128
      %3801 = vxpose.xlu0.b32.cont [4/16] %v3769, 128
      %3802 = vxpose.xlu0.b32.cont [5/16] %v3770, 128
      %3803 = vxpose.xlu0.b32.cont [6/16] %v3771, 128
      %3804 = vxpose.xlu0.b32.cont [7/16] %v3772, 128
      %3805 = vxpose.xlu0.b32.cont [8/16] %v3773, 128
      %3806 = vxpose.xlu0.b32.cont [9/16] %v3774, 128
      %3807 = vxpose.xlu0.b32.cont [10/16] %v3775, 128
      %3808 = vxpose.xlu0.b32.cont [11/16] %v3776, 128
      %3809 = vxpose.xlu0.b32.cont [12/16] %v3777, 128
      %3810 = vxpose.xlu0.b32.cont [13/16] %v3778, 128
      %3811 = vxpose.xlu0.b32.cont [14/16] %v3779, 128
      %3812 = vxpose.xlu0.b32.cont [15/16] %v3780, 128
      %3813 = vxpose.xlu0.b32.end [16/16] %v3781, 128
      %v3814 = vpop.trf.xlu0
      %v3815 = vpop.trf.xlu0
      %v3816 = vpop.trf.xlu0
      %v3817 = vpop.trf.xlu0
      %v3818 = vpop.trf.xlu0
      %v3819 = vpop.trf.xlu0
      %v3820 = vpop.trf.xlu0
      %v3821 = vpop.trf.xlu0
      %v3822 = vpop.trf.xlu0
      %v3823 = vpop.trf.xlu0
      %v3824 = vpop.trf.xlu0
      %v3825 = vpop.trf.xlu0
      %v3826 = vpop.trf.xlu0
      %v3827 = vpop.trf.xlu0
      %v3828 = vpop.trf.xlu0
      %v3829 = vpop.trf.xlu0
      %3830 = vxpose.xlu0.b32.start [1/16] %v3782, 128
      %3831 = vxpose.xlu0.b32.cont [2/16] %v3783, 128
      %3832 = vxpose.xlu0.b32.cont [3/16] %v3784, 128
      %3833 = vxpose.xlu0.b32.cont [4/16] %v3785, 128
      %3834 = vxpose.xlu0.b32.cont [5/16] %v3786, 128
      %3835 = vxpose.xlu0.b32.cont [6/16] %v3787, 128
      %3836 = vxpose.xlu0.b32.cont [7/16] %v3788, 128
      %3837 = vxpose.xlu0.b32.cont [8/16] %v3789, 128
      %3838 = vxpose.xlu0.b32.cont [9/16] %v3790, 128
      %3839 = vxpose.xlu0.b32.cont [10/16] %v3791, 128
      %3840 = vxpose.xlu0.b32.cont [11/16] %v3792, 128
      %3841 = vxpose.xlu0.b32.cont [12/16] %v3793, 128
      %3842 = vxpose.xlu0.b32.cont [13/16] %v3794, 128
      %3843 = vxpose.xlu0.b32.cont [14/16] %v3795, 128
      %3844 = vxpose.xlu0.b32.cont [15/16] %v3796, 128
      %3845 = vxpose.xlu0.b32.end [16/16] %v3797, 128
      %v3846 = vpop.trf.xlu0
      %v3847 = vpop.trf.xlu0
      %v3848 = vpop.trf.xlu0
      %v3849 = vpop.trf.xlu0
      %v3850 = vpop.trf.xlu0
      %v3851 = vpop.trf.xlu0
      %v3852 = vpop.trf.xlu0
      %v3853 = vpop.trf.xlu0
      %v3854 = vpop.trf.xlu0
      %v3855 = vpop.trf.xlu0
      %v3856 = vpop.trf.xlu0
      %v3857 = vpop.trf.xlu0
      %v3858 = vpop.trf.xlu0
      %v3859 = vpop.trf.xlu0
      %v3860 = vpop.trf.xlu0
      %v3861 = vpop.trf.xlu0
      %v3862 = vld [vmem:[%s3] sm:$0x1]
      %v3863 = vunpack.c.l.bf16 %v3862
      %v3864 = vlaneseq
      %v3865 = vshrl.u32 %v3864, 7
      %v3866 = vsub.s32 0, %v3865
      %v3867 = vrot.slane %v3863, %v3866
      %3869 = vbcast.lane.b32.xlu0 %v3867, 256
      %v3870 = vpop.permute.xlu0 %3869
      %s3872 = sor.u32 256, 8
      %3873 = vbcast.lane.b32.xlu0 %v3867, %s3872
      %v3874 = vpop.permute.xlu0 %3873
      %v3875 = vmul.f32 %v3814, %v3870
      %v3876 = vmul.f32 %v3846, %v3870
      %v3877 = vmul.f32 %v3815, %v3874
      %v3878 = vmul.f32 %v3847, %v3874
      %v3879 = vadd.f32 %v3875, %v3877
      %v3880 = vrot.slane %v3879, 4
      %v3881 = vadd.f32 %v3879, %v3880
      %v3882 = vrot.slane %v3881, 2
      %v3883 = vadd.f32 %v3881, %v3882
      %v3884 = vrot.slane %v3883, 1
      %v3885 = vadd.f32 %v3883, %v3884
      %v3886 = vadd.f32 %v3876, %v3878
      %v3887 = vrot.slane %v3886, 4
      %v3888 = vadd.f32 %v3886, %v3887
      %v3889 = vrot.slane %v3888, 2
      %v3890 = vadd.f32 %v3888, %v3889
      %v3891 = vrot.slane %v3890, 1
      %v3892 = vadd.f32 %v3890, %v3891
      %v3893 = vld [vmem:[#allocation3] sm:$0x1]
      %3895 = vset.pattern.permute.xlu0 0
      %3896 = vperm.xlu0 %3895, %v3893
      %v3897 = vpop.permute.xlu0 %3896
      %v3899 = vlaneseq
      %v3900 = vshrl.u32 %v3899, 7
      %v3901 = vsub.s32 0, %v3900
      %v3902 = vrot.slane %v3897, %v3901
      %v3903 = vadd.f32 %v3885, %v3902
      %v3904 = vadd.f32 %v3892, %v3902
      %v3907 = vcombine.low %v3903, %v3904
      %v3909 = vunpack.c.l.s4 1966171168
      %v3910 = vunpack.c.0.s8 %v3909
      %v3911 = vlaneseq
      %v3912 = vshrl.u32 %v3911, 7
      %v3913 = vsub.s32 %v3910, %v3912
      %v3914 = vrot.slane %v3907, %v3913
      %v3916 = vunpack.c.l.s4 1966171168
      %v3917 = vunpack.c.0.s8 %v3916
      %v3918 = vlaneseq
      %v3919 = vshrl.u32 %v3918, 7
      %v3920 = vsub.s32 %v3917, %v3919
      %v3921 = vrot.slane %v3914, %v3920
      %v3923 = vlaneseq
      %vm3924 = vcmp.ge.s32.totalorder %v3923, 0
      %vm3925 = vcmp.lt.s32.totalorder %v3923, 256
      %vm3926 = vmand %vm3924, %vm3925
      %3927 = vst.msk [vmem:[%s246] sm:$0x3] %vm3926, %v3921
      %p3928 = scmp.lt.s32.totalorder %s22, 1
      %s3929 = scalar_select %p3928, %s22, 1
      %p3930 = scmp.lt.s32.totalorder %s23, 0
      %s3931 = scalar_select %p3930, %s23, 0
      %s3932 = smul.addr %s3931, 2
      %s3933 = smul.addr %s3929, 2
      %s3934 = sadd.s32 %s3932, %s3933
      %s3935 = scalar_lea.vmem %s5, %s3934
      // Predicated region
      $region41: #{aux_module_forward.1} parent=39 // pred_check
        %p3936 = pneg %p160
      $region42: #{aux_module_forward.1} parent=39 // pred_check_branch
        %3938 = sbr.rel (%p3936) target = $region44
      $region43: #{aux_module_forward.1} parent=39 // pred_region
        _
      $region44: #{aux_module_forward.1} parent=39 // pred_fallthru
        _
    $region40: #{aux_module_forward.1} parent=5 // pred_fallthru
      _
    %p3939 = scmp.le.s32.totalorder 2, %s13
    // Predicated region
    $region45: #{aux_module_forward.1} parent=5 // pred_check
      %p3940 = pneg %p3939
    $region46: #{aux_module_forward.1} parent=5 // pred_check_branch
      %3942 = sbr.rel (%p3940) target = $region48
    $region47: #{aux_module_forward.1} parent=5 // pred_region
      %s3943 = ssub.s32 %s13, 2
      // Predicated region
      $region49: #{aux_module_forward.1} parent=47 // pred_check
        %p3944 = pneg %p166
      $region50: #{aux_module_forward.1} parent=47 // pred_check_branch
        %3946 = sbr.rel (%p3944) target = $region52
      $region51: #{aux_module_forward.1} parent=47 // pred_region
        %p3947 = scmp.lt.s32.totalorder %s24, 1
        %s3948 = scalar_select %p3947, %s24, 1
        %p3949 = scmp.lt.s32.totalorder %s25, 0
        %s3950 = scalar_select %p3949, %s25, 0
        %s3951 = smul.addr %s3950, 2
        %s3952 = smul.addr %s3948, 2
        %s3953 = sadd.s32 %s3951, %s3952
        %s3954 = scalar_lea.vmem %s5, %s3953
      $region52: #{aux_module_forward.1} parent=47 // pred_fallthru
        _
    $region48: #{aux_module_forward.1} parent=5 // pred_fallthru
      _
  $region6: #{aux_module_forward.1} parent=0 // loop_footer
    %s17 = sadd.s32 1, %s13
  $region7: #{aux_module_forward.1} parent=0 // loop_footer_branch
    %12 = sbr.rel target = $region3
  $region8: #{aux_module_forward.1} parent=0 // loop_exit
    _

</llo_original>
